<compile_context>
chip_gen: v7x
topology: tpu7x:2x2x1
jax: 0.10.0
libtpu: 0.0.40
codegen_flags: <defaults>
</compile_context>

<pallas_src>
import math
from functools import partial

import jax
import jax.numpy as jnp
from jax.experimental import pallas as pl
from jax.experimental.pallas import tpu as pltpu


# ----------------------------------------------------------------------------
# Static model configuration.  Kernel sizes / strides MUST stay Python ints —
# they parametrize trace-time shapes (this was the previous crash).
# ----------------------------------------------------------------------------
CFG = dict(
    sr=16000,
    conv=[(1, 16, 10, 5), (16, 32, 3, 2)],   # (Cin, Cout, kernel, stride)
    hidden=32,
    heads=4,
    ffn=64,
    layers=2,
    ln_eps=1e-5,
)


# ----------------------------------------------------------------------------
# Pallas kernels
# ----------------------------------------------------------------------------
def _wave_norm_kernel(x_ref, o_ref, *, eps):
    # HF Wav2Vec2FeatureExtractor: (x - mean) / sqrt(var + eps), per utterance.
    x = x_ref[...].astype(jnp.float32)
    mu = jnp.mean(x, axis=-1, keepdims=True)
    var = jnp.mean((x - mu) * (x - mu), axis=-1, keepdims=True)
    o_ref[...] = (x - mu) * jax.lax.rsqrt(var + eps)


def pallas_wave_norm(x, eps=1e-7):
    """x: (B, T) raw audio -> normalized (B, T) f32."""
    return pl.pallas_call(
        partial(_wave_norm_kernel, eps=eps),
        out_shape=jax.ShapeDtypeStruct(x.shape, jnp.float32),
    )(x)


def _linear_kernel(x_ref, w_ref, b_ref, o_ref, *, act):
    # o = act(x @ w + b): MXU matmul + fused VPU/EUP epilogue.
    y = jnp.dot(x_ref[...], w_ref[...], preferred_element_type=jnp.float32)
    y = y + b_ref[...]
    if act == "gelu":
        y = jax.nn.gelu(y, approximate=True)
    o_ref[...] = y.astype(o_ref.dtype)


def pallas_linear(x, w, b, act=None):
    """x: (M, K), w: (K, N), b: (N,) -> (M, N).  Whole arrays in VMEM, no grid."""
    M, K = x.shape
    N = w.shape[1]
    return pl.pallas_call(
        partial(_linear_kernel, act=act),
        out_shape=jax.ShapeDtypeStruct((M, N), jnp.float32),
    )(x, w, b.reshape(1, N))


def _feature_proj_kernel(x_ref, g_ref, b_ref, w_ref, pb_ref, o_ref, *, eps):
    # Fused feature projection: LayerNorm then Linear, one kernel.
    x = x_ref[...].astype(jnp.float32)
    mu = jnp.mean(x, axis=-1, keepdims=True)
    var = jnp.mean((x - mu) * (x - mu), axis=-1, keepdims=True)
    xn = (x - mu) * jax.lax.rsqrt(var + eps) * g_ref[...] + b_ref[...]
    y = jnp.dot(xn, w_ref[...], preferred_element_type=jnp.float32) + pb_ref[...]
    o_ref[...] = y.astype(o_ref.dtype)


def pallas_feature_projection(x, g, b, w, pb, eps):
    """x: (M, C), g/b: (1, C), w: (C, N), pb: (N,) -> (M, N)."""
    M, _ = x.shape
    N = w.shape[1]
    return pl.pallas_call(
        partial(_feature_proj_kernel, eps=eps),
        out_shape=jax.ShapeDtypeStruct((M, N), jnp.float32),
    )(x, g, b, w, pb.reshape(1, N))


def _ln(x, g, b, eps):
    mu = jnp.mean(x, axis=-1, keepdims=True)
    var = jnp.mean((x - mu) * (x - mu), axis=-1, keepdims=True)
    return (x - mu) * jax.lax.rsqrt(var + eps) * g + b


def _encoder_layer_kernel(h_ref, wqkv_ref, bqkv_ref, wo_ref, bo_ref,
                          ln1g_ref, ln1b_ref, w1_ref, b1_ref,
                          w2_ref, b2_ref, ln2g_ref, ln2b_ref,
                          o_ref, *, num_heads, eps, scale):
    """Whole transformer encoder layer for one batch element, fully VMEM-resident."""
    x = h_ref[0].astype(jnp.float32)                       # (S, D)
    D = x.shape[-1]
    hd = D // num_heads

    # Fused QKV projection: one (S, D) @ (D, 3D) matmul instead of three.
    qkv = jnp.dot(x, wqkv_ref[...], preferred_element_type=jnp.float32) + bqkv_ref[...]
    q = qkv[:, 0 * D:1 * D] * scale   # fold scale into q (S*D elems vs S*S scores)
    k = qkv[:, 1 * D:2 * D]
    v = qkv[:, 2 * D:3 * D]

    # Per-head softmax attention with in-kernel (static) head split.
    head_outs = []
    for hh in range(num_heads):
        lo, hi = hh * hd, (hh + 1) * hd
        qh, kh, vh = q[:, lo:hi], k[:, lo:hi], v[:, lo:hi]
        s = jax.lax.dot_general(qh, kh, (((1,), (1,)), ((), ())),
                                preferred_element_type=jnp.float32)   # (S, S)
        s = s - jnp.max(s, axis=-1, keepdims=True)
        p = jnp.exp(s)
        p = p * pl.reciprocal(jnp.sum(p, axis=-1, keepdims=True), approx=True)
        head_outs.append(jnp.dot(p, vh, preferred_element_type=jnp.float32))
    attn = jnp.concatenate(head_outs, axis=-1)             # (S, D)
    attn = jnp.dot(attn, wo_ref[...], preferred_element_type=jnp.float32) + bo_ref[...]

    # Post-LN residual block 1
    h1 = _ln(x + attn, ln1g_ref[...], ln1b_ref[...], eps)

    # Feed-forward (GELU) + post-LN residual block 2
    ff = jnp.dot(h1, w1_ref[...], preferred_element_type=jnp.float32) + b1_ref[...]
    ff = jax.nn.gelu(ff, approximate=True)
    ff = jnp.dot(ff, w2_ref[...], preferred_element_type=jnp.float32) + b2_ref[...]
    o_ref[0] = _ln(h1 + ff, ln2g_ref[...], ln2b_ref[...], eps).astype(o_ref.dtype)


def pallas_encoder_layer(h, lp, num_heads, eps):
    """h: (B, S, D).  One fused pallas_call per layer, grid over batch ("parallel"
    so v7x can shard the two batch elements across its two TensorCores)."""
    B, S, D = h.shape
    F = lp["w1"].shape[1]

    def full(shape):
        return pl.BlockSpec(shape, lambda b: (0, 0))

    return pl.pallas_call(
        partial(_encoder_layer_kernel, num_heads=num_heads, eps=eps,
                scale=1.0 / math.sqrt(D // num_heads)),
        out_shape=jax.ShapeDtypeStruct((B, S, D), jnp.float32),
        grid=(B,),
        in_specs=[
            pl.BlockSpec((1, S, D), lambda b: (b, 0, 0)),
            full((D, 3 * D)), full((1, 3 * D)),
            full((D, D)), full((1, D)),
            full((1, D)), full((1, D)),
            full((D, F)), full((1, F)),
            full((F, D)), full((1, D)),
            full((1, D)), full((1, D)),
        ],
        out_specs=pl.BlockSpec((1, S, D), lambda b: (b, 0, 0)),
        compiler_params=pltpu.CompilerParams(dimension_semantics=("parallel",)),
    )(h, lp["wqkv"], lp["bqkv"], lp["wo"], lp["bo"],
      lp["ln1_g"], lp["ln1_b"], lp["w1"], lp["b1"],
      lp["w2"], lp["b2"], lp["ln2_g"], lp["ln2_b"])


# ----------------------------------------------------------------------------
# Glue: im2col conv (matmul runs in the Pallas linear kernel)
# ----------------------------------------------------------------------------
def conv1d_im2col(x, weight, bias, kernel, stride):
    """x: (B, Cin, T) NCT, weight: (Cout, Cin, K), bias: (Cout,).
    `kernel`/`stride` are STATIC Python ints.  Returns (B, Cout, L) NCT."""
    B, Cin, T = x.shape
    Cout = weight.shape[0]
    L = (T - kernel) // stride + 1
    idx = jnp.arange(L)[:, None] * stride + jnp.arange(kernel)[None, :]   # (L, K)
    patches = x[:, :, idx]                                                # (B, Cin, L, K)
    patches = jnp.transpose(patches, (0, 2, 1, 3)).reshape(B * L, Cin * kernel)
    w2 = weight.reshape(Cout, Cin * kernel).T                             # (Cin*K, Cout)
    pad = (-(Cin * kernel)) % 8
    if pad:  # zero-pad the contraction dim: free on the MXU, cleaner layout
        patches = jnp.pad(patches, ((0, 0), (0, pad)))
        w2 = jnp.pad(w2, ((0, pad), (0, 0)))
    y = pallas_linear(patches, w2, bias, act="gelu")                      # (B*L, Cout)
    return jnp.transpose(y.reshape(B, L, Cout), (0, 2, 1))


# ----------------------------------------------------------------------------
# Parameters (deterministic synthetic init; strides kept OUT of the pytree)
# ----------------------------------------------------------------------------
def init_params(key, cfg):
    def dense(k, fan_in, fan_out):
        w = jax.random.normal(k, (fan_in, fan_out), jnp.float32) / math.sqrt(fan_in)
        return w, jnp.zeros((fan_out,), jnp.float32)

    keys = iter(jax.random.split(key, 64))
    params = {}

    convs = []
    for (cin, cout, kk, _stride) in cfg["conv"]:
        w = jax.random.normal(next(keys), (cout, cin, kk), jnp.float32) / math.sqrt(cin * kk)
        convs.append({"w": w, "b": jnp.zeros((cout,), jnp.float32)})
    params["conv"] = convs

    c_last = cfg["conv"][-1][1]
    params["fp_ln_g"] = jnp.ones((1, c_last), jnp.float32)
    params["fp_ln_b"] = jnp.zeros((1, c_last), jnp.float32)
    params["fp_w"], params["fp_b"] = dense(next(keys), c_last, cfg["hidden"])

    D, F = cfg["hidden"], cfg["ffn"]
    layers = []
    for _ in range(cfg["layers"]):
        lp = {}
        wq, bq = dense(next(keys), D, D)
        wk, bk = dense(next(keys), D, D)
        wv, bv = dense(next(keys), D, D)
        lp["wqkv"] = jnp.concatenate([wq, wk, wv], axis=1)          # (D, 3D) fused
        lp["bqkv"] = jnp.concatenate([bq, bk, bv]).reshape(1, 3 * D)
        lp["wo"], bo = dense(next(keys), D, D)
        lp["bo"] = bo.reshape(1, D)
        lp["ln1_g"] = jnp.ones((1, D), jnp.float32)
        lp["ln1_b"] = jnp.zeros((1, D), jnp.float32)
        lp["w1"], b1 = dense(next(keys), D, F)
        lp["b1"] = b1.reshape(1, F)
        lp["w2"], b2 = dense(next(keys), F, D)
        lp["b2"] = b2.reshape(1, D)
        lp["ln2_g"] = jnp.ones((1, D), jnp.float32)
        lp["ln2_b"] = jnp.zeros((1, D), jnp.float32)
        layers.append(lp)
    params["layers"] = layers
    return params


# ----------------------------------------------------------------------------
# Forward pass (mirrors outputs.hidden_states: embeddings + every layer)
# ----------------------------------------------------------------------------
def ssl_encoder_forward(wave, params, cfg):
    """wave: (B, T) raw audio -> tuple of hidden states, each (B, S, hidden)."""
    # 1) processor: per-utterance zero-mean / unit-variance normalization
    x = pallas_wave_norm(wave.astype(jnp.float32), eps=1e-7)

    # 2) conv feature encoder (NCT, GELU per layer); kernels/strides are static
    h = x[:, None, :]                                       # (B, 1, T)
    for cp, (_cin, _cout, kk, stride) in zip(params["conv"], cfg["conv"]):
        h = conv1d_im2col(h, cp["w"], cp["b"], kk, stride)   # (B, Cout, L)
    feats = jnp.transpose(h, (0, 2, 1))                      # (B, S, Cconv)

    # 3) feature projection: fused LayerNorm + Linear in a single kernel
    B, S, C = feats.shape
    hid = pallas_feature_projection(
        feats.reshape(B * S, C),
        params["fp_ln_g"], params["fp_ln_b"],
        params["fp_w"], params["fp_b"], eps=cfg["ln_eps"],
    ).reshape(B, S, cfg["hidden"])

    # TODO(synk): wav2vec2's grouped-conv positional embedding is omitted
    # (needs the checkpoint-specific architecture).

    # 4) transformer encoder — one fused Pallas kernel per layer
    hidden_states = [hid]
    for lp in params["layers"]:
        hid = pallas_encoder_layer(hid, lp, cfg["heads"], cfg["ln_eps"])
        hidden_states.append(hid)
    return tuple(hidden_states)


# ----------------------------------------------------------------------------
if __name__ == "__main__":
    key = jax.random.PRNGKey(0)
    k_param, k_data = jax.random.split(key)

    params = init_params(k_param, CFG)
    # batch=2 raw waveforms of 400 samples (small, consistent with audio SSL input)
    wave = jax.random.normal(k_data, (2, 400), jnp.float32)

    fwd = jax.jit(lambda w, p: ssl_encoder_forward(w, p, CFG))
    hidden_states = fwd(wave, params)
    hidden_states = jax.block_until_ready(hidden_states)

    # sanity: tuple of (num_layers + 1) states, each (B, S, hidden), all finite
    assert len(hidden_states) == CFG["layers"] + 1
    for hs in hidden_states:
        assert hs.shape == hidden_states[0].shape
        assert bool(jnp.all(jnp.isfinite(hs)))
    print("KERNEL_OK")
</pallas_src>

<mosaic_0001>
module attributes {stable_mosaic.version = 11 : i64} {
  func.func @_wave_norm_kernel(%arg0: memref<2x400xf32, #tpu.memory_space<vmem>>, %arg1: memref<2x400xf32, #tpu.memory_space<vmem>>) attributes {dimension_semantics = [], scalar_prefetch = 0 : i64, scratch_operands = 0 : i64, tpu.core_type = #tpu.core_type<tc>} {
    %c0 = arith.constant 0 : index
    %c0_0 = arith.constant 0 : index
    %0 = vector.load %arg0[%c0, %c0_0] : memref<2x400xf32, #tpu.memory_space<vmem>>, vector<2x400xf32>
    %cst = arith.constant dense<0.000000e+00> : vector<2xf32>
    %1 = vector.multi_reduction <add>, %0, %cst [1] : vector<2x400xf32> to vector<2xf32>
    %2 = vector.shape_cast %1 : vector<2xf32> to vector<2x1xf32>
    %cst_1 = arith.constant 4.000000e+02 : f32
    %3 = vector.broadcast %cst_1 : f32 to vector<2x1xf32>
    %4 = arith.divf %2, %3 : vector<2x1xf32>
    %5 = vector.broadcast %4 : vector<2x1xf32> to vector<2x400xf32>
    %6 = arith.subf %0, %5 : vector<2x400xf32>
    %7 = vector.broadcast %4 : vector<2x1xf32> to vector<2x400xf32>
    %8 = arith.subf %0, %7 : vector<2x400xf32>
    %9 = arith.mulf %6, %8 : vector<2x400xf32>
    %cst_2 = arith.constant dense<0.000000e+00> : vector<2xf32>
    %10 = vector.multi_reduction <add>, %9, %cst_2 [1] : vector<2x400xf32> to vector<2xf32>
    %11 = vector.shape_cast %10 : vector<2xf32> to vector<2x1xf32>
    %cst_3 = arith.constant 4.000000e+02 : f32
    %12 = vector.broadcast %cst_3 : f32 to vector<2x1xf32>
    %13 = arith.divf %11, %12 : vector<2x1xf32>
    %14 = vector.broadcast %4 : vector<2x1xf32> to vector<2x400xf32>
    %15 = arith.subf %0, %14 : vector<2x400xf32>
    %cst_4 = arith.constant 1.000000e-07 : f32
    %16 = vector.broadcast %cst_4 : f32 to vector<2x1xf32>
    %17 = arith.addf %13, %16 : vector<2x1xf32>
    %18 = math.rsqrt %17 : vector<2x1xf32>
    %19 = vector.broadcast %18 : vector<2x1xf32> to vector<2x400xf32>
    %20 = arith.mulf %15, %19 : vector<2x400xf32>
    %c0_5 = arith.constant 0 : index
    %c0_6 = arith.constant 0 : index
    %21 = vector.load %arg1[%c0_5, %c0_6] : memref<2x400xf32, #tpu.memory_space<vmem>>, vector<2x400xf32>
    tpu.vector_store %arg1[%c0_5, %c0_6], %20 {strides = array<i32>} : memref<2x400xf32, #tpu.memory_space<vmem>>, vector<2x400xf32>,
    return
  }
}

module attributes {stable_mosaic.version = 11 : i64} {
  func.func @_linear_kernel(%arg0: memref<158x16xf32, #tpu.memory_space<vmem>>, %arg1: memref<16x16xf32, #tpu.memory_space<vmem>>, %arg2: memref<1x16xf32, #tpu.memory_space<vmem>>, %arg3: memref<158x16xf32, #tpu.memory_space<vmem>>) attributes {dimension_semantics = [], scalar_prefetch = 0 : i64, scratch_operands = 0 : i64, tpu.core_type = #tpu.core_type<tc>} {
    %c0 = arith.constant 0 : index
    %c0_0 = arith.constant 0 : index
    %0 = vector.load %arg0[%c0, %c0_0] : memref<158x16xf32, #tpu.memory_space<vmem>>, vector<158x16xf32>
    %c0_1 = arith.constant 0 : index
    %c0_2 = arith.constant 0 : index
    %1 = vector.load %arg1[%c0_1, %c0_2] : memref<16x16xf32, #tpu.memory_space<vmem>>, vector<16x16xf32>
    %cst = arith.constant dense<0.000000e+00> : vector<158x16xf32>
    %2 = tpu.matmul %0, %1, %cst {dimension_numbers = #tpu.dot_dimension_numbers<[1], [0], [0], [1], [0, 0, 1, 1], [], []>} : vector<158x16xf32>, vector<16x16xf32>, vector<158x16xf32> -> vector<158x16xf32>
    %c0_3 = arith.constant 0 : index
    %c0_4 = arith.constant 0 : index
    %3 = vector.load %arg2[%c0_3, %c0_4] : memref<1x16xf32, #tpu.memory_space<vmem>>, vector<1x16xf32>
    %4 = vector.broadcast %3 : vector<1x16xf32> to vector<158x16xf32>
    %5 = arith.addf %2, %4 : vector<158x16xf32>
    %6 = arith.mulf %5, %5 : vector<158x16xf32>
    %7 = arith.mulf %5, %6 : vector<158x16xf32>
    %cst_5 = arith.constant 4.471500e-02 : f32
    %8 = vector.broadcast %cst_5 : f32 to vector<158x16xf32>
    %9 = arith.mulf %8, %7 : vector<158x16xf32>
    %10 = arith.addf %5, %9 : vector<158x16xf32>
    %cst_6 = arith.constant 0.797884583 : f32
    %11 = vector.broadcast %cst_6 : f32 to vector<158x16xf32>
    %12 = arith.mulf %11, %10 : vector<158x16xf32>
    %13 = math.tanh %12 : vector<158x16xf32>
    %cst_7 = arith.constant 1.000000e+00 : f32
    %14 = vector.broadcast %cst_7 : f32 to vector<158x16xf32>
    %15 = arith.addf %14, %13 : vector<158x16xf32>
    %cst_8 = arith.constant 5.000000e-01 : f32
    %16 = vector.broadcast %cst_8 : f32 to vector<158x16xf32>
    %17 = arith.mulf %16, %15 : vector<158x16xf32>
    %18 = arith.mulf %5, %17 : vector<158x16xf32>
    %c0_9 = arith.constant 0 : index
    %c0_10 = arith.constant 0 : index
    %19 = vector.load %arg3[%c0_9, %c0_10] : memref<158x16xf32, #tpu.memory_space<vmem>>, vector<158x16xf32>
    tpu.vector_store %arg3[%c0_9, %c0_10], %18 {strides = array<i32>} : memref<158x16xf32, #tpu.memory_space<vmem>>, vector<158x16xf32>,
    return
  }
}

module attributes {stable_mosaic.version = 11 : i64} {
  func.func @_feature_proj_kernel(%arg0: memref<78x32xf32, #tpu.memory_space<vmem>>, %arg1: memref<1x32xf32, #tpu.memory_space<vmem>>, %arg2: memref<1x32xf32, #tpu.memory_space<vmem>>, %arg3: memref<32x32xf32, #tpu.memory_space<vmem>>, %arg4: memref<1x32xf32, #tpu.memory_space<vmem>>, %arg5: memref<78x32xf32, #tpu.memory_space<vmem>>) attributes {dimension_semantics = [], scalar_prefetch = 0 : i64, scratch_operands = 0 : i64, tpu.core_type = #tpu.core_type<tc>} {
    %c0 = arith.constant 0 : index
    %c0_0 = arith.constant 0 : index
    %0 = vector.load %arg0[%c0, %c0_0] : memref<78x32xf32, #tpu.memory_space<vmem>>, vector<78x32xf32>
    %cst = arith.constant dense<0.000000e+00> : vector<78xf32>
    %1 = vector.multi_reduction <add>, %0, %cst [1] : vector<78x32xf32> to vector<78xf32>
    %2 = vector.shape_cast %1 : vector<78xf32> to vector<78x1xf32>
    %cst_1 = arith.constant 3.200000e+01 : f32
    %3 = vector.broadcast %cst_1 : f32 to vector<78x1xf32>
    %4 = arith.divf %2, %3 : vector<78x1xf32>
    %5 = vector.broadcast %4 : vector<78x1xf32> to vector<78x32xf32>
    %6 = arith.subf %0, %5 : vector<78x32xf32>
    %7 = vector.broadcast %4 : vector<78x1xf32> to vector<78x32xf32>
    %8 = arith.subf %0, %7 : vector<78x32xf32>
    %9 = arith.mulf %6, %8 : vector<78x32xf32>
    %cst_2 = arith.constant dense<0.000000e+00> : vector<78xf32>
    %10 = vector.multi_reduction <add>, %9, %cst_2 [1] : vector<78x32xf32> to vector<78xf32>
    %11 = vector.shape_cast %10 : vector<78xf32> to vector<78x1xf32>
    %cst_3 = arith.constant 3.200000e+01 : f32
    %12 = vector.broadcast %cst_3 : f32 to vector<78x1xf32>
    %13 = arith.divf %11, %12 : vector<78x1xf32>
    %14 = vector.broadcast %4 : vector<78x1xf32> to vector<78x32xf32>
    %15 = arith.subf %0, %14 : vector<78x32xf32>
    %cst_4 = arith.constant 9.99999974E-6 : f32
    %16 = vector.broadcast %cst_4 : f32 to vector<78x1xf32>
    %17 = arith.addf %13, %16 : vector<78x1xf32>
    %18 = math.rsqrt %17 : vector<78x1xf32>
    %19 = vector.broadcast %18 : vector<78x1xf32> to vector<78x32xf32>
    %20 = arith.mulf %15, %19 : vector<78x32xf32>
    %c0_5 = arith.constant 0 : index
    %c0_6 = arith.constant 0 : index
    %21 = vector.load %arg1[%c0_5, %c0_6] : memref<1x32xf32, #tpu.memory_space<vmem>>, vector<1x32xf32>
    %22 = vector.broadcast %21 : vector<1x32xf32> to vector<78x32xf32>
    %23 = arith.mulf %20, %22 : vector<78x32xf32>
    %c0_7 = arith.constant 0 : index
    %c0_8 = arith.constant 0 : index
    %24 = vector.load %arg2[%c0_7, %c0_8] : memref<1x32xf32, #tpu.memory_space<vmem>>, vector<1x32xf32>
    %25 = vector.broadcast %24 : vector<1x32xf32> to vector<78x32xf32>
    %26 = arith.addf %23, %25 : vector<78x32xf32>
    %c0_9 = arith.constant 0 : index
    %c0_10 = arith.constant 0 : index
    %27 = vector.load %arg3[%c0_9, %c0_10] : memref<32x32xf32, #tpu.memory_space<vmem>>, vector<32x32xf32>
    %cst_11 = arith.constant dense<0.000000e+00> : vector<78x32xf32>
    %28 = tpu.matmul %26, %27, %cst_11 {dimension_numbers = #tpu.dot_dimension_numbers<[1], [0], [0], [1], [0, 0, 1, 1], [], []>} : vector<78x32xf32>, vector<32x32xf32>, vector<78x32xf32> -> vector<78x32xf32>
    %c0_12 = arith.constant 0 : index
    %c0_13 = arith.constant 0 : index
    %29 = vector.load %arg4[%c0_12, %c0_13] : memref<1x32xf32, #tpu.memory_space<vmem>>, vector<1x32xf32>
    %30 = vector.broadcast %29 : vector<1x32xf32> to vector<78x32xf32>
    %31 = arith.addf %28, %30 : vector<78x32xf32>
    %c0_14 = arith.constant 0 : index
    %c0_15 = arith.constant 0 : index
    %32 = vector.load %arg5[%c0_14, %c0_15] : memref<78x32xf32, #tpu.memory_space<vmem>>, vector<78x32xf32>
    tpu.vector_store %arg5[%c0_14, %c0_15], %31 {strides = array<i32>} : memref<78x32xf32, #tpu.memory_space<vmem>>, vector<78x32xf32>,
    return
  }
}

module attributes {stable_mosaic.version = 11 : i64} {
  func.func @_linear_kernel(%arg0: memref<78x48xf32, #tpu.memory_space<vmem>>, %arg1: memref<48x32xf32, #tpu.memory_space<vmem>>, %arg2: memref<1x32xf32, #tpu.memory_space<vmem>>, %arg3: memref<78x32xf32, #tpu.memory_space<vmem>>) attributes {dimension_semantics = [], scalar_prefetch = 0 : i64, scratch_operands = 0 : i64, tpu.core_type = #tpu.core_type<tc>} {
    %c0 = arith.constant 0 : index
    %c0_0 = arith.constant 0 : index
    %0 = vector.load %arg0[%c0, %c0_0] : memref<78x48xf32, #tpu.memory_space<vmem>>, vector<78x48xf32>
    %c0_1 = arith.constant 0 : index
    %c0_2 = arith.constant 0 : index
    %1 = vector.load %arg1[%c0_1, %c0_2] : memref<48x32xf32, #tpu.memory_space<vmem>>, vector<48x32xf32>
    %cst = arith.constant dense<0.000000e+00> : vector<78x32xf32>
    %2 = tpu.matmul %0, %1, %cst {dimension_numbers = #tpu.dot_dimension_numbers<[1], [0], [0], [1], [0, 0, 1, 1], [], []>} : vector<78x48xf32>, vector<48x32xf32>, vector<78x32xf32> -> vector<78x32xf32>
    %c0_3 = arith.constant 0 : index
    %c0_4 = arith.constant 0 : index
    %3 = vector.load %arg2[%c0_3, %c0_4] : memref<1x32xf32, #tpu.memory_space<vmem>>, vector<1x32xf32>
    %4 = vector.broadcast %3 : vector<1x32xf32> to vector<78x32xf32>
    %5 = arith.addf %2, %4 : vector<78x32xf32>
    %6 = arith.mulf %5, %5 : vector<78x32xf32>
    %7 = arith.mulf %5, %6 : vector<78x32xf32>
    %cst_5 = arith.constant 4.471500e-02 : f32
    %8 = vector.broadcast %cst_5 : f32 to vector<78x32xf32>
    %9 = arith.mulf %8, %7 : vector<78x32xf32>
    %10 = arith.addf %5, %9 : vector<78x32xf32>
    %cst_6 = arith.constant 0.797884583 : f32
    %11 = vector.broadcast %cst_6 : f32 to vector<78x32xf32>
    %12 = arith.mulf %11, %10 : vector<78x32xf32>
    %13 = math.tanh %12 : vector<78x32xf32>
    %cst_7 = arith.constant 1.000000e+00 : f32
    %14 = vector.broadcast %cst_7 : f32 to vector<78x32xf32>
    %15 = arith.addf %14, %13 : vector<78x32xf32>
    %cst_8 = arith.constant 5.000000e-01 : f32
    %16 = vector.broadcast %cst_8 : f32 to vector<78x32xf32>
    %17 = arith.mulf %16, %15 : vector<78x32xf32>
    %18 = arith.mulf %5, %17 : vector<78x32xf32>
    %c0_9 = arith.constant 0 : index
    %c0_10 = arith.constant 0 : index
    %19 = vector.load %arg3[%c0_9, %c0_10] : memref<78x32xf32, #tpu.memory_space<vmem>>, vector<78x32xf32>
    tpu.vector_store %arg3[%c0_9, %c0_10], %18 {strides = array<i32>} : memref<78x32xf32, #tpu.memory_space<vmem>>, vector<78x32xf32>,
    return
  }
}

module attributes {stable_mosaic.version = 11 : i64} {
  func.func @_encoder_layer_kernel(%arg0: i32, %arg1: memref<1x39x32xf32, #tpu.memory_space<vmem>>, %arg2: memref<32x96xf32, #tpu.memory_space<vmem>>, %arg3: memref<1x96xf32, #tpu.memory_space<vmem>>, %arg4: memref<32x32xf32, #tpu.memory_space<vmem>>, %arg5: memref<1x32xf32, #tpu.memory_space<vmem>>, %arg6: memref<1x32xf32, #tpu.memory_space<vmem>>, %arg7: memref<1x32xf32, #tpu.memory_space<vmem>>, %arg8: memref<32x64xf32, #tpu.memory_space<vmem>>, %arg9: memref<1x64xf32, #tpu.memory_space<vmem>>, %arg10: memref<64x32xf32, #tpu.memory_space<vmem>>, %arg11: memref<1x32xf32, #tpu.memory_space<vmem>>, %arg12: memref<1x32xf32, #tpu.memory_space<vmem>>, %arg13: memref<1x32xf32, #tpu.memory_space<vmem>>, %arg14: memref<1x39x32xf32, #tpu.memory_space<vmem>>) attributes {dimension_semantics = [#tpu.dimension_semantics<parallel>], iteration_bounds = array<i64: 2>, scalar_prefetch = 0 : i64, scratch_operands = 0 : i64, tpu.core_type = #tpu.core_type<tc>, window_params = [{transform_indices = @transform_0, window_bounds = array<i64: 1, 39, 32>}, {pipeline_mode = #tpu.pipeline_mode<synchronous>, transform_indices = @transform_1, window_bounds = array<i64: 32, 96>}, {pipeline_mode = #tpu.pipeline_mode<synchronous>, transform_indices = @transform_2, window_bounds = array<i64: 1, 96>}, {pipeline_mode = #tpu.pipeline_mode<synchronous>, transform_indices = @transform_3, window_bounds = array<i64: 32, 32>}, {pipeline_mode = #tpu.pipeline_mode<synchronous>, transform_indices = @transform_4, window_bounds = array<i64: 1, 32>}, {pipeline_mode = #tpu.pipeline_mode<synchronous>, transform_indices = @transform_5, window_bounds = array<i64: 1, 32>}, {pipeline_mode = #tpu.pipeline_mode<synchronous>, transform_indices = @transform_6, window_bounds = array<i64: 1, 32>}, {pipeline_mode = #tpu.pipeline_mode<synchronous>, transform_indices = @transform_7, window_bounds = array<i64: 32, 64>}, {pipeline_mode = #tpu.pipeline_mode<synchronous>, transform_indices = @transform_8, window_bounds = array<i64: 1, 64>}, {pipeline_mode = #tpu.pipeline_mode<synchronous>, transform_indices = @transform_9, window_bounds = array<i64: 64, 32>}, {pipeline_mode = #tpu.pipeline_mode<synchronous>, transform_indices = @transform_10, window_bounds = array<i64: 1, 32>}, {pipeline_mode = #tpu.pipeline_mode<synchronous>, transform_indices = @transform_11, window_bounds = array<i64: 1, 32>}, {pipeline_mode = #tpu.pipeline_mode<synchronous>, transform_indices = @transform_12, window_bounds = array<i64: 1, 32>}, {transform_indices = @transform_13, window_bounds = array<i64: 1, 39, 32>}]} {
    %c0 = arith.constant 0 : index
    %c0_0 = arith.constant 0 : index
    %c0_1 = arith.constant 0 : index
    %0 = vector.load %arg1[%c0, %c0_0, %c0_1] : memref<1x39x32xf32, #tpu.memory_space<vmem>>, vector<1x39x32xf32>
    %1 = vector.shape_cast %0 : vector<1x39x32xf32> to vector<39x32xf32>
    %c0_2 = arith.constant 0 : index
    %c0_3 = arith.constant 0 : index
    %2 = vector.load %arg2[%c0_2, %c0_3] : memref<32x96xf32, #tpu.memory_space<vmem>>, vector<32x96xf32>
    %cst = arith.constant dense<0.000000e+00> : vector<39x96xf32>
    %3 = tpu.matmul %1, %2, %cst {dimension_numbers = #tpu.dot_dimension_numbers<[1], [0], [0], [1], [0, 0, 1, 1], [], []>} : vector<39x32xf32>, vector<32x96xf32>, vector<39x96xf32> -> vector<39x96xf32>
    %c0_4 = arith.constant 0 : index
    %c0_5 = arith.constant 0 : index
    %4 = vector.load %arg3[%c0_4, %c0_5] : memref<1x96xf32, #tpu.memory_space<vmem>>, vector<1x96xf32>
    %5 = vector.broadcast %4 : vector<1x96xf32> to vector<39x96xf32>
    %6 = arith.addf %3, %5 : vector<39x96xf32>
    %7 = vector.extract_strided_slice %6 {offsets = [0, 0], sizes = [39, 32], strides = [1, 1]} : vector<39x96xf32> to vector<39x32xf32>
    %cst_6 = arith.constant 0.353553385 : f32
    %8 = vector.broadcast %cst_6 : f32 to vector<39x32xf32>
    %9 = arith.mulf %7, %8 : vector<39x32xf32>
    %10 = vector.extract_strided_slice %6 {offsets = [0, 32], sizes = [39, 32], strides = [1, 1]} : vector<39x96xf32> to vector<39x32xf32>
    %11 = vector.extract_strided_slice %6 {offsets = [0, 64], sizes = [39, 32], strides = [1, 1]} : vector<39x96xf32> to vector<39x32xf32>
    %12 = vector.extract_strided_slice %9 {offsets = [0, 0], sizes = [39, 8], strides = [1, 1]} : vector<39x32xf32> to vector<39x8xf32>
    %13 = vector.extract_strided_slice %10 {offsets = [0, 0], sizes = [39, 8], strides = [1, 1]} : vector<39x32xf32> to vector<39x8xf32>
    %14 = vector.extract_strided_slice %11 {offsets = [0, 0], sizes = [39, 8], strides = [1, 1]} : vector<39x32xf32> to vector<39x8xf32>
    %cst_7 = arith.constant dense<0.000000e+00> : vector<39x39xf32>
    %15 = tpu.matmul %12, %13, %cst_7 {dimension_numbers = #tpu.dot_dimension_numbers<[1], [1], [0], [0], [0, 0, 1, 0], [], []>} : vector<39x8xf32>, vector<39x8xf32>, vector<39x39xf32> -> vector<39x39xf32>
    %cst_8 = arith.constant dense<0xFF800000> : vector<39xf32>
    %16 = vector.multi_reduction <maximumf>, %15, %cst_8 [1] : vector<39x39xf32> to vector<39xf32>
    %17 = vector.shape_cast %16 : vector<39xf32> to vector<39x1xf32>
    %18 = vector.broadcast %17 : vector<39x1xf32> to vector<39x39xf32>
    %19 = arith.subf %15, %18 : vector<39x39xf32>
    %20 = math.exp %19 : vector<39x39xf32>
    %cst_9 = arith.constant dense<0.000000e+00> : vector<39xf32>
    %21 = vector.multi_reduction <add>, %20, %cst_9 [1] : vector<39x39xf32> to vector<39xf32>
    %22 = vector.shape_cast %21 : vector<39xf32> to vector<39x1xf32>
    %23 = tpu.reciprocal %22 {approx = true} : vector<39x1xf32> -> vector<39x1xf32>
    %24 = vector.broadcast %23 : vector<39x1xf32> to vector<39x39xf32>
    %25 = arith.mulf %20, %24 : vector<39x39xf32>
    %cst_10 = arith.constant dense<0.000000e+00> : vector<39x8xf32>
    %26 = tpu.matmul %25, %14, %cst_10 {dimension_numbers = #tpu.dot_dimension_numbers<[1], [0], [0], [1], [0, 0, 1, 1], [], []>} : vector<39x39xf32>, vector<39x8xf32>, vector<39x8xf32> -> vector<39x8xf32>
    %27 = vector.extract_strided_slice %9 {offsets = [0, 8], sizes = [39, 8], strides = [1, 1]} : vector<39x32xf32> to vector<39x8xf32>
    %28 = vector.extract_strided_slice %10 {offsets = [0, 8], sizes = [39, 8], strides = [1, 1]} : vector<39x32xf32> to vector<39x8xf32>
    %29 = vector.extract_strided_slice %11 {offsets = [0, 8], sizes = [39, 8], strides = [1, 1]} : vector<39x32xf32> to vector<39x8xf32>
    %cst_11 = arith.constant dense<0.000000e+00> : vector<39x39xf32>
    %30 = tpu.matmul %27, %28, %cst_11 {dimension_numbers = #tpu.dot_dimension_numbers<[1], [1], [0], [0], [0, 0, 1, 0], [], []>} : vector<39x8xf32>, vector<39x8xf32>, vector<39x39xf32> -> vector<39x39xf32>
    %cst_12 = arith.constant dense<0xFF800000> : vector<39xf32>
    %31 = vector.multi_reduction <maximumf>, %30, %cst_12 [1] : vector<39x39xf32> to vector<39xf32>
    %32 = vector.shape_cast %31 : vector<39xf32> to vector<39x1xf32>
    %33 = vector.broadcast %32 : vector<39x1xf32> to vector<39x39xf32>
    %34 = arith.subf %30, %33 : vector<39x39xf32>
    %35 = math.exp %34 : vector<39x39xf32>
    %cst_13 = arith.constant dense<0.000000e+00> : vector<39xf32>
    %36 = vector.multi_reduction <add>, %35, %cst_13 [1] : vector<39x39xf32> to vector<39xf32>
    %37 = vector.shape_cast %36 : vector<39xf32> to vector<39x1xf32>
    %38 = tpu.reciprocal %37 {approx = true} : vector<39x1xf32> -> vector<39x1xf32>
    %39 = vector.broadcast %38 : vector<39x1xf32> to vector<39x39xf32>
    %40 = arith.mulf %35, %39 : vector<39x39xf32>
    %cst_14 = arith.constant dense<0.000000e+00> : vector<39x8xf32>
    %41 = tpu.matmul %40, %29, %cst_14 {dimension_numbers = #tpu.dot_dimension_numbers<[1], [0], [0], [1], [0, 0, 1, 1], [], []>} : vector<39x39xf32>, vector<39x8xf32>, vector<39x8xf32> -> vector<39x8xf32>
    %42 = vector.extract_strided_slice %9 {offsets = [0, 16], sizes = [39, 8], strides = [1, 1]} : vector<39x32xf32> to vector<39x8xf32>
    %43 = vector.extract_strided_slice %10 {offsets = [0, 16], sizes = [39, 8], strides = [1, 1]} : vector<39x32xf32> to vector<39x8xf32>
    %44 = vector.extract_strided_slice %11 {offsets = [0, 16], sizes = [39, 8], strides = [1, 1]} : vector<39x32xf32> to vector<39x8xf32>
    %cst_15 = arith.constant dense<0.000000e+00> : vector<39x39xf32>
    %45 = tpu.matmul %42, %43, %cst_15 {dimension_numbers = #tpu.dot_dimension_numbers<[1], [1], [0], [0], [0, 0, 1, 0], [], []>} : vector<39x8xf32>, vector<39x8xf32>, vector<39x39xf32> -> vector<39x39xf32>
    %cst_16 = arith.constant dense<0xFF800000> : vector<39xf32>
    %46 = vector.multi_reduction <maximumf>, %45, %cst_16 [1] : vector<39x39xf32> to vector<39xf32>
    %47 = vector.shape_cast %46 : vector<39xf32> to vector<39x1xf32>
    %48 = vector.broadcast %47 : vector<39x1xf32> to vector<39x39xf32>
    %49 = arith.subf %45, %48 : vector<39x39xf32>
    %50 = math.exp %49 : vector<39x39xf32>
    %cst_17 = arith.constant dense<0.000000e+00> : vector<39xf32>
    %51 = vector.multi_reduction <add>, %50, %cst_17 [1] : vector<39x39xf32> to vector<39xf32>
    %52 = vector.shape_cast %51 : vector<39xf32> to vector<39x1xf32>
    %53 = tpu.reciprocal %52 {approx = true} : vector<39x1xf32> -> vector<39x1xf32>
    %54 = vector.broadcast %53 : vector<39x1xf32> to vector<39x39xf32>
    %55 = arith.mulf %50, %54 : vector<39x39xf32>
    %cst_18 = arith.constant dense<0.000000e+00> : vector<39x8xf32>
    %56 = tpu.matmul %55, %44, %cst_18 {dimension_numbers = #tpu.dot_dimension_numbers<[1], [0], [0], [1], [0, 0, 1, 1], [], []>} : vector<39x39xf32>, vector<39x8xf32>, vector<39x8xf32> -> vector<39x8xf32>
    %57 = vector.extract_strided_slice %9 {offsets = [0, 24], sizes = [39, 8], strides = [1, 1]} : vector<39x32xf32> to vector<39x8xf32>
    %58 = vector.extract_strided_slice %10 {offsets = [0, 24], sizes = [39, 8], strides = [1, 1]} : vector<39x32xf32> to vector<39x8xf32>
    %59 = vector.extract_strided_slice %11 {offsets = [0, 24], sizes = [39, 8], strides = [1, 1]} : vector<39x32xf32> to vector<39x8xf32>
    %cst_19 = arith.constant dense<0.000000e+00> : vector<39x39xf32>
    %60 = tpu.matmul %57, %58, %cst_19 {dimension_numbers = #tpu.dot_dimension_numbers<[1], [1], [0], [0], [0, 0, 1, 0], [], []>} : vector<39x8xf32>, vector<39x8xf32>, vector<39x39xf32> -> vector<39x39xf32>
    %cst_20 = arith.constant dense<0xFF800000> : vector<39xf32>
    %61 = vector.multi_reduction <maximumf>, %60, %cst_20 [1] : vector<39x39xf32> to vector<39xf32>
    %62 = vector.shape_cast %61 : vector<39xf32> to vector<39x1xf32>
    %63 = vector.broadcast %62 : vector<39x1xf32> to vector<39x39xf32>
    %64 = arith.subf %60, %63 : vector<39x39xf32>
    %65 = math.exp %64 : vector<39x39xf32>
    %cst_21 = arith.constant dense<0.000000e+00> : vector<39xf32>
    %66 = vector.multi_reduction <add>, %65, %cst_21 [1] : vector<39x39xf32> to vector<39xf32>
    %67 = vector.shape_cast %66 : vector<39xf32> to vector<39x1xf32>
    %68 = tpu.reciprocal %67 {approx = true} : vector<39x1xf32> -> vector<39x1xf32>
    %69 = vector.broadcast %68 : vector<39x1xf32> to vector<39x39xf32>
    %70 = arith.mulf %65, %69 : vector<39x39xf32>
    %cst_22 = arith.constant dense<0.000000e+00> : vector<39x8xf32>
    %71 = tpu.matmul %70, %59, %cst_22 {dimension_numbers = #tpu.dot_dimension_numbers<[1], [0], [0], [1], [0, 0, 1, 1], [], []>} : vector<39x39xf32>, vector<39x8xf32>, vector<39x8xf32> -> vector<39x8xf32>
    %72 = tpu.concatenate %26, %41, %56, %71 in 1 : vector<39x8xf32>, vector<39x8xf32>, vector<39x8xf32>, vector<39x8xf32> -> vector<39x32xf32>
    %c0_23 = arith.constant 0 : index
    %c0_24 = arith.constant 0 : index
    %73 = vector.load %arg4[%c0_23, %c0_24] : memref<32x32xf32, #tpu.memory_space<vmem>>, vector<32x32xf32>
    %cst_25 = arith.constant dense<0.000000e+00> : vector<39x32xf32>
    %74 = tpu.matmul %72, %73, %cst_25 {dimension_numbers = #tpu.dot_dimension_numbers<[1], [0], [0], [1], [0, 0, 1, 1], [], []>} : vector<39x32xf32>, vector<32x32xf32>, vector<39x32xf32> -> vector<39x32xf32>
    %c0_26 = arith.constant 0 : index
    %c0_27 = arith.constant 0 : index
    %75 = vector.load %arg5[%c0_26, %c0_27] : memref<1x32xf32, #tpu.memory_space<vmem>>, vector<1x32xf32>
    %76 = vector.broadcast %75 : vector<1x32xf32> to vector<39x32xf32>
    %77 = arith.addf %74, %76 : vector<39x32xf32>
    %78 = arith.addf %1, %77 : vector<39x32xf32>
    %c0_28 = arith.constant 0 : index
    %c0_29 = arith.constant 0 : index
    %79 = vector.load %arg6[%c0_28, %c0_29] : memref<1x32xf32, #tpu.memory_space<vmem>>, vector<1x32xf32>
    %c0_30 = arith.constant 0 : index
    %c0_31 = arith.constant 0 : index
    %80 = vector.load %arg7[%c0_30, %c0_31] : memref<1x32xf32, #tpu.memory_space<vmem>>, vector<1x32xf32>
    %cst_32 = arith.constant dense<0.000000e+00> : vector<39xf32>
    %81 = vector.multi_reduction <add>, %78, %cst_32 [1] : vector<39x32xf32> to vector<39xf32>
    %82 = vector.shape_cast %81 : vector<39xf32> to vector<39x1xf32>
    %cst_33 = arith.constant 3.200000e+01 : f32
    %83 = vector.broadcast %cst_33 : f32 to vector<39x1xf32>
    %84 = arith.divf %82, %83 : vector<39x1xf32>
    %85 = vector.broadcast %84 : vector<39x1xf32> to vector<39x32xf32>
    %86 = arith.subf %78, %85 : vector<39x32xf32>
    %87 = vector.broadcast %84 : vector<39x1xf32> to vector<39x32xf32>
    %88 = arith.subf %78, %87 : vector<39x32xf32>
    %89 = arith.mulf %86, %88 : vector<39x32xf32>
    %cst_34 = arith.constant dense<0.000000e+00> : vector<39xf32>
    %90 = vector.multi_reduction <add>, %89, %cst_34 [1] : vector<39x32xf32> to vector<39xf32>
    %91 = vector.shape_cast %90 : vector<39xf32> to vector<39x1xf32>
    %cst_35 = arith.constant 3.200000e+01 : f32
    %92 = vector.broadcast %cst_35 : f32 to vector<39x1xf32>
    %93 = arith.divf %91, %92 : vector<39x1xf32>
    %94 = vector.broadcast %84 : vector<39x1xf32> to vector<39x32xf32>
    %95 = arith.subf %78, %94 : vector<39x32xf32>
    %cst_36 = arith.constant 9.99999974E-6 : f32
    %96 = vector.broadcast %cst_36 : f32 to vector<39x1xf32>
    %97 = arith.addf %93, %96 : vector<39x1xf32>
    %98 = math.rsqrt %97 : vector<39x1xf32>
    %99 = vector.broadcast %98 : vector<39x1xf32> to vector<39x32xf32>
    %100 = arith.mulf %95, %99 : vector<39x32xf32>
    %101 = vector.broadcast %79 : vector<1x32xf32> to vector<39x32xf32>
    %102 = arith.mulf %100, %101 : vector<39x32xf32>
    %103 = vector.broadcast %80 : vector<1x32xf32> to vector<39x32xf32>
    %104 = arith.addf %102, %103 : vector<39x32xf32>
    %c0_37 = arith.constant 0 : index
    %c0_38 = arith.constant 0 : index
    %105 = vector.load %arg8[%c0_37, %c0_38] : memref<32x64xf32, #tpu.memory_space<vmem>>, vector<32x64xf32>
    %cst_39 = arith.constant dense<0.000000e+00> : vector<39x64xf32>
    %106 = tpu.matmul %104, %105, %cst_39 {dimension_numbers = #tpu.dot_dimension_numbers<[1], [0], [0], [1], [0, 0, 1, 1], [], []>} : vector<39x32xf32>, vector<32x64xf32>, vector<39x64xf32> -> vector<39x64xf32>
    %c0_40 = arith.constant 0 : index
    %c0_41 = arith.constant 0 : index
    %107 = vector.load %arg9[%c0_40, %c0_41] : memref<1x64xf32, #tpu.memory_space<vmem>>, vector<1x64xf32>
    %108 = vector.broadcast %107 : vector<1x64xf32> to vector<39x64xf32>
    %109 = arith.addf %106, %108 : vector<39x64xf32>
    %110 = arith.mulf %109, %109 : vector<39x64xf32>
    %111 = arith.mulf %109, %110 : vector<39x64xf32>
    %cst_42 = arith.constant 4.471500e-02 : f32
    %112 = vector.broadcast %cst_42 : f32 to vector<39x64xf32>
    %113 = arith.mulf %112, %111 : vector<39x64xf32>
    %114 = arith.addf %109, %113 : vector<39x64xf32>
    %cst_43 = arith.constant 0.797884583 : f32
    %115 = vector.broadcast %cst_43 : f32 to vector<39x64xf32>
    %116 = arith.mulf %115, %114 : vector<39x64xf32>
    %117 = math.tanh %116 : vector<39x64xf32>
    %cst_44 = arith.constant 1.000000e+00 : f32
    %118 = vector.broadcast %cst_44 : f32 to vector<39x64xf32>
    %119 = arith.addf %118, %117 : vector<39x64xf32>
    %cst_45 = arith.constant 5.000000e-01 : f32
    %120 = vector.broadcast %cst_45 : f32 to vector<39x64xf32>
    %121 = arith.mulf %120, %119 : vector<39x64xf32>
    %122 = arith.mulf %109, %121 : vector<39x64xf32>
    %c0_46 = arith.constant 0 : index
    %c0_47 = arith.constant 0 : index
    %123 = vector.load %arg10[%c0_46, %c0_47] : memref<64x32xf32, #tpu.memory_space<vmem>>, vector<64x32xf32>
    %cst_48 = arith.constant dense<0.000000e+00> : vector<39x32xf32>
    %124 = tpu.matmul %122, %123, %cst_48 {dimension_numbers = #tpu.dot_dimension_numbers<[1], [0], [0], [1], [0, 0, 1, 1], [], []>} : vector<39x64xf32>, vector<64x32xf32>, vector<39x32xf32> -> vector<39x32xf32>
    %c0_49 = arith.constant 0 : index
    %c0_50 = arith.constant 0 : index
    %125 = vector.load %arg11[%c0_49, %c0_50] : memref<1x32xf32, #tpu.memory_space<vmem>>, vector<1x32xf32>
    %126 = vector.broadcast %125 : vector<1x32xf32> to vector<39x32xf32>
    %127 = arith.addf %124, %126 : vector<39x32xf32>
    %128 = arith.addf %104, %127 : vector<39x32xf32>
    %c0_51 = arith.constant 0 : index
    %c0_52 = arith.constant 0 : index
    %129 = vector.load %arg12[%c0_51, %c0_52] : memref<1x32xf32, #tpu.memory_space<vmem>>, vector<1x32xf32>
    %c0_53 = arith.constant 0 : index
    %c0_54 = arith.constant 0 : index
    %130 = vector.load %arg13[%c0_53, %c0_54] : memref<1x32xf32, #tpu.memory_space<vmem>>, vector<1x32xf32>
    %cst_55 = arith.constant dense<0.000000e+00> : vector<39xf32>
    %131 = vector.multi_reduction <add>, %128, %cst_55 [1] : vector<39x32xf32> to vector<39xf32>
    %132 = vector.shape_cast %131 : vector<39xf32> to vector<39x1xf32>
    %cst_56 = arith.constant 3.200000e+01 : f32
    %133 = vector.broadcast %cst_56 : f32 to vector<39x1xf32>
    %134 = arith.divf %132, %133 : vector<39x1xf32>
    %135 = vector.broadcast %134 : vector<39x1xf32> to vector<39x32xf32>
    %136 = arith.subf %128, %135 : vector<39x32xf32>
    %137 = vector.broadcast %134 : vector<39x1xf32> to vector<39x32xf32>
    %138 = arith.subf %128, %137 : vector<39x32xf32>
    %139 = arith.mulf %136, %138 : vector<39x32xf32>
    %cst_57 = arith.constant dense<0.000000e+00> : vector<39xf32>
    %140 = vector.multi_reduction <add>, %139, %cst_57 [1] : vector<39x32xf32> to vector<39xf32>
    %141 = vector.shape_cast %140 : vector<39xf32> to vector<39x1xf32>
    %cst_58 = arith.constant 3.200000e+01 : f32
    %142 = vector.broadcast %cst_58 : f32 to vector<39x1xf32>
    %143 = arith.divf %141, %142 : vector<39x1xf32>
    %144 = vector.broadcast %134 : vector<39x1xf32> to vector<39x32xf32>
    %145 = arith.subf %128, %144 : vector<39x32xf32>
    %cst_59 = arith.constant 9.99999974E-6 : f32
    %146 = vector.broadcast %cst_59 : f32 to vector<39x1xf32>
    %147 = arith.addf %143, %146 : vector<39x1xf32>
    %148 = math.rsqrt %147 : vector<39x1xf32>
    %149 = vector.broadcast %148 : vector<39x1xf32> to vector<39x32xf32>
    %150 = arith.mulf %145, %149 : vector<39x32xf32>
    %151 = vector.broadcast %129 : vector<1x32xf32> to vector<39x32xf32>
    %152 = arith.mulf %150, %151 : vector<39x32xf32>
    %153 = vector.broadcast %130 : vector<1x32xf32> to vector<39x32xf32>
    %154 = arith.addf %152, %153 : vector<39x32xf32>
    %c0_60 = arith.constant 0 : index
    %c0_61 = arith.constant 0 : index
    %c0_62 = arith.constant 0 : index
    %155 = vector.load %arg14[%c0_60, %c0_61, %c0_62] : memref<1x39x32xf32, #tpu.memory_space<vmem>>, vector<1x39x32xf32>
    %156 = vector.shape_cast %155 : vector<1x39x32xf32> to vector<39x32xf32>
    %157 = vector.shape_cast %154 : vector<39x32xf32> to vector<1x39x32xf32>
    tpu.vector_store %arg14[%c0_60, %c0_61, %c0_62], %157 {strides = array<i32>} : memref<1x39x32xf32, #tpu.memory_space<vmem>>, vector<1x39x32xf32>,
    return
  }
  func.func @transform_0(%arg0: i32) -> (i32, i32, i32) {
    %c0_i32 = arith.constant 0 : i32
    %c0_i32_0 = arith.constant 0 : i32
    %c0_i32_1 = arith.constant 0 : i32
    return %arg0, %c0_i32, %c0_i32_0 : i32, i32, i32
  }
  func.func @transform_1(%arg0: i32) -> (i32, i32) {
    %c0_i32 = arith.constant 0 : i32
    %c0_i32_0 = arith.constant 0 : i32
    %c0_i32_1 = arith.constant 0 : i32
    return %c0_i32, %c0_i32_0 : i32, i32
  }
  func.func @transform_2(%arg0: i32) -> (i32, i32) {
    %c0_i32 = arith.constant 0 : i32
    %c0_i32_0 = arith.constant 0 : i32
    %c0_i32_1 = arith.constant 0 : i32
    return %c0_i32, %c0_i32_0 : i32, i32
  }
  func.func @transform_3(%arg0: i32) -> (i32, i32) {
    %c0_i32 = arith.constant 0 : i32
    %c0_i32_0 = arith.constant 0 : i32
    %c0_i32_1 = arith.constant 0 : i32
    return %c0_i32, %c0_i32_0 : i32, i32
  }
  func.func @transform_4(%arg0: i32) -> (i32, i32) {
    %c0_i32 = arith.constant 0 : i32
    %c0_i32_0 = arith.constant 0 : i32
    %c0_i32_1 = arith.constant 0 : i32
    return %c0_i32, %c0_i32_0 : i32, i32
  }
  func.func @transform_5(%arg0: i32) -> (i32, i32) {
    %c0_i32 = arith.constant 0 : i32
    %c0_i32_0 = arith.constant 0 : i32
    %c0_i32_1 = arith.constant 0 : i32
    return %c0_i32, %c0_i32_0 : i32, i32
  }
  func.func @transform_6(%arg0: i32) -> (i32, i32) {
    %c0_i32 = arith.constant 0 : i32
    %c0_i32_0 = arith.constant 0 : i32
    %c0_i32_1 = arith.constant 0 : i32
    return %c0_i32, %c0_i32_0 : i32, i32
  }
  func.func @transform_7(%arg0: i32) -> (i32, i32) {
    %c0_i32 = arith.constant 0 : i32
    %c0_i32_0 = arith.constant 0 : i32
    %c0_i32_1 = arith.constant 0 : i32
    return %c0_i32, %c0_i32_0 : i32, i32
  }
  func.func @transform_8(%arg0: i32) -> (i32, i32) {
    %c0_i32 = arith.constant 0 : i32
    %c0_i32_0 = arith.constant 0 : i32
    %c0_i32_1 = arith.constant 0 : i32
    return %c0_i32, %c0_i32_0 : i32, i32
  }
  func.func @transform_9(%arg0: i32) -> (i32, i32) {
    %c0_i32 = arith.constant 0 : i32
    %c0_i32_0 = arith.constant 0 : i32
    %c0_i32_1 = arith.constant 0 : i32
    return %c0_i32, %c0_i32_0 : i32, i32
  }
  func.func @transform_10(%arg0: i32) -> (i32, i32) {
    %c0_i32 = arith.constant 0 : i32
    %c0_i32_0 = arith.constant 0 : i32
    %c0_i32_1 = arith.constant 0 : i32
    return %c0_i32, %c0_i32_0 : i32, i32
  }
  func.func @transform_11(%arg0: i32) -> (i32, i32) {
    %c0_i32 = arith.constant 0 : i32
    %c0_i32_0 = arith.constant 0 : i32
    %c0_i32_1 = arith.constant 0 : i32
    return %c0_i32, %c0_i32_0 : i32, i32
  }
  func.func @transform_12(%arg0: i32) -> (i32, i32) {
    %c0_i32 = arith.constant 0 : i32
    %c0_i32_0 = arith.constant 0 : i32
    %c0_i32_1 = arith.constant 0 : i32
    return %c0_i32, %c0_i32_0 : i32, i32
  }
  func.func @transform_13(%arg0: i32) -> (i32, i32, i32) {
    %c0_i32 = arith.constant 0 : i32
    %c0_i32_0 = arith.constant 0 : i32
    %c0_i32_1 = arith.constant 0 : i32
    return %arg0, %c0_i32, %c0_i32_0 : i32, i32, i32
  }
}

</mosaic_0001>

<llo_original>
// kernel: _lambda_.6
$region0: #{_lambda_.6}
  #allocation0 [shape = 'u32[]', space=smem, size = 0x4, offset = 0x4, fixed_abs, tag = 'smem constant byte address 0x4 - core index']
  #allocation1 [shape = 'u32[144,128]{1,0:T(1,128)}', space=vmem, size = 0x12000, scoped, tag = 'internal scratch']
  %s0 = inlined_call_operand.vmem [shape: f32[2,400], index: 0, kind: input, shape index: {}]
  %s1 = inlined_call_operand.vmem [shape: f32[2,400], index: 1, kind: output, shape index: {}]
  %s2 = sld [smem:[#allocation0]]
  $region14: #{_lambda_.6} parent=0
    _
  %s4 = ssub.s32 1, %s2
  %s5 = scalar_select 0, %s4, %s2
  // Predicated region
  $region2: #{_lambda_.6} parent=0 // pred_check
    _
  $region3: #{_lambda_.6} parent=0 // pred_check_branch
    %7 = sbr.rel (0) target = $region5
  $region4: #{_lambda_.6} parent=0 // pred_region
    _
  $region5: #{_lambda_.6} parent=0 // pred_fallthru
    _
  %v8 = vld [vmem:[%s0] sm:$0xff]
  %v10 = vcombine.high %v8, %v8
  %v12 = vunpack.c.l.s4 1983009808
  %v13 = vunpack.c.0.s8 %v12
  %v14 = vlaneseq
  %v15 = vshrl.u32 %v14, 7
  %v16 = vsub.s32 %v13, %v15
  %v17 = vrot.slane %v8, %v16
  %v19 = vunpack.c.l.s4 1983009808
  %v20 = vunpack.c.0.s8 %v19
  %v21 = vlaneseq
  %v22 = vshrl.u32 %v21, 7
  %v23 = vsub.s32 %v20, %v22
  %v24 = vrot.slane %v10, %v23
  %v25 = vcombine.high %v17, %v17
  %v26 = vcombine.high %v24, %v24
  %vm31 = vcmask 1041408
  %v32 = vsel %vm31, %v17, 0.0
  %v33 = vsel %vm31, %v25, 0.0
  %v34 = vadd.f32 %v32, %v33
  %v35 = vsel %vm31, %v24, 0.0
  %v36 = vadd.f32 %v34, %v35
  %vm37 = vcmask 123904
  %v38 = vsel %vm37, %v26, 0.0
  %v39 = vadd.f32 %v36, %v38
  %40 = vadd.xlane.f32.xlu0 %v39
  %v41 = vpop.xlane.xlu0 %40
  %v42 = vrcp.pop 400.0
  %v43 = vmul.f32 %v41, %v42
  %v46 = vunpack.c.l.s4 269488144
  %v47 = vunpack.c.0.s8 %v46
  %v48 = vlaneseq
  %v49 = vshrl.u32 %v48, 7
  %v50 = vsub.s32 %v47, %v49
  %v51 = vrot.slane %v43, %v50
  %v53 = vsub.f32 %v8, %v51
  %v54 = vmul.f32 %v53, %v53
  %v56 = vcombine.high %v54, %v54
  %v58 = vunpack.c.l.s4 1983009808
  %v59 = vunpack.c.0.s8 %v58
  %v60 = vlaneseq
  %v61 = vshrl.u32 %v60, 7
  %v62 = vsub.s32 %v59, %v61
  %v63 = vrot.slane %v54, %v62
  %v65 = vunpack.c.l.s4 1983009808
  %v66 = vunpack.c.0.s8 %v65
  %v67 = vlaneseq
  %v68 = vshrl.u32 %v67, 7
  %v69 = vsub.s32 %v66, %v68
  %v70 = vrot.slane %v56, %v69
  %v71 = vcombine.high %v63, %v63
  %v72 = vcombine.high %v70, %v70
  %v77 = vsel %vm31, %v63, 0.0
  %v78 = vsel %vm31, %v71, 0.0
  %v79 = vadd.f32 %v77, %v78
  %v80 = vsel %vm31, %v70, 0.0
  %v81 = vadd.f32 %v79, %v80
  %v82 = vsel %vm37, %v72, 0.0
  %v83 = vadd.f32 %v81, %v82
  %84 = vadd.xlane.f32.xlu0 %v83
  %v85 = vpop.xlane.xlu0 %84
  %v86 = vmul.f32 %v85, %v42
  %v87 = vadd.f32 %v86, 1e-07
  %v88 = vrsqrt.pop %v87
  %v91 = vunpack.c.l.s4 269488144
  %v92 = vunpack.c.0.s8 %v91
  %v93 = vlaneseq
  %v94 = vshrl.u32 %v93, 7
  %v95 = vsub.s32 %v92, %v94
  %v96 = vrot.slane %v88, %v95
  %v98 = vmul.f32 %v53, %v96
  %vm99 = vcmask 1043458
  %vm100 = vmor %vm99, %vm31
  %vm101 = vcmask 1045508
  %vm102 = vmor %vm101, %vm100
  %vm103 = vcmask 130054
  %vm104 = vmor %vm103, %vm102
  %105 = vst.msk [vmem:[%s1] sm:$0xff] %vm104, %v98
  // Predicated region
  $region6: #{_lambda_.6} parent=0 // pred_check
    _
  $region7: #{_lambda_.6} parent=0 // pred_check_branch
    %107 = sbr.rel (0) target = $region9
  $region8: #{_lambda_.6} parent=0 // pred_region
    _
  $region9: #{_lambda_.6} parent=0 // pred_fallthru
    _
  // Predicated region
  $region10: #{_lambda_.6} parent=0 // pred_check
    _
  $region11: #{_lambda_.6} parent=0 // pred_check_branch
    %109 = sbr.rel (0) target = $region13
  $region12: #{_lambda_.6} parent=0 // pred_region
    _
  $region13: #{_lambda_.6} parent=0 // pred_fallthru
    _

// kernel: _lambda_.7
$region0: #{_lambda_.7}
  #allocation0 [shape = 'u32[]', space=smem, size = 0x4, offset = 0x4, fixed_abs, tag = 'smem constant byte address 0x4 - core index']
  #allocation1 [shape = 'u32[144,128]{1,0:T(1,128)}', space=vmem, size = 0x12000, scoped, tag = 'internal scratch']
  %s0 = inlined_call_operand.vmem [shape: f32[158,16], index: 0, kind: input, shape index: {}]
  %s1 = inlined_call_operand.vmem [shape: f32[16,16], index: 1, kind: input, shape index: {}]
  %s2 = inlined_call_operand.vmem [shape: f32[1,16], index: 2, kind: input, shape index: {}]
  %s3 = inlined_call_operand.vmem [shape: f32[158,16], index: 3, kind: output, shape index: {}]
  %s4 = sld [smem:[#allocation0]]
  $region22: #{_lambda_.7} parent=0
    _
  %s6 = ssub.s32 1, %s4
  %s7 = scalar_select 0, %s6, %s4
  // Predicated region
  $region2: #{_lambda_.7} parent=0 // pred_check
    _
  $region3: #{_lambda_.7} parent=0 // pred_check_branch
    %9 = sbr.rel (0) target = $region5
  $region4: #{_lambda_.7} parent=0 // pred_region
    _
  $region5: #{_lambda_.7} parent=0 // pred_fallthru
    _
  // Predicated region
  $region6: #{_lambda_.7} parent=0 // pred_check
    _
  $region7: #{_lambda_.7} parent=0 // pred_check_branch
    %11 = sbr.rel (0) target = $region9
  $region8: #{_lambda_.7} parent=0 // pred_region
    _
  $region9: #{_lambda_.7} parent=0 // pred_fallthru
    _
  // Predicated region
  $region10: #{_lambda_.7} parent=0 // pred_check
    _
  $region11: #{_lambda_.7} parent=0 // pred_check_branch
    %13 = sbr.rel (0) target = $region13
  $region12: #{_lambda_.7} parent=0 // pred_region
    _
  $region13: #{_lambda_.7} parent=0 // pred_fallthru
    _
  %v14 = vld [vmem:[%s0] sm:$0xff]
  %v15 = vld [vmem:[%s0 + $0x8] sm:$0xff]
  %v16 = vld [vmem:[%s0 + $0x10] sm:$0xff]
  %v17 = vld [vmem:[%s0 + $0x18] sm:$0xff]
  %v18 = vld [vmem:[%s0 + $0x20] sm:$0xff]
  %v19 = vld [vmem:[%s0 + $0x28] sm:$0xff]
  %v20 = vld [vmem:[%s0 + $0x30] sm:$0xff]
  %v21 = vld [vmem:[%s0 + $0x38] sm:$0xff]
  %v22 = vld [vmem:[%s0 + $0x40] sm:$0xff]
  %v23 = vld [vmem:[%s0 + $0x48] sm:$0xff]
  %v24 = vld [vmem:[%s0 + $0x50] sm:$0xff]
  %v25 = vld [vmem:[%s0 + $0x58] sm:$0xff]
  %v26 = vld [vmem:[%s0 + $0x60] sm:$0xff]
  %v27 = vld [vmem:[%s0 + $0x68] sm:$0xff]
  %v28 = vld [vmem:[%s0 + $0x70] sm:$0xff]
  %v29 = vld [vmem:[%s0 + $0x78] sm:$0xff]
  %v30 = vld [vmem:[%s0 + $0x80] sm:$0xff]
  %v31 = vld [vmem:[%s0 + $0x88] sm:$0xff]
  %v32 = vld [vmem:[%s0 + $0x90] sm:$0xff]
  %v33 = vld [vmem:[%s0 + $0x98] sm:$0x3f]
  %v34 = vld [vmem:[%s1] sm:$0xff]
  %v35 = vld [vmem:[%s1 + $0x8] sm:$0xff]
  %v36 = vld [vmem:[%s2] sm:$0x1]
  %v38 = vlaneseq
  %v39 = vshrl.u32 %v38, 7
  %v40 = vsub.s32 0, %v39
  %v41 = vrot.slane %v36, %v40
  %vm43 = vcmask 130048
  %v45 = vsel %vm43, %v14, 0
  %v48 = vsel %vm43, %v15, 0
  %v51 = vsel %vm43, %v16, 0
  %v54 = vsel %vm43, %v17, 0
  %v57 = vsel %vm43, %v18, 0
  %v60 = vsel %vm43, %v19, 0
  %v63 = vsel %vm43, %v20, 0
  %v66 = vsel %vm43, %v21, 0
  %v69 = vsel %vm43, %v22, 0
  %v72 = vsel %vm43, %v23, 0
  %v75 = vsel %vm43, %v24, 0
  %v78 = vsel %vm43, %v25, 0
  %v81 = vsel %vm43, %v26, 0
  %v84 = vsel %vm43, %v27, 0
  %v87 = vsel %vm43, %v28, 0
  %v90 = vsel %vm43, %v29, 0
  %v93 = vsel %vm43, %v30, 0
  %v96 = vsel %vm43, %v31, 0
  %v99 = vsel %vm43, %v32, 0
  %v102 = vsel %vm43, %v33, 0
  %104 = vmatprep.subr.mxu0 0.0
  %105 = vmatpush1.msra.mxu0 %v34
  %106 = vmatprep.subr.mxu0 0.0
  %107 = vmatpush1.msra.mxu0 %v35
  %108 = vmatprep.subr.mxu0 0.0
  %109 = vmatpush1.msra.mxu0 0.0
  %110 = vmatprep.subr.mxu0 0.0
  %111 = vmatpush1.msra.mxu0 0.0
  %112 = vmatprep.subr.mxu0 0.0
  %113 = vmatpush1.msra.mxu0 0.0
  %114 = vmatprep.subr.mxu0 0.0
  %115 = vmatpush1.msra.mxu0 0.0
  %116 = vmatprep.subr.mxu0 0.0
  %117 = vmatpush1.msra.mxu0 0.0
  %118 = vmatprep.subr.mxu0 0.0
  %119 = vmatpush1.msra.mxu0 0.0
  %120 = vmatprep.subr.mxu0 0.0
  %121 = vmatpush1.msra.mxu0 0.0
  %122 = vmatprep.subr.mxu0 0.0
  %123 = vmatpush1.msra.mxu0 0.0
  %124 = vmatprep.subr.mxu0 0.0
  %125 = vmatpush1.msra.mxu0 0.0
  %126 = vmatprep.subr.mxu0 0.0
  %127 = vmatpush1.msra.mxu0 0.0
  %128 = vmatprep.subr.mxu0 0.0
  %129 = vmatpush1.msra.mxu0 0.0
  %130 = vmatprep.subr.mxu0 0.0
  %131 = vmatpush1.msra.mxu0 0.0
  %132 = vmatprep.subr.mxu0 0.0
  %133 = vmatpush1.msra.mxu0 0.0
  %134 = vmatprep.subr.mxu0 0.0
  %135 = vmatpush1.msra.mxu0 0.0
  %136 = vmatprep.subr.mxu0 0.0
  %137 = vmatpush1.msra.mxu0 0.0
  %138 = vmatprep.subr.mxu0 0.0
  %139 = vmatpush1.msra.mxu0 0.0
  %140 = vmatprep.subr.mxu0 0.0
  %141 = vmatpush1.msra.mxu0 0.0
  %142 = vmatprep.subr.mxu0 0.0
  %143 = vmatpush1.msra.mxu0 0.0
  %144 = vmatprep.subr.mxu0 0.0
  %145 = vmatpush1.msra.mxu0 0.0
  %146 = vmatprep.subr.mxu0 0.0
  %147 = vmatpush1.msra.mxu0 0.0
  %148 = vmatprep.subr.mxu0 0.0
  %149 = vmatpush1.msra.mxu0 0.0
  %150 = vmatprep.subr.mxu0 0.0
  %151 = vmatpush1.msra.mxu0 0.0
  %152 = vmatprep.subr.mxu0 0.0
  %153 = vmatpush1.msra.mxu0 0.0
  %154 = vmatprep.subr.mxu0 0.0
  %155 = vmatpush1.msra.mxu0 0.0
  %156 = vmatprep.subr.mxu0 0.0
  %157 = vmatpush1.msra.mxu0 0.0
  %158 = vmatprep.subr.mxu0 0.0
  %159 = vmatpush1.msra.mxu0 0.0
  %160 = vmatprep.subr.mxu0 0.0
  %161 = vmatpush1.msra.mxu0 0.0
  %162 = vmatprep.subr.mxu0 0.0
  %163 = vmatpush1.msra.mxu0 0.0
  %164 = vmatprep.subr.mxu0 0.0
  %165 = vmatpush1.msra.mxu0 0.0
  %166 = vmatprep.subr.mxu0 0.0
  %167 = vmatpush1.msra.mxu0 0.0
  %168 = vmatprep.mubr.f32.mxu0 0.0
  %169 = vmatmul.mubr.f32.gmra.mrb[0].mxu0 %v45
  %v170 = vpop.f32.mrb[0].mxu0
  %v171 = vadd.f32 %v41, %v170
  %v172 = vpop.f32.mrb[0].mxu0
  %173 = vmatprep.mubr.f32.mxu0 0.0
  %174 = vmatmul.mubr.f32.gmra.mrb[0].mxu0 %v48
  %v175 = vpop.f32.mrb[0].mxu0
  %v176 = vadd.f32 %v41, %v175
  %v177 = vpop.f32.mrb[0].mxu0
  %178 = vmatprep.mubr.f32.mxu0 0.0
  %179 = vmatmul.mubr.f32.gmra.mrb[0].mxu0 %v51
  %v180 = vpop.f32.mrb[0].mxu0
  %v181 = vadd.f32 %v41, %v180
  %v182 = vpop.f32.mrb[0].mxu0
  %183 = vmatprep.mubr.f32.mxu0 0.0
  %184 = vmatmul.mubr.f32.gmra.mrb[0].mxu0 %v54
  %v185 = vpop.f32.mrb[0].mxu0
  %v186 = vadd.f32 %v41, %v185
  %v187 = vpop.f32.mrb[0].mxu0
  %188 = vmatprep.mubr.f32.mxu0 0.0
  %189 = vmatmul.mubr.f32.gmra.mrb[0].mxu0 %v57
  %v190 = vpop.f32.mrb[0].mxu0
  %v191 = vadd.f32 %v41, %v190
  %v192 = vpop.f32.mrb[0].mxu0
  %193 = vmatprep.mubr.f32.mxu0 0.0
  %194 = vmatmul.mubr.f32.gmra.mrb[0].mxu0 %v60
  %v195 = vpop.f32.mrb[0].mxu0
  %v196 = vadd.f32 %v41, %v195
  %v197 = vpop.f32.mrb[0].mxu0
  %198 = vmatprep.mubr.f32.mxu0 0.0
  %199 = vmatmul.mubr.f32.gmra.mrb[0].mxu0 %v63
  %v200 = vpop.f32.mrb[0].mxu0
  %v201 = vadd.f32 %v41, %v200
  %v202 = vpop.f32.mrb[0].mxu0
  %203 = vmatprep.mubr.f32.mxu0 0.0
  %204 = vmatmul.mubr.f32.gmra.mrb[0].mxu0 %v66
  %v205 = vpop.f32.mrb[0].mxu0
  %v206 = vadd.f32 %v41, %v205
  %v207 = vpop.f32.mrb[0].mxu0
  %208 = vmatprep.mubr.f32.mxu0 0.0
  %209 = vmatmul.mubr.f32.gmra.mrb[0].mxu0 %v69
  %v210 = vpop.f32.mrb[0].mxu0
  %v211 = vadd.f32 %v41, %v210
  %v212 = vpop.f32.mrb[0].mxu0
  %213 = vmatprep.mubr.f32.mxu0 0.0
  %214 = vmatmul.mubr.f32.gmra.mrb[0].mxu0 %v72
  %v215 = vpop.f32.mrb[0].mxu0
  %v216 = vadd.f32 %v41, %v215
  %v217 = vpop.f32.mrb[0].mxu0
  %218 = vmatprep.mubr.f32.mxu0 0.0
  %219 = vmatmul.mubr.f32.gmra.mrb[0].mxu0 %v75
  %v220 = vpop.f32.mrb[0].mxu0
  %v221 = vadd.f32 %v41, %v220
  %v222 = vpop.f32.mrb[0].mxu0
  %223 = vmatprep.mubr.f32.mxu0 0.0
  %224 = vmatmul.mubr.f32.gmra.mrb[0].mxu0 %v78
  %v225 = vpop.f32.mrb[0].mxu0
  %v226 = vadd.f32 %v41, %v225
  %v227 = vpop.f32.mrb[0].mxu0
  %228 = vmatprep.mubr.f32.mxu0 0.0
  %229 = vmatmul.mubr.f32.gmra.mrb[0].mxu0 %v81
  %v230 = vpop.f32.mrb[0].mxu0
  %v231 = vadd.f32 %v41, %v230
  %v232 = vpop.f32.mrb[0].mxu0
  %233 = vmatprep.mubr.f32.mxu0 0.0
  %234 = vmatmul.mubr.f32.gmra.mrb[0].mxu0 %v84
  %v235 = vpop.f32.mrb[0].mxu0
  %v236 = vadd.f32 %v41, %v235
  %v237 = vpop.f32.mrb[0].mxu0
  %238 = vmatprep.mubr.f32.mxu0 0.0
  %239 = vmatmul.mubr.f32.gmra.mrb[0].mxu0 %v87
  %v240 = vpop.f32.mrb[0].mxu0
  %v241 = vadd.f32 %v41, %v240
  %v242 = vpop.f32.mrb[0].mxu0
  %243 = vmatprep.mubr.f32.mxu0 0.0
  %244 = vmatmul.mubr.f32.gmra.mrb[0].mxu0 %v90
  %v245 = vpop.f32.mrb[0].mxu0
  %v246 = vadd.f32 %v41, %v245
  %v247 = vpop.f32.mrb[0].mxu0
  %248 = vmatprep.mubr.f32.mxu0 0.0
  %249 = vmatmul.mubr.f32.gmra.mrb[0].mxu0 %v93
  %v250 = vpop.f32.mrb[0].mxu0
  %v251 = vadd.f32 %v41, %v250
  %v252 = vpop.f32.mrb[0].mxu0
  %253 = vmatprep.mubr.f32.mxu0 0.0
  %254 = vmatmul.mubr.f32.gmra.mrb[0].mxu0 %v96
  %v255 = vpop.f32.mrb[0].mxu0
  %v256 = vadd.f32 %v41, %v255
  %v257 = vpop.f32.mrb[0].mxu0
  %258 = vmatprep.mubr.f32.mxu0 0.0
  %259 = vmatmul.mubr.f32.gmra.mrb[0].mxu0 %v99
  %v260 = vpop.f32.mrb[0].mxu0
  %v261 = vadd.f32 %v41, %v260
  %v262 = vpop.f32.mrb[0].mxu0
  %263 = vmatprep.mubr.f32.mxu0 0.0
  %264 = vmatmul.mubr.f32.gmra.mrb[0].mxu0 %v102
  %v265 = vpop.f32.mrb[0].mxu0
  %v266 = vadd.f32 %v41, %v265
  %v267 = vpop.f32.mrb[0].mxu0
  %268 = vdwg.mxu0
  %v269 = vmul.f32 %v171, %v171
  %v270 = vmul.f32 %v176, %v176
  %v271 = vmul.f32 %v181, %v181
  %v272 = vmul.f32 %v186, %v186
  %v273 = vmul.f32 %v191, %v191
  %v274 = vmul.f32 %v196, %v196
  %v275 = vmul.f32 %v201, %v201
  %v276 = vmul.f32 %v206, %v206
  %v277 = vmul.f32 %v211, %v211
  %v278 = vmul.f32 %v216, %v216
  %v279 = vmul.f32 %v221, %v221
  %v280 = vmul.f32 %v226, %v226
  %v281 = vmul.f32 %v231, %v231
  %v282 = vmul.f32 %v236, %v236
  %v283 = vmul.f32 %v241, %v241
  %v284 = vmul.f32 %v246, %v246
  %v285 = vmul.f32 %v251, %v251
  %v286 = vmul.f32 %v256, %v256
  %v287 = vmul.f32 %v261, %v261
  %v288 = vmul.f32 %v266, %v266
  %v289 = vmul.f32 %v171, %v269
  %v290 = vmul.f32 %v176, %v270
  %v291 = vmul.f32 %v181, %v271
  %v292 = vmul.f32 %v186, %v272
  %v293 = vmul.f32 %v191, %v273
  %v294 = vmul.f32 %v196, %v274
  %v295 = vmul.f32 %v201, %v275
  %v296 = vmul.f32 %v206, %v276
  %v297 = vmul.f32 %v211, %v277
  %v298 = vmul.f32 %v216, %v278
  %v299 = vmul.f32 %v221, %v279
  %v300 = vmul.f32 %v226, %v280
  %v301 = vmul.f32 %v231, %v281
  %v302 = vmul.f32 %v236, %v282
  %v303 = vmul.f32 %v241, %v283
  %v304 = vmul.f32 %v246, %v284
  %v305 = vmul.f32 %v251, %v285
  %v306 = vmul.f32 %v256, %v286
  %v307 = vmul.f32 %v261, %v287
  %v308 = vmul.f32 %v266, %v288
  %v309 = vmul.f32 %v289, 0.044715
  %v310 = vmul.f32 %v290, 0.044715
  %v311 = vmul.f32 %v291, 0.044715
  %v312 = vmul.f32 %v292, 0.044715
  %v313 = vmul.f32 %v293, 0.044715
  %v314 = vmul.f32 %v294, 0.044715
  %v315 = vmul.f32 %v295, 0.044715
  %v316 = vmul.f32 %v296, 0.044715
  %v317 = vmul.f32 %v297, 0.044715
  %v318 = vmul.f32 %v298, 0.044715
  %v319 = vmul.f32 %v299, 0.044715
  %v320 = vmul.f32 %v300, 0.044715
  %v321 = vmul.f32 %v301, 0.044715
  %v322 = vmul.f32 %v302, 0.044715
  %v323 = vmul.f32 %v303, 0.044715
  %v324 = vmul.f32 %v304, 0.044715
  %v325 = vmul.f32 %v305, 0.044715
  %v326 = vmul.f32 %v306, 0.044715
  %v327 = vmul.f32 %v307, 0.044715
  %v328 = vmul.f32 %v308, 0.044715
  %v329 = vadd.f32 %v171, %v309
  %v330 = vadd.f32 %v176, %v310
  %v331 = vadd.f32 %v181, %v311
  %v332 = vadd.f32 %v186, %v312
  %v333 = vadd.f32 %v191, %v313
  %v334 = vadd.f32 %v196, %v314
  %v335 = vadd.f32 %v201, %v315
  %v336 = vadd.f32 %v206, %v316
  %v337 = vadd.f32 %v211, %v317
  %v338 = vadd.f32 %v216, %v318
  %v339 = vadd.f32 %v221, %v319
  %v340 = vadd.f32 %v226, %v320
  %v341 = vadd.f32 %v231, %v321
  %v342 = vadd.f32 %v236, %v322
  %v343 = vadd.f32 %v241, %v323
  %v344 = vadd.f32 %v246, %v324
  %v345 = vadd.f32 %v251, %v325
  %v346 = vadd.f32 %v256, %v326
  %v347 = vadd.f32 %v261, %v327
  %v348 = vadd.f32 %v266, %v328
  %v349 = vmul.f32 %v329, 0.7978846
  %v350 = vmul.f32 %v330, 0.7978846
  %v351 = vmul.f32 %v331, 0.7978846
  %v352 = vmul.f32 %v332, 0.7978846
  %v353 = vmul.f32 %v333, 0.7978846
  %v354 = vmul.f32 %v334, 0.7978846
  %v355 = vmul.f32 %v335, 0.7978846
  %v356 = vmul.f32 %v336, 0.7978846
  %v357 = vmul.f32 %v337, 0.7978846
  %v358 = vmul.f32 %v338, 0.7978846
  %v359 = vmul.f32 %v339, 0.7978846
  %v360 = vmul.f32 %v340, 0.7978846
  %v361 = vmul.f32 %v341, 0.7978846
  %v362 = vmul.f32 %v342, 0.7978846
  %v363 = vmul.f32 %v343, 0.7978846
  %v364 = vmul.f32 %v344, 0.7978846
  %v365 = vmul.f32 %v345, 0.7978846
  %v366 = vmul.f32 %v346, 0.7978846
  %v367 = vmul.f32 %v347, 0.7978846
  %v368 = vmul.f32 %v348, 0.7978846
  %v369 = vtanh.pop %v349
  %v370 = vtanh.pop %v350
  %v371 = vtanh.pop %v351
  %v372 = vtanh.pop %v352
  %v373 = vtanh.pop %v353
  %v374 = vtanh.pop %v354
  %v375 = vtanh.pop %v355
  %v376 = vtanh.pop %v356
  %v377 = vtanh.pop %v357
  %v378 = vtanh.pop %v358
  %v379 = vtanh.pop %v359
  %v380 = vtanh.pop %v360
  %v381 = vtanh.pop %v361
  %v382 = vtanh.pop %v362
  %v383 = vtanh.pop %v363
  %v384 = vtanh.pop %v364
  %v385 = vtanh.pop %v365
  %v386 = vtanh.pop %v366
  %v387 = vtanh.pop %v367
  %v388 = vtanh.pop %v368
  %v389 = vadd.f32 %v369, 1.0
  %v390 = vadd.f32 %v370, 1.0
  %v391 = vadd.f32 %v371, 1.0
  %v392 = vadd.f32 %v372, 1.0
  %v393 = vadd.f32 %v373, 1.0
  %v394 = vadd.f32 %v374, 1.0
  %v395 = vadd.f32 %v375, 1.0
  %v396 = vadd.f32 %v376, 1.0
  %v397 = vadd.f32 %v377, 1.0
  %v398 = vadd.f32 %v378, 1.0
  %v399 = vadd.f32 %v379, 1.0
  %v400 = vadd.f32 %v380, 1.0
  %v401 = vadd.f32 %v381, 1.0
  %v402 = vadd.f32 %v382, 1.0
  %v403 = vadd.f32 %v383, 1.0
  %v404 = vadd.f32 %v384, 1.0
  %v405 = vadd.f32 %v385, 1.0
  %v406 = vadd.f32 %v386, 1.0
  %v407 = vadd.f32 %v387, 1.0
  %v408 = vadd.f32 %v388, 1.0
  %v409 = vmul.f32 %v389, 0.5
  %v410 = vmul.f32 %v390, 0.5
  %v411 = vmul.f32 %v391, 0.5
  %v412 = vmul.f32 %v392, 0.5
  %v413 = vmul.f32 %v393, 0.5
  %v414 = vmul.f32 %v394, 0.5
  %v415 = vmul.f32 %v395, 0.5
  %v416 = vmul.f32 %v396, 0.5
  %v417 = vmul.f32 %v397, 0.5
  %v418 = vmul.f32 %v398, 0.5
  %v419 = vmul.f32 %v399, 0.5
  %v420 = vmul.f32 %v400, 0.5
  %v421 = vmul.f32 %v401, 0.5
  %v422 = vmul.f32 %v402, 0.5
  %v423 = vmul.f32 %v403, 0.5
  %v424 = vmul.f32 %v404, 0.5
  %v425 = vmul.f32 %v405, 0.5
  %v426 = vmul.f32 %v406, 0.5
  %v427 = vmul.f32 %v407, 0.5
  %v428 = vmul.f32 %v408, 0.5
  %v429 = vmul.f32 %v171, %v409
  %v430 = vmul.f32 %v176, %v410
  %v431 = vmul.f32 %v181, %v411
  %v432 = vmul.f32 %v186, %v412
  %v433 = vmul.f32 %v191, %v413
  %v434 = vmul.f32 %v196, %v414
  %v435 = vmul.f32 %v201, %v415
  %v436 = vmul.f32 %v206, %v416
  %v437 = vmul.f32 %v211, %v417
  %v438 = vmul.f32 %v216, %v418
  %v439 = vmul.f32 %v221, %v419
  %v440 = vmul.f32 %v226, %v420
  %v441 = vmul.f32 %v231, %v421
  %v442 = vmul.f32 %v236, %v422
  %v443 = vmul.f32 %v241, %v423
  %v444 = vmul.f32 %v246, %v424
  %v445 = vmul.f32 %v251, %v425
  %v446 = vmul.f32 %v256, %v426
  %v447 = vmul.f32 %v261, %v427
  %v448 = vmul.f32 %v266, %v428
  %449 = vst.msk [vmem:[%s3] sm:$0xff] %vm43, %v429
  %450 = vst.msk [vmem:[%s3 + $0x8] sm:$0xff] %vm43, %v430
  %451 = vst.msk [vmem:[%s3 + $0x10] sm:$0xff] %vm43, %v431
  %452 = vst.msk [vmem:[%s3 + $0x18] sm:$0xff] %vm43, %v432
  %453 = vst.msk [vmem:[%s3 + $0x20] sm:$0xff] %vm43, %v433
  %454 = vst.msk [vmem:[%s3 + $0x28] sm:$0xff] %vm43, %v434
  %455 = vst.msk [vmem:[%s3 + $0x30] sm:$0xff] %vm43, %v435
  %456 = vst.msk [vmem:[%s3 + $0x38] sm:$0xff] %vm43, %v436
  %457 = vst.msk [vmem:[%s3 + $0x40] sm:$0xff] %vm43, %v437
  %458 = vst.msk [vmem:[%s3 + $0x48] sm:$0xff] %vm43, %v438
  %459 = vst.msk [vmem:[%s3 + $0x50] sm:$0xff] %vm43, %v439
  %460 = vst.msk [vmem:[%s3 + $0x58] sm:$0xff] %vm43, %v440
  %461 = vst.msk [vmem:[%s3 + $0x60] sm:$0xff] %vm43, %v441
  %462 = vst.msk [vmem:[%s3 + $0x68] sm:$0xff] %vm43, %v442
  %463 = vst.msk [vmem:[%s3 + $0x70] sm:$0xff] %vm43, %v443
  %464 = vst.msk [vmem:[%s3 + $0x78] sm:$0xff] %vm43, %v444
  %465 = vst.msk [vmem:[%s3 + $0x80] sm:$0xff] %vm43, %v445
  %466 = vst.msk [vmem:[%s3 + $0x88] sm:$0xff] %vm43, %v446
  %467 = vst.msk [vmem:[%s3 + $0x90] sm:$0xff] %vm43, %v447
  %vm468 = vcmask 128000
  %469 = vst.msk [vmem:[%s3 + $0x98] sm:$0x3f] %vm468, %v448
  // Predicated region
  $region14: #{_lambda_.7} parent=0 // pred_check
    _
  $region15: #{_lambda_.7} parent=0 // pred_check_branch
    %471 = sbr.rel (0) target = $region17
  $region16: #{_lambda_.7} parent=0 // pred_region
    _
  $region17: #{_lambda_.7} parent=0 // pred_fallthru
    _
  // Predicated region
  $region18: #{_lambda_.7} parent=0 // pred_check
    _
  $region19: #{_lambda_.7} parent=0 // pred_check_branch
    %473 = sbr.rel (0) target = $region21
  $region20: #{_lambda_.7} parent=0 // pred_region
    _
  $region21: #{_lambda_.7} parent=0 // pred_fallthru
    _

// kernel: _lambda_.8
$region0: #{_lambda_.8}
  #allocation0 [shape = 'u32[]', space=smem, size = 0x4, offset = 0x4, fixed_abs, tag = 'smem constant byte address 0x4 - core index']
  #allocation1 [shape = 'u32[144,128]{1,0:T(1,128)}', space=vmem, size = 0x12000, scoped, tag = 'internal scratch']
  %s0 = inlined_call_operand.vmem [shape: f32[78,48], index: 0, kind: input, shape index: {}]
  %s1 = inlined_call_operand.vmem [shape: f32[48,32], index: 1, kind: input, shape index: {}]
  %s2 = inlined_call_operand.vmem [shape: f32[1,32], index: 2, kind: input, shape index: {}]
  %s3 = inlined_call_operand.vmem [shape: f32[78,32], index: 3, kind: output, shape index: {}]
  %s4 = sld [smem:[#allocation0]]
  $region22: #{_lambda_.8} parent=0
    _
  %s6 = ssub.s32 1, %s4
  %s7 = scalar_select 0, %s6, %s4
  // Predicated region
  $region2: #{_lambda_.8} parent=0 // pred_check
    _
  $region3: #{_lambda_.8} parent=0 // pred_check_branch
    %9 = sbr.rel (0) target = $region5
  $region4: #{_lambda_.8} parent=0 // pred_region
    _
  $region5: #{_lambda_.8} parent=0 // pred_fallthru
    _
  // Predicated region
  $region6: #{_lambda_.8} parent=0 // pred_check
    _
  $region7: #{_lambda_.8} parent=0 // pred_check_branch
    %11 = sbr.rel (0) target = $region9
  $region8: #{_lambda_.8} parent=0 // pred_region
    _
  $region9: #{_lambda_.8} parent=0 // pred_fallthru
    _
  // Predicated region
  $region10: #{_lambda_.8} parent=0 // pred_check
    _
  $region11: #{_lambda_.8} parent=0 // pred_check_branch
    %13 = sbr.rel (0) target = $region13
  $region12: #{_lambda_.8} parent=0 // pred_region
    _
  $region13: #{_lambda_.8} parent=0 // pred_fallthru
    _
  %v14 = vld [vmem:[%s0] sm:$0xff]
  %v15 = vld [vmem:[%s0 + $0x8] sm:$0xff]
  %v16 = vld [vmem:[%s0 + $0x10] sm:$0xff]
  %v17 = vld [vmem:[%s0 + $0x18] sm:$0xff]
  %v18 = vld [vmem:[%s0 + $0x20] sm:$0xff]
  %v19 = vld [vmem:[%s0 + $0x28] sm:$0xff]
  %v20 = vld [vmem:[%s0 + $0x30] sm:$0xff]
  %v21 = vld [vmem:[%s0 + $0x38] sm:$0xff]
  %v22 = vld [vmem:[%s0 + $0x40] sm:$0xff]
  %v23 = vld [vmem:[%s0 + $0x48] sm:$0x3f]
  %v24 = vld [vmem:[%s1] sm:$0xff]
  %v25 = vld [vmem:[%s1 + $0x8] sm:$0xff]
  %v26 = vld [vmem:[%s1 + $0x10] sm:$0xff]
  %v27 = vld [vmem:[%s1 + $0x18] sm:$0xff]
  %v28 = vld [vmem:[%s1 + $0x20] sm:$0xff]
  %v29 = vld [vmem:[%s1 + $0x28] sm:$0xff]
  %v30 = vld [vmem:[%s2] sm:$0x1]
  %v32 = vlaneseq
  %v33 = vshrl.u32 %v32, 7
  %v34 = vsub.s32 0, %v33
  %v35 = vrot.slane %v30, %v34
  %vm37 = vcmask 392192
  %v39 = vsel %vm37, %v14, 0
  %v42 = vsel %vm37, %v15, 0
  %v45 = vsel %vm37, %v16, 0
  %v48 = vsel %vm37, %v17, 0
  %v51 = vsel %vm37, %v18, 0
  %v54 = vsel %vm37, %v19, 0
  %v57 = vsel %vm37, %v20, 0
  %v60 = vsel %vm37, %v21, 0
  %v63 = vsel %vm37, %v22, 0
  %v66 = vsel %vm37, %v23, 0
  %68 = vmatprep.subr.mxu0 0.0
  %69 = vmatpush1.msra.mxu0 %v24
  %70 = vmatprep.subr.mxu0 0.0
  %71 = vmatpush1.msra.mxu0 %v25
  %72 = vmatprep.subr.mxu0 0.0
  %73 = vmatpush1.msra.mxu0 %v26
  %74 = vmatprep.subr.mxu0 0.0
  %75 = vmatpush1.msra.mxu0 %v27
  %76 = vmatprep.subr.mxu0 0.0
  %77 = vmatpush1.msra.mxu0 %v28
  %78 = vmatprep.subr.mxu0 0.0
  %79 = vmatpush1.msra.mxu0 %v29
  %80 = vmatprep.subr.mxu0 0.0
  %81 = vmatpush1.msra.mxu0 0.0
  %82 = vmatprep.subr.mxu0 0.0
  %83 = vmatpush1.msra.mxu0 0.0
  %84 = vmatprep.subr.mxu0 0.0
  %85 = vmatpush1.msra.mxu0 0.0
  %86 = vmatprep.subr.mxu0 0.0
  %87 = vmatpush1.msra.mxu0 0.0
  %88 = vmatprep.subr.mxu0 0.0
  %89 = vmatpush1.msra.mxu0 0.0
  %90 = vmatprep.subr.mxu0 0.0
  %91 = vmatpush1.msra.mxu0 0.0
  %92 = vmatprep.subr.mxu0 0.0
  %93 = vmatpush1.msra.mxu0 0.0
  %94 = vmatprep.subr.mxu0 0.0
  %95 = vmatpush1.msra.mxu0 0.0
  %96 = vmatprep.subr.mxu0 0.0
  %97 = vmatpush1.msra.mxu0 0.0
  %98 = vmatprep.subr.mxu0 0.0
  %99 = vmatpush1.msra.mxu0 0.0
  %100 = vmatprep.subr.mxu0 0.0
  %101 = vmatpush1.msra.mxu0 0.0
  %102 = vmatprep.subr.mxu0 0.0
  %103 = vmatpush1.msra.mxu0 0.0
  %104 = vmatprep.subr.mxu0 0.0
  %105 = vmatpush1.msra.mxu0 0.0
  %106 = vmatprep.subr.mxu0 0.0
  %107 = vmatpush1.msra.mxu0 0.0
  %108 = vmatprep.subr.mxu0 0.0
  %109 = vmatpush1.msra.mxu0 0.0
  %110 = vmatprep.subr.mxu0 0.0
  %111 = vmatpush1.msra.mxu0 0.0
  %112 = vmatprep.subr.mxu0 0.0
  %113 = vmatpush1.msra.mxu0 0.0
  %114 = vmatprep.subr.mxu0 0.0
  %115 = vmatpush1.msra.mxu0 0.0
  %116 = vmatprep.subr.mxu0 0.0
  %117 = vmatpush1.msra.mxu0 0.0
  %118 = vmatprep.subr.mxu0 0.0
  %119 = vmatpush1.msra.mxu0 0.0
  %120 = vmatprep.subr.mxu0 0.0
  %121 = vmatpush1.msra.mxu0 0.0
  %122 = vmatprep.subr.mxu0 0.0
  %123 = vmatpush1.msra.mxu0 0.0
  %124 = vmatprep.subr.mxu0 0.0
  %125 = vmatpush1.msra.mxu0 0.0
  %126 = vmatprep.subr.mxu0 0.0
  %127 = vmatpush1.msra.mxu0 0.0
  %128 = vmatprep.subr.mxu0 0.0
  %129 = vmatpush1.msra.mxu0 0.0
  %130 = vmatprep.subr.mxu0 0.0
  %131 = vmatpush1.msra.mxu0 0.0
  %132 = vmatprep.mubr.f32.mxu0 0.0
  %133 = vmatmul.mubr.f32.gmra.mrb[0].mxu0 %v39
  %v134 = vpop.f32.mrb[0].mxu0
  %v135 = vadd.f32 %v35, %v134
  %v136 = vpop.f32.mrb[0].mxu0
  %137 = vmatprep.mubr.f32.mxu0 0.0
  %138 = vmatmul.mubr.f32.gmra.mrb[0].mxu0 %v42
  %v139 = vpop.f32.mrb[0].mxu0
  %v140 = vadd.f32 %v35, %v139
  %v141 = vpop.f32.mrb[0].mxu0
  %142 = vmatprep.mubr.f32.mxu0 0.0
  %143 = vmatmul.mubr.f32.gmra.mrb[0].mxu0 %v45
  %v144 = vpop.f32.mrb[0].mxu0
  %v145 = vadd.f32 %v35, %v144
  %v146 = vpop.f32.mrb[0].mxu0
  %147 = vmatprep.mubr.f32.mxu0 0.0
  %148 = vmatmul.mubr.f32.gmra.mrb[0].mxu0 %v48
  %v149 = vpop.f32.mrb[0].mxu0
  %v150 = vadd.f32 %v35, %v149
  %v151 = vpop.f32.mrb[0].mxu0
  %152 = vmatprep.mubr.f32.mxu0 0.0
  %153 = vmatmul.mubr.f32.gmra.mrb[0].mxu0 %v51
  %v154 = vpop.f32.mrb[0].mxu0
  %v155 = vadd.f32 %v35, %v154
  %v156 = vpop.f32.mrb[0].mxu0
  %157 = vmatprep.mubr.f32.mxu0 0.0
  %158 = vmatmul.mubr.f32.gmra.mrb[0].mxu0 %v54
  %v159 = vpop.f32.mrb[0].mxu0
  %v160 = vadd.f32 %v35, %v159
  %v161 = vpop.f32.mrb[0].mxu0
  %162 = vmatprep.mubr.f32.mxu0 0.0
  %163 = vmatmul.mubr.f32.gmra.mrb[0].mxu0 %v57
  %v164 = vpop.f32.mrb[0].mxu0
  %v165 = vadd.f32 %v35, %v164
  %v166 = vpop.f32.mrb[0].mxu0
  %167 = vmatprep.mubr.f32.mxu0 0.0
  %168 = vmatmul.mubr.f32.gmra.mrb[0].mxu0 %v60
  %v169 = vpop.f32.mrb[0].mxu0
  %v170 = vadd.f32 %v35, %v169
  %v171 = vpop.f32.mrb[0].mxu0
  %172 = vmatprep.mubr.f32.mxu0 0.0
  %173 = vmatmul.mubr.f32.gmra.mrb[0].mxu0 %v63
  %v174 = vpop.f32.mrb[0].mxu0
  %v175 = vadd.f32 %v35, %v174
  %v176 = vpop.f32.mrb[0].mxu0
  %177 = vmatprep.mubr.f32.mxu0 0.0
  %178 = vmatmul.mubr.f32.gmra.mrb[0].mxu0 %v66
  %v179 = vpop.f32.mrb[0].mxu0
  %v180 = vadd.f32 %v35, %v179
  %v181 = vpop.f32.mrb[0].mxu0
  %182 = vdwg.mxu0
  %v183 = vmul.f32 %v135, %v135
  %v184 = vmul.f32 %v140, %v140
  %v185 = vmul.f32 %v145, %v145
  %v186 = vmul.f32 %v150, %v150
  %v187 = vmul.f32 %v155, %v155
  %v188 = vmul.f32 %v160, %v160
  %v189 = vmul.f32 %v165, %v165
  %v190 = vmul.f32 %v170, %v170
  %v191 = vmul.f32 %v175, %v175
  %v192 = vmul.f32 %v180, %v180
  %v193 = vmul.f32 %v135, %v183
  %v194 = vmul.f32 %v140, %v184
  %v195 = vmul.f32 %v145, %v185
  %v196 = vmul.f32 %v150, %v186
  %v197 = vmul.f32 %v155, %v187
  %v198 = vmul.f32 %v160, %v188
  %v199 = vmul.f32 %v165, %v189
  %v200 = vmul.f32 %v170, %v190
  %v201 = vmul.f32 %v175, %v191
  %v202 = vmul.f32 %v180, %v192
  %v203 = vmul.f32 %v193, 0.044715
  %v204 = vmul.f32 %v194, 0.044715
  %v205 = vmul.f32 %v195, 0.044715
  %v206 = vmul.f32 %v196, 0.044715
  %v207 = vmul.f32 %v197, 0.044715
  %v208 = vmul.f32 %v198, 0.044715
  %v209 = vmul.f32 %v199, 0.044715
  %v210 = vmul.f32 %v200, 0.044715
  %v211 = vmul.f32 %v201, 0.044715
  %v212 = vmul.f32 %v202, 0.044715
  %v213 = vadd.f32 %v135, %v203
  %v214 = vadd.f32 %v140, %v204
  %v215 = vadd.f32 %v145, %v205
  %v216 = vadd.f32 %v150, %v206
  %v217 = vadd.f32 %v155, %v207
  %v218 = vadd.f32 %v160, %v208
  %v219 = vadd.f32 %v165, %v209
  %v220 = vadd.f32 %v170, %v210
  %v221 = vadd.f32 %v175, %v211
  %v222 = vadd.f32 %v180, %v212
  %v223 = vmul.f32 %v213, 0.7978846
  %v224 = vmul.f32 %v214, 0.7978846
  %v225 = vmul.f32 %v215, 0.7978846
  %v226 = vmul.f32 %v216, 0.7978846
  %v227 = vmul.f32 %v217, 0.7978846
  %v228 = vmul.f32 %v218, 0.7978846
  %v229 = vmul.f32 %v219, 0.7978846
  %v230 = vmul.f32 %v220, 0.7978846
  %v231 = vmul.f32 %v221, 0.7978846
  %v232 = vmul.f32 %v222, 0.7978846
  %v233 = vtanh.pop %v223
  %v234 = vtanh.pop %v224
  %v235 = vtanh.pop %v225
  %v236 = vtanh.pop %v226
  %v237 = vtanh.pop %v227
  %v238 = vtanh.pop %v228
  %v239 = vtanh.pop %v229
  %v240 = vtanh.pop %v230
  %v241 = vtanh.pop %v231
  %v242 = vtanh.pop %v232
  %v243 = vadd.f32 %v233, 1.0
  %v244 = vadd.f32 %v234, 1.0
  %v245 = vadd.f32 %v235, 1.0
  %v246 = vadd.f32 %v236, 1.0
  %v247 = vadd.f32 %v237, 1.0
  %v248 = vadd.f32 %v238, 1.0
  %v249 = vadd.f32 %v239, 1.0
  %v250 = vadd.f32 %v240, 1.0
  %v251 = vadd.f32 %v241, 1.0
  %v252 = vadd.f32 %v242, 1.0
  %v253 = vmul.f32 %v243, 0.5
  %v254 = vmul.f32 %v244, 0.5
  %v255 = vmul.f32 %v245, 0.5
  %v256 = vmul.f32 %v246, 0.5
  %v257 = vmul.f32 %v247, 0.5
  %v258 = vmul.f32 %v248, 0.5
  %v259 = vmul.f32 %v249, 0.5
  %v260 = vmul.f32 %v250, 0.5
  %v261 = vmul.f32 %v251, 0.5
  %v262 = vmul.f32 %v252, 0.5
  %v263 = vmul.f32 %v135, %v253
  %v264 = vmul.f32 %v140, %v254
  %v265 = vmul.f32 %v145, %v255
  %v266 = vmul.f32 %v150, %v256
  %v267 = vmul.f32 %v155, %v257
  %v268 = vmul.f32 %v160, %v258
  %v269 = vmul.f32 %v165, %v259
  %v270 = vmul.f32 %v170, %v260
  %v271 = vmul.f32 %v175, %v261
  %v272 = vmul.f32 %v180, %v262
  %vm273 = vcmask 261120
  %274 = vst.msk [vmem:[%s3] sm:$0xff] %vm273, %v263
  %275 = vst.msk [vmem:[%s3 + $0x8] sm:$0xff] %vm273, %v264
  %276 = vst.msk [vmem:[%s3 + $0x10] sm:$0xff] %vm273, %v265
  %277 = vst.msk [vmem:[%s3 + $0x18] sm:$0xff] %vm273, %v266
  %278 = vst.msk [vmem:[%s3 + $0x20] sm:$0xff] %vm273, %v267
  %279 = vst.msk [vmem:[%s3 + $0x28] sm:$0xff] %vm273, %v268
  %280 = vst.msk [vmem:[%s3 + $0x30] sm:$0xff] %vm273, %v269
  %281 = vst.msk [vmem:[%s3 + $0x38] sm:$0xff] %vm273, %v270
  %282 = vst.msk [vmem:[%s3 + $0x40] sm:$0xff] %vm273, %v271
  %vm283 = vcmask 259072
  %284 = vst.msk [vmem:[%s3 + $0x48] sm:$0x3f] %vm283, %v272
  // Predicated region
  $region14: #{_lambda_.8} parent=0 // pred_check
    _
  $region15: #{_lambda_.8} parent=0 // pred_check_branch
    %286 = sbr.rel (0) target = $region17
  $region16: #{_lambda_.8} parent=0 // pred_region
    _
  $region17: #{_lambda_.8} parent=0 // pred_fallthru
    _
  // Predicated region
  $region18: #{_lambda_.8} parent=0 // pred_check
    _
  $region19: #{_lambda_.8} parent=0 // pred_check_branch
    %288 = sbr.rel (0) target = $region21
  $region20: #{_lambda_.8} parent=0 // pred_region
    _
  $region21: #{_lambda_.8} parent=0 // pred_fallthru
    _

// kernel: _lambda_.9
$region0: #{_lambda_.9}
  #allocation0 [shape = 'u32[]', space=smem, size = 0x4, offset = 0x4, fixed_abs, tag = 'smem constant byte address 0x4 - core index']
  #allocation1 [shape = 'u32[144,128]{1,0:T(1,128)}', space=vmem, size = 0x12000, scoped, tag = 'internal scratch']
  %s0 = inlined_call_operand.vmem [shape: f32[78,32], index: 0, kind: input, shape index: {}]
  %s1 = inlined_call_operand.vmem [shape: f32[1,32], index: 1, kind: input, shape index: {}]
  %s2 = inlined_call_operand.vmem [shape: f32[1,32], index: 2, kind: input, shape index: {}]
  %s3 = inlined_call_operand.vmem [shape: f32[32,32], index: 3, kind: input, shape index: {}]
  %s4 = inlined_call_operand.vmem [shape: f32[1,32], index: 4, kind: input, shape index: {}]
  %s5 = inlined_call_operand.vmem [shape: f32[78,32], index: 5, kind: output, shape index: {}]
  %s6 = sld [smem:[#allocation0]]
  $region30: #{_lambda_.9} parent=0
    _
  %s8 = ssub.s32 1, %s6
  %s9 = scalar_select 0, %s8, %s6
  // Predicated region
  $region2: #{_lambda_.9} parent=0 // pred_check
    _
  $region3: #{_lambda_.9} parent=0 // pred_check_branch
    %11 = sbr.rel (0) target = $region5
  $region4: #{_lambda_.9} parent=0 // pred_region
    _
  $region5: #{_lambda_.9} parent=0 // pred_fallthru
    _
  // Predicated region
  $region6: #{_lambda_.9} parent=0 // pred_check
    _
  $region7: #{_lambda_.9} parent=0 // pred_check_branch
    %13 = sbr.rel (0) target = $region9
  $region8: #{_lambda_.9} parent=0 // pred_region
    _
  $region9: #{_lambda_.9} parent=0 // pred_fallthru
    _
  // Predicated region
  $region10: #{_lambda_.9} parent=0 // pred_check
    _
  $region11: #{_lambda_.9} parent=0 // pred_check_branch
    %15 = sbr.rel (0) target = $region13
  $region12: #{_lambda_.9} parent=0 // pred_region
    _
  $region13: #{_lambda_.9} parent=0 // pred_fallthru
    _
  // Predicated region
  $region14: #{_lambda_.9} parent=0 // pred_check
    _
  $region15: #{_lambda_.9} parent=0 // pred_check_branch
    %17 = sbr.rel (0) target = $region17
  $region16: #{_lambda_.9} parent=0 // pred_region
    _
  $region17: #{_lambda_.9} parent=0 // pred_fallthru
    _
  // Predicated region
  $region18: #{_lambda_.9} parent=0 // pred_check
    _
  $region19: #{_lambda_.9} parent=0 // pred_check_branch
    %19 = sbr.rel (0) target = $region21
  $region20: #{_lambda_.9} parent=0 // pred_region
    _
  $region21: #{_lambda_.9} parent=0 // pred_fallthru
    _
  %v20 = vld [vmem:[%s0] sm:$0xff]
  %v21 = vld [vmem:[%s0 + $0x8] sm:$0xff]
  %v22 = vld [vmem:[%s0 + $0x10] sm:$0xff]
  %v23 = vld [vmem:[%s0 + $0x18] sm:$0xff]
  %v24 = vld [vmem:[%s0 + $0x20] sm:$0xff]
  %v25 = vld [vmem:[%s0 + $0x28] sm:$0xff]
  %v26 = vld [vmem:[%s0 + $0x30] sm:$0xff]
  %v27 = vld [vmem:[%s0 + $0x38] sm:$0xff]
  %v28 = vld [vmem:[%s0 + $0x40] sm:$0xff]
  %v29 = vld [vmem:[%s0 + $0x48] sm:$0x3f]
  %vm30 = vcmask 261120
  %v31 = vsel %vm30, %v20, 0.0
  %32 = vadd.xlane.f32.xlu0 %v31
  %v33 = vpop.xlane.xlu0 %32
  %v34 = vsel %vm30, %v21, 0.0
  %35 = vadd.xlane.f32.xlu0 %v34
  %v36 = vpop.xlane.xlu0 %35
  %v37 = vsel %vm30, %v22, 0.0
  %38 = vadd.xlane.f32.xlu0 %v37
  %v39 = vpop.xlane.xlu0 %38
  %v40 = vsel %vm30, %v23, 0.0
  %41 = vadd.xlane.f32.xlu0 %v40
  %v42 = vpop.xlane.xlu0 %41
  %v43 = vsel %vm30, %v24, 0.0
  %44 = vadd.xlane.f32.xlu0 %v43
  %v45 = vpop.xlane.xlu0 %44
  %v46 = vsel %vm30, %v25, 0.0
  %47 = vadd.xlane.f32.xlu0 %v46
  %v48 = vpop.xlane.xlu0 %47
  %v49 = vsel %vm30, %v26, 0.0
  %50 = vadd.xlane.f32.xlu0 %v49
  %v51 = vpop.xlane.xlu0 %50
  %v52 = vsel %vm30, %v27, 0.0
  %53 = vadd.xlane.f32.xlu0 %v52
  %v54 = vpop.xlane.xlu0 %53
  %v55 = vsel %vm30, %v28, 0.0
  %56 = vadd.xlane.f32.xlu0 %v55
  %v57 = vpop.xlane.xlu0 %56
  %vm58 = vcmask 259072
  %v59 = vsel %vm58, %v29, 0.0
  %60 = vadd.xlane.f32.xlu0 %v59
  %v61 = vpop.xlane.xlu0 %60
  %v62 = vrcp.pop 32.0
  %v63 = vmul.f32 %v33, %v62
  %v64 = vmul.f32 %v36, %v62
  %v65 = vmul.f32 %v39, %v62
  %v66 = vmul.f32 %v42, %v62
  %v67 = vmul.f32 %v45, %v62
  %v68 = vmul.f32 %v48, %v62
  %v69 = vmul.f32 %v51, %v62
  %v70 = vmul.f32 %v54, %v62
  %v71 = vmul.f32 %v57, %v62
  %v72 = vmul.f32 %v61, %v62
  %v73 = vsub.f32 %v20, %v63
  %v74 = vsub.f32 %v21, %v64
  %v75 = vsub.f32 %v22, %v65
  %v76 = vsub.f32 %v23, %v66
  %v77 = vsub.f32 %v24, %v67
  %v78 = vsub.f32 %v25, %v68
  %v79 = vsub.f32 %v26, %v69
  %v80 = vsub.f32 %v27, %v70
  %v81 = vsub.f32 %v28, %v71
  %v82 = vsub.f32 %v29, %v72
  %v83 = vmul.f32 %v73, %v73
  %v84 = vmul.f32 %v74, %v74
  %v85 = vmul.f32 %v75, %v75
  %v86 = vmul.f32 %v76, %v76
  %v87 = vmul.f32 %v77, %v77
  %v88 = vmul.f32 %v78, %v78
  %v89 = vmul.f32 %v79, %v79
  %v90 = vmul.f32 %v80, %v80
  %v91 = vmul.f32 %v81, %v81
  %v92 = vmul.f32 %v82, %v82
  %v93 = vsel %vm30, %v83, 0.0
  %94 = vadd.xlane.f32.xlu0 %v93
  %v95 = vpop.xlane.xlu0 %94
  %v96 = vsel %vm30, %v84, 0.0
  %97 = vadd.xlane.f32.xlu0 %v96
  %v98 = vpop.xlane.xlu0 %97
  %v99 = vsel %vm30, %v85, 0.0
  %100 = vadd.xlane.f32.xlu0 %v99
  %v101 = vpop.xlane.xlu0 %100
  %v102 = vsel %vm30, %v86, 0.0
  %103 = vadd.xlane.f32.xlu0 %v102
  %v104 = vpop.xlane.xlu0 %103
  %v105 = vsel %vm30, %v87, 0.0
  %106 = vadd.xlane.f32.xlu0 %v105
  %v107 = vpop.xlane.xlu0 %106
  %v108 = vsel %vm30, %v88, 0.0
  %109 = vadd.xlane.f32.xlu0 %v108
  %v110 = vpop.xlane.xlu0 %109
  %v111 = vsel %vm30, %v89, 0.0
  %112 = vadd.xlane.f32.xlu0 %v111
  %v113 = vpop.xlane.xlu0 %112
  %v114 = vsel %vm30, %v90, 0.0
  %115 = vadd.xlane.f32.xlu0 %v114
  %v116 = vpop.xlane.xlu0 %115
  %v117 = vsel %vm30, %v91, 0.0
  %118 = vadd.xlane.f32.xlu0 %v117
  %v119 = vpop.xlane.xlu0 %118
  %v120 = vsel %vm58, %v92, 0.0
  %121 = vadd.xlane.f32.xlu0 %v120
  %v122 = vpop.xlane.xlu0 %121
  %v123 = vmul.f32 %v95, %v62
  %v124 = vmul.f32 %v98, %v62
  %v125 = vmul.f32 %v101, %v62
  %v126 = vmul.f32 %v104, %v62
  %v127 = vmul.f32 %v107, %v62
  %v128 = vmul.f32 %v110, %v62
  %v129 = vmul.f32 %v113, %v62
  %v130 = vmul.f32 %v116, %v62
  %v131 = vmul.f32 %v119, %v62
  %v132 = vmul.f32 %v122, %v62
  %v133 = vadd.f32 %v123, 1e-05
  %v134 = vadd.f32 %v124, 1e-05
  %v135 = vadd.f32 %v125, 1e-05
  %v136 = vadd.f32 %v126, 1e-05
  %v137 = vadd.f32 %v127, 1e-05
  %v138 = vadd.f32 %v128, 1e-05
  %v139 = vadd.f32 %v129, 1e-05
  %v140 = vadd.f32 %v130, 1e-05
  %v141 = vadd.f32 %v131, 1e-05
  %v142 = vadd.f32 %v132, 1e-05
  %v143 = vrsqrt.pop %v133
  %v144 = vrsqrt.pop %v134
  %v145 = vrsqrt.pop %v135
  %v146 = vrsqrt.pop %v136
  %v147 = vrsqrt.pop %v137
  %v148 = vrsqrt.pop %v138
  %v149 = vrsqrt.pop %v139
  %v150 = vrsqrt.pop %v140
  %v151 = vrsqrt.pop %v141
  %v152 = vrsqrt.pop %v142
  %v153 = vmul.f32 %v73, %v143
  %v154 = vmul.f32 %v74, %v144
  %v155 = vmul.f32 %v75, %v145
  %v156 = vmul.f32 %v76, %v146
  %v157 = vmul.f32 %v77, %v147
  %v158 = vmul.f32 %v78, %v148
  %v159 = vmul.f32 %v79, %v149
  %v160 = vmul.f32 %v80, %v150
  %v161 = vmul.f32 %v81, %v151
  %v162 = vmul.f32 %v82, %v152
  %v163 = vld [vmem:[%s1] sm:$0x1]
  %v165 = vlaneseq
  %v166 = vshrl.u32 %v165, 7
  %v167 = vsub.s32 0, %v166
  %v168 = vrot.slane %v163, %v167
  %v170 = vmul.f32 %v153, %v168
  %v171 = vmul.f32 %v154, %v168
  %v172 = vmul.f32 %v155, %v168
  %v173 = vmul.f32 %v156, %v168
  %v174 = vmul.f32 %v157, %v168
  %v175 = vmul.f32 %v158, %v168
  %v176 = vmul.f32 %v159, %v168
  %v177 = vmul.f32 %v160, %v168
  %v178 = vmul.f32 %v161, %v168
  %v179 = vmul.f32 %v162, %v168
  %v180 = vld [vmem:[%s2] sm:$0x1]
  %v182 = vlaneseq
  %v183 = vshrl.u32 %v182, 7
  %v184 = vsub.s32 0, %v183
  %v185 = vrot.slane %v180, %v184
  %v187 = vadd.f32 %v170, %v185
  %v188 = vadd.f32 %v171, %v185
  %v189 = vadd.f32 %v172, %v185
  %v190 = vadd.f32 %v173, %v185
  %v191 = vadd.f32 %v174, %v185
  %v192 = vadd.f32 %v175, %v185
  %v193 = vadd.f32 %v176, %v185
  %v194 = vadd.f32 %v177, %v185
  %v195 = vadd.f32 %v178, %v185
  %v196 = vadd.f32 %v179, %v185
  %v197 = vld [vmem:[%s3] sm:$0xff]
  %v198 = vld [vmem:[%s3 + $0x8] sm:$0xff]
  %v199 = vld [vmem:[%s3 + $0x10] sm:$0xff]
  %v200 = vld [vmem:[%s3 + $0x18] sm:$0xff]
  %v201 = vld [vmem:[%s4] sm:$0x1]
  %v203 = vlaneseq
  %v204 = vshrl.u32 %v203, 7
  %v205 = vsub.s32 0, %v204
  %v206 = vrot.slane %v201, %v205
  %v209 = vsel %vm30, %v187, 0
  %v212 = vsel %vm30, %v188, 0
  %v215 = vsel %vm30, %v189, 0
  %v218 = vsel %vm30, %v190, 0
  %v221 = vsel %vm30, %v191, 0
  %v224 = vsel %vm30, %v192, 0
  %v227 = vsel %vm30, %v193, 0
  %v230 = vsel %vm30, %v194, 0
  %v233 = vsel %vm30, %v195, 0
  %v236 = vsel %vm30, %v196, 0
  %238 = vmatprep.subr.mxu0 0.0
  %239 = vmatpush1.msra.mxu0 %v197
  %240 = vmatprep.subr.mxu0 0.0
  %241 = vmatpush1.msra.mxu0 %v198
  %242 = vmatprep.subr.mxu0 0.0
  %243 = vmatpush1.msra.mxu0 %v199
  %244 = vmatprep.subr.mxu0 0.0
  %245 = vmatpush1.msra.mxu0 %v200
  %246 = vmatprep.subr.mxu0 0.0
  %247 = vmatpush1.msra.mxu0 0.0
  %248 = vmatprep.subr.mxu0 0.0
  %249 = vmatpush1.msra.mxu0 0.0
  %250 = vmatprep.subr.mxu0 0.0
  %251 = vmatpush1.msra.mxu0 0.0
  %252 = vmatprep.subr.mxu0 0.0
  %253 = vmatpush1.msra.mxu0 0.0
  %254 = vmatprep.subr.mxu0 0.0
  %255 = vmatpush1.msra.mxu0 0.0
  %256 = vmatprep.subr.mxu0 0.0
  %257 = vmatpush1.msra.mxu0 0.0
  %258 = vmatprep.subr.mxu0 0.0
  %259 = vmatpush1.msra.mxu0 0.0
  %260 = vmatprep.subr.mxu0 0.0
  %261 = vmatpush1.msra.mxu0 0.0
  %262 = vmatprep.subr.mxu0 0.0
  %263 = vmatpush1.msra.mxu0 0.0
  %264 = vmatprep.subr.mxu0 0.0
  %265 = vmatpush1.msra.mxu0 0.0
  %266 = vmatprep.subr.mxu0 0.0
  %267 = vmatpush1.msra.mxu0 0.0
  %268 = vmatprep.subr.mxu0 0.0
  %269 = vmatpush1.msra.mxu0 0.0
  %270 = vmatprep.subr.mxu0 0.0
  %271 = vmatpush1.msra.mxu0 0.0
  %272 = vmatprep.subr.mxu0 0.0
  %273 = vmatpush1.msra.mxu0 0.0
  %274 = vmatprep.subr.mxu0 0.0
  %275 = vmatpush1.msra.mxu0 0.0
  %276 = vmatprep.subr.mxu0 0.0
  %277 = vmatpush1.msra.mxu0 0.0
  %278 = vmatprep.subr.mxu0 0.0
  %279 = vmatpush1.msra.mxu0 0.0
  %280 = vmatprep.subr.mxu0 0.0
  %281 = vmatpush1.msra.mxu0 0.0
  %282 = vmatprep.subr.mxu0 0.0
  %283 = vmatpush1.msra.mxu0 0.0
  %284 = vmatprep.subr.mxu0 0.0
  %285 = vmatpush1.msra.mxu0 0.0
  %286 = vmatprep.subr.mxu0 0.0
  %287 = vmatpush1.msra.mxu0 0.0
  %288 = vmatprep.subr.mxu0 0.0
  %289 = vmatpush1.msra.mxu0 0.0
  %290 = vmatprep.subr.mxu0 0.0
  %291 = vmatpush1.msra.mxu0 0.0
  %292 = vmatprep.subr.mxu0 0.0
  %293 = vmatpush1.msra.mxu0 0.0
  %294 = vmatprep.subr.mxu0 0.0
  %295 = vmatpush1.msra.mxu0 0.0
  %296 = vmatprep.subr.mxu0 0.0
  %297 = vmatpush1.msra.mxu0 0.0
  %298 = vmatprep.subr.mxu0 0.0
  %299 = vmatpush1.msra.mxu0 0.0
  %300 = vmatprep.subr.mxu0 0.0
  %301 = vmatpush1.msra.mxu0 0.0
  %302 = vmatprep.mubr.f32.mxu0 0.0
  %303 = vmatmul.mubr.f32.gmra.mrb[0].mxu0 %v209
  %v304 = vpop.f32.mrb[0].mxu0
  %v305 = vadd.f32 %v206, %v304
  %v306 = vpop.f32.mrb[0].mxu0
  %307 = vmatprep.mubr.f32.mxu0 0.0
  %308 = vmatmul.mubr.f32.gmra.mrb[0].mxu0 %v212
  %v309 = vpop.f32.mrb[0].mxu0
  %v310 = vadd.f32 %v206, %v309
  %v311 = vpop.f32.mrb[0].mxu0
  %312 = vmatprep.mubr.f32.mxu0 0.0
  %313 = vmatmul.mubr.f32.gmra.mrb[0].mxu0 %v215
  %v314 = vpop.f32.mrb[0].mxu0
  %v315 = vadd.f32 %v206, %v314
  %v316 = vpop.f32.mrb[0].mxu0
  %317 = vmatprep.mubr.f32.mxu0 0.0
  %318 = vmatmul.mubr.f32.gmra.mrb[0].mxu0 %v218
  %v319 = vpop.f32.mrb[0].mxu0
  %v320 = vadd.f32 %v206, %v319
  %v321 = vpop.f32.mrb[0].mxu0
  %322 = vmatprep.mubr.f32.mxu0 0.0
  %323 = vmatmul.mubr.f32.gmra.mrb[0].mxu0 %v221
  %v324 = vpop.f32.mrb[0].mxu0
  %v325 = vadd.f32 %v206, %v324
  %v326 = vpop.f32.mrb[0].mxu0
  %327 = vmatprep.mubr.f32.mxu0 0.0
  %328 = vmatmul.mubr.f32.gmra.mrb[0].mxu0 %v224
  %v329 = vpop.f32.mrb[0].mxu0
  %v330 = vadd.f32 %v206, %v329
  %v331 = vpop.f32.mrb[0].mxu0
  %332 = vmatprep.mubr.f32.mxu0 0.0
  %333 = vmatmul.mubr.f32.gmra.mrb[0].mxu0 %v227
  %v334 = vpop.f32.mrb[0].mxu0
  %v335 = vadd.f32 %v206, %v334
  %v336 = vpop.f32.mrb[0].mxu0
  %337 = vmatprep.mubr.f32.mxu0 0.0
  %338 = vmatmul.mubr.f32.gmra.mrb[0].mxu0 %v230
  %v339 = vpop.f32.mrb[0].mxu0
  %v340 = vadd.f32 %v206, %v339
  %v341 = vpop.f32.mrb[0].mxu0
  %342 = vmatprep.mubr.f32.mxu0 0.0
  %343 = vmatmul.mubr.f32.gmra.mrb[0].mxu0 %v233
  %v344 = vpop.f32.mrb[0].mxu0
  %v345 = vadd.f32 %v206, %v344
  %v346 = vpop.f32.mrb[0].mxu0
  %347 = vmatprep.mubr.f32.mxu0 0.0
  %348 = vmatmul.mubr.f32.gmra.mrb[0].mxu0 %v236
  %v349 = vpop.f32.mrb[0].mxu0
  %v350 = vadd.f32 %v206, %v349
  %v351 = vpop.f32.mrb[0].mxu0
  %352 = vdwg.mxu0
  %353 = vst.msk [vmem:[%s5] sm:$0xff] %vm30, %v305
  %354 = vst.msk [vmem:[%s5 + $0x8] sm:$0xff] %vm30, %v310
  %355 = vst.msk [vmem:[%s5 + $0x10] sm:$0xff] %vm30, %v315
  %356 = vst.msk [vmem:[%s5 + $0x18] sm:$0xff] %vm30, %v320
  %357 = vst.msk [vmem:[%s5 + $0x20] sm:$0xff] %vm30, %v325
  %358 = vst.msk [vmem:[%s5 + $0x28] sm:$0xff] %vm30, %v330
  %359 = vst.msk [vmem:[%s5 + $0x30] sm:$0xff] %vm30, %v335
  %360 = vst.msk [vmem:[%s5 + $0x38] sm:$0xff] %vm30, %v340
  %361 = vst.msk [vmem:[%s5 + $0x40] sm:$0xff] %vm30, %v345
  %362 = vst.msk [vmem:[%s5 + $0x48] sm:$0x3f] %vm58, %v350
  // Predicated region
  $region22: #{_lambda_.9} parent=0 // pred_check
    _
  $region23: #{_lambda_.9} parent=0 // pred_check_branch
    %364 = sbr.rel (0) target = $region25
  $region24: #{_lambda_.9} parent=0 // pred_region
    _
  $region25: #{_lambda_.9} parent=0 // pred_fallthru
    _
  // Predicated region
  $region26: #{_lambda_.9} parent=0 // pred_check
    _
  $region27: #{_lambda_.9} parent=0 // pred_check_branch
    %366 = sbr.rel (0) target = $region29
  $region28: #{_lambda_.9} parent=0 // pred_region
    _
  $region29: #{_lambda_.9} parent=0 // pred_fallthru
    _

// kernel: _lambda_.10
$region0: #{_lambda_.10}
  #allocation0 [shape = 'u32[]', space=smem, size = 0x4, offset = 0x4, fixed_abs, tag = 'smem constant byte address 0x4 - core index']
  #allocation1 [shape = 'u32[144,128]{1,0:T(1,128)}', space=vmem, size = 0x12000, scoped, tag = 'internal scratch']
  %s0 = inlined_call_operand.vmem [shape: f32[2,39,32], index: 0, kind: input, shape index: {}]
  %s1 = inlined_call_operand.vmem [shape: f32[32,96], index: 1, kind: input, shape index: {}]
  %s2 = inlined_call_operand.vmem [shape: f32[1,96], index: 2, kind: input, shape index: {}]
  %s3 = inlined_call_operand.vmem [shape: f32[32,32], index: 3, kind: input, shape index: {}]
  %s4 = inlined_call_operand.vmem [shape: f32[1,32], index: 4, kind: input, shape index: {}]
  %s5 = inlined_call_operand.vmem [shape: f32[1,32], index: 5, kind: input, shape index: {}]
  %s6 = inlined_call_operand.vmem [shape: f32[1,32], index: 6, kind: input, shape index: {}]
  %s7 = inlined_call_operand.vmem [shape: f32[32,64], index: 7, kind: input, shape index: {}]
  %s8 = inlined_call_operand.vmem [shape: f32[1,64], index: 8, kind: input, shape index: {}]
  %s9 = inlined_call_operand.vmem [shape: f32[64,32], index: 9, kind: input, shape index: {}]
  %s10 = inlined_call_operand.vmem [shape: f32[1,32], index: 10, kind: input, shape index: {}]
  %s11 = inlined_call_operand.vmem [shape: f32[1,32], index: 11, kind: input, shape index: {}]
  %s12 = inlined_call_operand.vmem [shape: f32[1,32], index: 12, kind: input, shape index: {}]
  %s13 = inlined_call_operand.vmem [shape: f32[2,39,32], index: 13, kind: output, shape index: {}]
  %s14 = sld [smem:[#allocation0]]
  $region85: #{_lambda_.10} parent=0
    _
  %s16 = ssub.s32 1, %s14
  %s17 = scalar_select 0, %s16, %s14
  loop: start=0, step=1, limit=4
  $region2: #{_lambda_.10} parent=0 // loop_pre_header
    _
  $region3: #{_lambda_.10} parent=0 // loop_header
    %s19 = sphi 0, %s23
    %p20 = scmp.ge.s32.totalorder %s19, 4
    %s29 = sphi 0, %s31
    %s32 = sphi 0, %s29
    %s33 = sphi 0, %s32
    %s49 = sphi 0, %s33
    %s53 = sphi 0, %s53
    %s55 = sphi 0, %s53
    %s56 = sphi 0, %s55
    %s70 = sphi 0, %s56
    %s74 = sphi 0, %s74
    %s76 = sphi 0, %s74
    %s77 = sphi 0, %s76
    %s91 = sphi 0, %s77
    %s95 = sphi 0, %s95
    %s97 = sphi 0, %s95
    %s98 = sphi 0, %s97
    %s112 = sphi 0, %s98
    %s116 = sphi 0, %s116
    %s118 = sphi 0, %s116
    %s119 = sphi 0, %s118
    %s133 = sphi 0, %s119
    %s137 = sphi 0, %s137
    %s139 = sphi 0, %s137
    %s140 = sphi 0, %s139
    %s154 = sphi 0, %s140
    %s158 = sphi 0, %s158
    %s160 = sphi 0, %s158
    %s161 = sphi 0, %s160
    %s175 = sphi 0, %s161
    %s179 = sphi 0, %s179
    %s181 = sphi 0, %s179
    %s182 = sphi 0, %s181
    %s196 = sphi 0, %s182
    %s200 = sphi 0, %s200
    %s202 = sphi 0, %s200
    %s203 = sphi 0, %s202
    %s217 = sphi 0, %s203
    %s221 = sphi 0, %s221
    %s223 = sphi 0, %s221
    %s224 = sphi 0, %s223
    %s238 = sphi 0, %s224
    %s242 = sphi 0, %s242
    %s244 = sphi 0, %s242
    %s245 = sphi 0, %s244
    %s259 = sphi 0, %s245
    %s263 = sphi 0, %s263
    %s265 = sphi 0, %s263
    %s266 = sphi 0, %s265
    %s280 = sphi 0, %s266
    %s284 = sphi 0, %s284
    %s286 = sphi 0, %s284
    %s287 = sphi 0, %s286
    %s301 = sphi 0, %s287
    %s307 = sphi 0, %s309
    %s310 = sphi 0, %s307
    %s311 = sphi 0, %s310
    %s327 = sphi 0, %s311
  $region4: #{_lambda_.10} parent=0 // loop_header_branch
    %22 = sbr.rel (%p20) target = $region8
  $region5: #{_lambda_.10} parent=0 // loop_body
    %s24 = ssub.s32 %s19, 1
    %s25 = ssub.s32 %s19, 2
    %s26 = sadd.s32 %s19, 1
    %s27 = ssub.s32 %s19, %s26
    %p28 = scmp.eq.s32.totalorder %s27, 0
    %s30 = sadd.s32 %s29, 1
    %s31 = scalar_select %p28, %s29, %s30
    %p34 = pneg %p28
    %p35 = scmp.eq.s32.totalorder %s19, 1
    %p36 = por %p34, %p35
    %p37 = scmp.ne.s32.totalorder %s29, %s32
    %p38 = scmp.eq.s32.totalorder %s19, 0
    %p39 = por %p37, %p38
    %p40 = scmp.ne.s32.totalorder %s29, %s32
    %p41 = scmp.eq.s32.totalorder %s24, 1
    %p42 = por %p40, %p41
    %p43 = scmp.ne.s32.totalorder %s32, %s33
    %p44 = scmp.eq.s32.totalorder %s24, 0
    %p45 = por %p43, %p44
    %p46 = scmp.ne.s32.totalorder %s32, %s33
    %p47 = scmp.eq.s32.totalorder %s25, 1
    %p48 = por %p46, %p47
    %p50 = scmp.ne.s32.totalorder %s33, %s49
    %p51 = scmp.eq.s32.totalorder %s25, 0
    %p52 = por %p50, %p51
    %s54 = sadd.s32 %s53, 1
    %p57 = scmp.eq.s32.totalorder %s19, 1
    %p58 = scmp.ne.s32.totalorder %s53, %s55
    %p59 = scmp.eq.s32.totalorder %s19, 0
    %p60 = por %p58, %p59
    %p61 = scmp.ne.s32.totalorder %s53, %s55
    %p62 = scmp.eq.s32.totalorder %s24, 1
    %p63 = por %p61, %p62
    %p64 = scmp.ne.s32.totalorder %s55, %s56
    %p65 = scmp.eq.s32.totalorder %s24, 0
    %p66 = por %p64, %p65
    %p67 = scmp.ne.s32.totalorder %s55, %s56
    %p68 = scmp.eq.s32.totalorder %s25, 1
    %p69 = por %p67, %p68
    %p71 = scmp.ne.s32.totalorder %s56, %s70
    %p72 = scmp.eq.s32.totalorder %s25, 0
    %p73 = por %p71, %p72
    %s75 = sadd.s32 %s74, 1
    %p78 = scmp.eq.s32.totalorder %s19, 1
    %p79 = scmp.ne.s32.totalorder %s74, %s76
    %p80 = scmp.eq.s32.totalorder %s19, 0
    %p81 = por %p79, %p80
    %p82 = scmp.ne.s32.totalorder %s74, %s76
    %p83 = scmp.eq.s32.totalorder %s24, 1
    %p84 = por %p82, %p83
    %p85 = scmp.ne.s32.totalorder %s76, %s77
    %p86 = scmp.eq.s32.totalorder %s24, 0
    %p87 = por %p85, %p86
    %p88 = scmp.ne.s32.totalorder %s76, %s77
    %p89 = scmp.eq.s32.totalorder %s25, 1
    %p90 = por %p88, %p89
    %p92 = scmp.ne.s32.totalorder %s77, %s91
    %p93 = scmp.eq.s32.totalorder %s25, 0
    %p94 = por %p92, %p93
    %s96 = sadd.s32 %s95, 1
    %p99 = scmp.eq.s32.totalorder %s19, 1
    %p100 = scmp.ne.s32.totalorder %s95, %s97
    %p101 = scmp.eq.s32.totalorder %s19, 0
    %p102 = por %p100, %p101
    %p103 = scmp.ne.s32.totalorder %s95, %s97
    %p104 = scmp.eq.s32.totalorder %s24, 1
    %p105 = por %p103, %p104
    %p106 = scmp.ne.s32.totalorder %s97, %s98
    %p107 = scmp.eq.s32.totalorder %s24, 0
    %p108 = por %p106, %p107
    %p109 = scmp.ne.s32.totalorder %s97, %s98
    %p110 = scmp.eq.s32.totalorder %s25, 1
    %p111 = por %p109, %p110
    %p113 = scmp.ne.s32.totalorder %s98, %s112
    %p114 = scmp.eq.s32.totalorder %s25, 0
    %p115 = por %p113, %p114
    %s117 = sadd.s32 %s116, 1
    %p120 = scmp.eq.s32.totalorder %s19, 1
    %p121 = scmp.ne.s32.totalorder %s116, %s118
    %p122 = scmp.eq.s32.totalorder %s19, 0
    %p123 = por %p121, %p122
    %p124 = scmp.ne.s32.totalorder %s116, %s118
    %p125 = scmp.eq.s32.totalorder %s24, 1
    %p126 = por %p124, %p125
    %p127 = scmp.ne.s32.totalorder %s118, %s119
    %p128 = scmp.eq.s32.totalorder %s24, 0
    %p129 = por %p127, %p128
    %p130 = scmp.ne.s32.totalorder %s118, %s119
    %p131 = scmp.eq.s32.totalorder %s25, 1
    %p132 = por %p130, %p131
    %p134 = scmp.ne.s32.totalorder %s119, %s133
    %p135 = scmp.eq.s32.totalorder %s25, 0
    %p136 = por %p134, %p135
    %s138 = sadd.s32 %s137, 1
    %p141 = scmp.eq.s32.totalorder %s19, 1
    %p142 = scmp.ne.s32.totalorder %s137, %s139
    %p143 = scmp.eq.s32.totalorder %s19, 0
    %p144 = por %p142, %p143
    %p145 = scmp.ne.s32.totalorder %s137, %s139
    %p146 = scmp.eq.s32.totalorder %s24, 1
    %p147 = por %p145, %p146
    %p148 = scmp.ne.s32.totalorder %s139, %s140
    %p149 = scmp.eq.s32.totalorder %s24, 0
    %p150 = por %p148, %p149
    %p151 = scmp.ne.s32.totalorder %s139, %s140
    %p152 = scmp.eq.s32.totalorder %s25, 1
    %p153 = por %p151, %p152
    %p155 = scmp.ne.s32.totalorder %s140, %s154
    %p156 = scmp.eq.s32.totalorder %s25, 0
    %p157 = por %p155, %p156
    %s159 = sadd.s32 %s158, 1
    %p162 = scmp.eq.s32.totalorder %s19, 1
    %p163 = scmp.ne.s32.totalorder %s158, %s160
    %p164 = scmp.eq.s32.totalorder %s19, 0
    %p165 = por %p163, %p164
    %p166 = scmp.ne.s32.totalorder %s158, %s160
    %p167 = scmp.eq.s32.totalorder %s24, 1
    %p168 = por %p166, %p167
    %p169 = scmp.ne.s32.totalorder %s160, %s161
    %p170 = scmp.eq.s32.totalorder %s24, 0
    %p171 = por %p169, %p170
    %p172 = scmp.ne.s32.totalorder %s160, %s161
    %p173 = scmp.eq.s32.totalorder %s25, 1
    %p174 = por %p172, %p173
    %p176 = scmp.ne.s32.totalorder %s161, %s175
    %p177 = scmp.eq.s32.totalorder %s25, 0
    %p178 = por %p176, %p177
    %s180 = sadd.s32 %s179, 1
    %p183 = scmp.eq.s32.totalorder %s19, 1
    %p184 = scmp.ne.s32.totalorder %s179, %s181
    %p185 = scmp.eq.s32.totalorder %s19, 0
    %p186 = por %p184, %p185
    %p187 = scmp.ne.s32.totalorder %s179, %s181
    %p188 = scmp.eq.s32.totalorder %s24, 1
    %p189 = por %p187, %p188
    %p190 = scmp.ne.s32.totalorder %s181, %s182
    %p191 = scmp.eq.s32.totalorder %s24, 0
    %p192 = por %p190, %p191
    %p193 = scmp.ne.s32.totalorder %s181, %s182
    %p194 = scmp.eq.s32.totalorder %s25, 1
    %p195 = por %p193, %p194
    %p197 = scmp.ne.s32.totalorder %s182, %s196
    %p198 = scmp.eq.s32.totalorder %s25, 0
    %p199 = por %p197, %p198
    %s201 = sadd.s32 %s200, 1
    %p204 = scmp.eq.s32.totalorder %s19, 1
    %p205 = scmp.ne.s32.totalorder %s200, %s202
    %p206 = scmp.eq.s32.totalorder %s19, 0
    %p207 = por %p205, %p206
    %p208 = scmp.ne.s32.totalorder %s200, %s202
    %p209 = scmp.eq.s32.totalorder %s24, 1
    %p210 = por %p208, %p209
    %p211 = scmp.ne.s32.totalorder %s202, %s203
    %p212 = scmp.eq.s32.totalorder %s24, 0
    %p213 = por %p211, %p212
    %p214 = scmp.ne.s32.totalorder %s202, %s203
    %p215 = scmp.eq.s32.totalorder %s25, 1
    %p216 = por %p214, %p215
    %p218 = scmp.ne.s32.totalorder %s203, %s217
    %p219 = scmp.eq.s32.totalorder %s25, 0
    %p220 = por %p218, %p219
    %s222 = sadd.s32 %s221, 1
    %p225 = scmp.eq.s32.totalorder %s19, 1
    %p226 = scmp.ne.s32.totalorder %s221, %s223
    %p227 = scmp.eq.s32.totalorder %s19, 0
    %p228 = por %p226, %p227
    %p229 = scmp.ne.s32.totalorder %s221, %s223
    %p230 = scmp.eq.s32.totalorder %s24, 1
    %p231 = por %p229, %p230
    %p232 = scmp.ne.s32.totalorder %s223, %s224
    %p233 = scmp.eq.s32.totalorder %s24, 0
    %p234 = por %p232, %p233
    %p235 = scmp.ne.s32.totalorder %s223, %s224
    %p236 = scmp.eq.s32.totalorder %s25, 1
    %p237 = por %p235, %p236
    %p239 = scmp.ne.s32.totalorder %s224, %s238
    %p240 = scmp.eq.s32.totalorder %s25, 0
    %p241 = por %p239, %p240
    %s243 = sadd.s32 %s242, 1
    %p246 = scmp.eq.s32.totalorder %s19, 1
    %p247 = scmp.ne.s32.totalorder %s242, %s244
    %p248 = scmp.eq.s32.totalorder %s19, 0
    %p249 = por %p247, %p248
    %p250 = scmp.ne.s32.totalorder %s242, %s244
    %p251 = scmp.eq.s32.totalorder %s24, 1
    %p252 = por %p250, %p251
    %p253 = scmp.ne.s32.totalorder %s244, %s245
    %p254 = scmp.eq.s32.totalorder %s24, 0
    %p255 = por %p253, %p254
    %p256 = scmp.ne.s32.totalorder %s244, %s245
    %p257 = scmp.eq.s32.totalorder %s25, 1
    %p258 = por %p256, %p257
    %p260 = scmp.ne.s32.totalorder %s245, %s259
    %p261 = scmp.eq.s32.totalorder %s25, 0
    %p262 = por %p260, %p261
    %s264 = sadd.s32 %s263, 1
    %p267 = scmp.eq.s32.totalorder %s19, 1
    %p268 = scmp.ne.s32.totalorder %s263, %s265
    %p269 = scmp.eq.s32.totalorder %s19, 0
    %p270 = por %p268, %p269
    %p271 = scmp.ne.s32.totalorder %s263, %s265
    %p272 = scmp.eq.s32.totalorder %s24, 1
    %p273 = por %p271, %p272
    %p274 = scmp.ne.s32.totalorder %s265, %s266
    %p275 = scmp.eq.s32.totalorder %s24, 0
    %p276 = por %p274, %p275
    %p277 = scmp.ne.s32.totalorder %s265, %s266
    %p278 = scmp.eq.s32.totalorder %s25, 1
    %p279 = por %p277, %p278
    %p281 = scmp.ne.s32.totalorder %s266, %s280
    %p282 = scmp.eq.s32.totalorder %s25, 0
    %p283 = por %p281, %p282
    %s285 = sadd.s32 %s284, 1
    %p288 = scmp.eq.s32.totalorder %s19, 1
    %p289 = scmp.ne.s32.totalorder %s284, %s286
    %p290 = scmp.eq.s32.totalorder %s19, 0
    %p291 = por %p289, %p290
    %p292 = scmp.ne.s32.totalorder %s284, %s286
    %p293 = scmp.eq.s32.totalorder %s24, 1
    %p294 = por %p292, %p293
    %p295 = scmp.ne.s32.totalorder %s286, %s287
    %p296 = scmp.eq.s32.totalorder %s24, 0
    %p297 = por %p295, %p296
    %p298 = scmp.ne.s32.totalorder %s286, %s287
    %p299 = scmp.eq.s32.totalorder %s25, 1
    %p300 = por %p298, %p299
    %p302 = scmp.ne.s32.totalorder %s287, %s301
    %p303 = scmp.eq.s32.totalorder %s25, 0
    %p304 = por %p302, %p303
    %s305 = ssub.s32 %s19, %s26
    %p306 = scmp.eq.s32.totalorder %s305, 0
    %s308 = sadd.s32 %s307, 1
    %s309 = scalar_select %p306, %s307, %s308
    %p312 = pneg %p306
    %p313 = scmp.eq.s32.totalorder %s19, 1
    %p314 = por %p312, %p313
    %p315 = scmp.ne.s32.totalorder %s307, %s310
    %p316 = scmp.eq.s32.totalorder %s19, 0
    %p317 = por %p315, %p316
    %p318 = scmp.ne.s32.totalorder %s307, %s310
    %p319 = scmp.eq.s32.totalorder %s24, 1
    %p320 = por %p318, %p319
    %p321 = scmp.ne.s32.totalorder %s310, %s311
    %p322 = scmp.eq.s32.totalorder %s24, 0
    %p323 = por %p321, %p322
    %p324 = scmp.ne.s32.totalorder %s310, %s311
    %p325 = scmp.eq.s32.totalorder %s25, 1
    %p326 = por %p324, %p325
    %p328 = scmp.ne.s32.totalorder %s311, %s327
    %p329 = scmp.eq.s32.totalorder %s25, 0
    %p330 = por %p328, %p329
    %p331 = scmp.le.s32.totalorder 1, %s19
    %p332 = scmp.lt.s32.totalorder %s19, 3
    %p333 = pnand %p331, %p332
    %p334 = pneg %p333
    // Predicated region
    $region9: #{_lambda_.10} parent=5 // pred_check
      _
    $region10: #{_lambda_.10} parent=5 // pred_check_branch
      %336 = sbr.rel (%p333) target = $region12
    $region11: #{_lambda_.10} parent=5 // pred_region
      %s337 = ssub.s32 %s19, 1
      // Predicated region
      $region13: #{_lambda_.10} parent=11 // pred_check
        %p338 = pneg %p66
      $region14: #{_lambda_.10} parent=11 // pred_check_branch
        %340 = sbr.rel (%p338) target = $region16
      $region15: #{_lambda_.10} parent=11 // pred_region
        _
      $region16: #{_lambda_.10} parent=11 // pred_fallthru
        _
      // Predicated region
      $region17: #{_lambda_.10} parent=11 // pred_check
        %p341 = pneg %p87
      $region18: #{_lambda_.10} parent=11 // pred_check_branch
        %343 = sbr.rel (%p341) target = $region20
      $region19: #{_lambda_.10} parent=11 // pred_region
        _
      $region20: #{_lambda_.10} parent=11 // pred_fallthru
        _
      // Predicated region
      $region21: #{_lambda_.10} parent=11 // pred_check
        %p344 = pneg %p108
      $region22: #{_lambda_.10} parent=11 // pred_check_branch
        %346 = sbr.rel (%p344) target = $region24
      $region23: #{_lambda_.10} parent=11 // pred_region
        _
      $region24: #{_lambda_.10} parent=11 // pred_fallthru
        _
      // Predicated region
      $region25: #{_lambda_.10} parent=11 // pred_check
        %p347 = pneg %p129
      $region26: #{_lambda_.10} parent=11 // pred_check_branch
        %349 = sbr.rel (%p347) target = $region28
      $region27: #{_lambda_.10} parent=11 // pred_region
        _
      $region28: #{_lambda_.10} parent=11 // pred_fallthru
        _
      // Predicated region
      $region29: #{_lambda_.10} parent=11 // pred_check
        %p350 = pneg %p150
      $region30: #{_lambda_.10} parent=11 // pred_check_branch
        %352 = sbr.rel (%p350) target = $region32
      $region31: #{_lambda_.10} parent=11 // pred_region
        _
      $region32: #{_lambda_.10} parent=11 // pred_fallthru
        _
      // Predicated region
      $region33: #{_lambda_.10} parent=11 // pred_check
        %p353 = pneg %p171
      $region34: #{_lambda_.10} parent=11 // pred_check_branch
        %355 = sbr.rel (%p353) target = $region36
      $region35: #{_lambda_.10} parent=11 // pred_region
        _
      $region36: #{_lambda_.10} parent=11 // pred_fallthru
        _
      // Predicated region
      $region37: #{_lambda_.10} parent=11 // pred_check
        %p356 = pneg %p192
      $region38: #{_lambda_.10} parent=11 // pred_check_branch
        %358 = sbr.rel (%p356) target = $region40
      $region39: #{_lambda_.10} parent=11 // pred_region
        _
      $region40: #{_lambda_.10} parent=11 // pred_fallthru
        _
      // Predicated region
      $region41: #{_lambda_.10} parent=11 // pred_check
        %p359 = pneg %p213
      $region42: #{_lambda_.10} parent=11 // pred_check_branch
        %361 = sbr.rel (%p359) target = $region44
      $region43: #{_lambda_.10} parent=11 // pred_region
        _
      $region44: #{_lambda_.10} parent=11 // pred_fallthru
        _
      // Predicated region
      $region45: #{_lambda_.10} parent=11 // pred_check
        %p362 = pneg %p234
      $region46: #{_lambda_.10} parent=11 // pred_check_branch
        %364 = sbr.rel (%p362) target = $region48
      $region47: #{_lambda_.10} parent=11 // pred_region
        _
      $region48: #{_lambda_.10} parent=11 // pred_fallthru
        _
      // Predicated region
      $region49: #{_lambda_.10} parent=11 // pred_check
        %p365 = pneg %p255
      $region50: #{_lambda_.10} parent=11 // pred_check_branch
        %367 = sbr.rel (%p365) target = $region52
      $region51: #{_lambda_.10} parent=11 // pred_region
        _
      $region52: #{_lambda_.10} parent=11 // pred_fallthru
        _
      // Predicated region
      $region53: #{_lambda_.10} parent=11 // pred_check
        %p368 = pneg %p276
      $region54: #{_lambda_.10} parent=11 // pred_check_branch
        %370 = sbr.rel (%p368) target = $region56
      $region55: #{_lambda_.10} parent=11 // pred_region
        _
      $region56: #{_lambda_.10} parent=11 // pred_fallthru
        _
      // Predicated region
      $region57: #{_lambda_.10} parent=11 // pred_check
        %p371 = pneg %p297
      $region58: #{_lambda_.10} parent=11 // pred_check_branch
        %373 = sbr.rel (%p371) target = $region60
      $region59: #{_lambda_.10} parent=11 // pred_region
        _
      $region60: #{_lambda_.10} parent=11 // pred_fallthru
        _
    $region12: #{_lambda_.10} parent=5 // pred_fallthru
      _
    %p374 = scmp.lt.s32.totalorder %s19, 2
    // Predicated region
    $region61: #{_lambda_.10} parent=5 // pred_check
      %p375 = pneg %p374
    $region62: #{_lambda_.10} parent=5 // pred_check_branch
      %377 = sbr.rel (%p375) target = $region64
    $region63: #{_lambda_.10} parent=5 // pred_region
      // Predicated region
      $region65: #{_lambda_.10} parent=63 // pred_check
        %p378 = pneg %p39
      $region66: #{_lambda_.10} parent=63 // pred_check_branch
        %380 = sbr.rel (%p378) target = $region68
      $region67: #{_lambda_.10} parent=63 // pred_region
        %p381 = scmp.lt.s32.totalorder %s19, 1
        %s382 = scalar_select %p381, %s19, 1
        %s383 = smul.addr %s382, 5
        %s384 = smul.addr %s383, 8
        %s385 = scalar_lea.vmem %s0, %s384
      $region68: #{_lambda_.10} parent=63 // pred_fallthru
        _
    $region64: #{_lambda_.10} parent=5 // pred_fallthru
      _
    %p386 = scmp.le.s32.totalorder 1, %s19
    %p387 = scmp.lt.s32.totalorder %s19, 3
    %p388 = pnand %p386, %p387
    %p389 = pneg %p388
    // Predicated region
    $region69: #{_lambda_.10} parent=5 // pred_check
      _
    $region70: #{_lambda_.10} parent=5 // pred_check_branch
      %391 = sbr.rel (%p388) target = $region72
    $region71: #{_lambda_.10} parent=5 // pred_region
      %s392 = ssub.s32 %s19, 1
      %p393 = scmp.lt.s32.totalorder %s24, 1
      %s394 = scalar_select %p393, %s24, 1
      %s395 = smul.addr %s394, 5
      %s396 = smul.addr %s395, 8
      %s397 = scalar_lea.vmem %s0, %s396
      %p398 = pneg %p45
      %p399 = pneg %p42
      %p400 = pneg %p66
      %p401 = pneg %p63
      %p402 = pneg %p87
      %p403 = pneg %p84
      %p404 = pneg %p108
      %p405 = pneg %p105
      %p406 = pneg %p129
      %p407 = pneg %p126
      %p408 = pneg %p150
      %p409 = pneg %p147
      %p410 = pneg %p171
      %p411 = pneg %p168
      %p412 = pneg %p192
      %p413 = pneg %p189
      %p414 = pneg %p213
      %p415 = pneg %p210
      %p416 = pneg %p234
      %p417 = pneg %p231
      %p418 = pneg %p255
      %p419 = pneg %p252
      %p420 = pneg %p276
      %p421 = pneg %p273
      %p422 = pneg %p297
      %p423 = pneg %p294
      %p424 = pneg %p323
      %p425 = pneg %p320
      %p426 = scmp.lt.s32.totalorder %s24, 1
      %s427 = scalar_select %p426, %s24, 1
      %s428 = smul.addr %s427, 5
      %s429 = smul.addr %s428, 8
      %s430 = scalar_lea.vmem %s13, %s429
      %p431 = scmp.lt.s32.totalorder %s24, 1
      %s432 = scalar_select %p431, %s24, 1
      %s433 = smul.addr %s432, 5
      %s434 = smul.addr %s433, 8
      %s435 = scalar_lea.vmem %s0, %s434
      %p436 = scmp.lt.s32.totalorder %s24, 1
      %s437 = scalar_select %p436, %s24, 1
      %s438 = smul.addr %s437, 5
      %s439 = smul.addr %s438, 8
      %s440 = scalar_lea.vmem %s13, %s439
      %v441 = vld [vmem:[%s435] sm:$0xff]
      %v442 = vld [vmem:[%s435 + $0x8] sm:$0xff]
      %v443 = vld [vmem:[%s435 + $0x10] sm:$0xff]
      %v444 = vld [vmem:[%s435 + $0x18] sm:$0xff]
      %v445 = vld [vmem:[%s435 + $0x20] sm:$0x7f]
      %v446 = vld [vmem:[%s1] sm:$0xff]
      %v447 = vld [vmem:[%s1 + $0x8] sm:$0xff]
      %v448 = vld [vmem:[%s1 + $0x10] sm:$0xff]
      %v449 = vld [vmem:[%s1 + $0x18] sm:$0xff]
      %v450 = vld [vmem:[%s2] sm:$0x1]
      %v452 = vlaneseq
      %v453 = vshrl.u32 %v452, 7
      %v454 = vsub.s32 0, %v453
      %v455 = vrot.slane %v450, %v454
      %vm457 = vcmask 261120
      %v459 = vsel %vm457, %v441, 0
      %v462 = vsel %vm457, %v442, 0
      %v465 = vsel %vm457, %v443, 0
      %v468 = vsel %vm457, %v444, 0
      %v471 = vsel %vm457, %v445, 0
      %473 = vmatprep.subr.mxu0 0.0
      %474 = vmatpush1.msra.mxu0 %v446
      %475 = vmatprep.subr.mxu0 0.0
      %476 = vmatpush1.msra.mxu0 %v447
      %477 = vmatprep.subr.mxu0 0.0
      %478 = vmatpush1.msra.mxu0 %v448
      %479 = vmatprep.subr.mxu0 0.0
      %480 = vmatpush1.msra.mxu0 %v449
      %481 = vmatprep.subr.mxu0 0.0
      %482 = vmatpush1.msra.mxu0 0.0
      %483 = vmatprep.subr.mxu0 0.0
      %484 = vmatpush1.msra.mxu0 0.0
      %485 = vmatprep.subr.mxu0 0.0
      %486 = vmatpush1.msra.mxu0 0.0
      %487 = vmatprep.subr.mxu0 0.0
      %488 = vmatpush1.msra.mxu0 0.0
      %489 = vmatprep.subr.mxu0 0.0
      %490 = vmatpush1.msra.mxu0 0.0
      %491 = vmatprep.subr.mxu0 0.0
      %492 = vmatpush1.msra.mxu0 0.0
      %493 = vmatprep.subr.mxu0 0.0
      %494 = vmatpush1.msra.mxu0 0.0
      %495 = vmatprep.subr.mxu0 0.0
      %496 = vmatpush1.msra.mxu0 0.0
      %497 = vmatprep.subr.mxu0 0.0
      %498 = vmatpush1.msra.mxu0 0.0
      %499 = vmatprep.subr.mxu0 0.0
      %500 = vmatpush1.msra.mxu0 0.0
      %501 = vmatprep.subr.mxu0 0.0
      %502 = vmatpush1.msra.mxu0 0.0
      %503 = vmatprep.subr.mxu0 0.0
      %504 = vmatpush1.msra.mxu0 0.0
      %505 = vmatprep.subr.mxu0 0.0
      %506 = vmatpush1.msra.mxu0 0.0
      %507 = vmatprep.subr.mxu0 0.0
      %508 = vmatpush1.msra.mxu0 0.0
      %509 = vmatprep.subr.mxu0 0.0
      %510 = vmatpush1.msra.mxu0 0.0
      %511 = vmatprep.subr.mxu0 0.0
      %512 = vmatpush1.msra.mxu0 0.0
      %513 = vmatprep.subr.mxu0 0.0
      %514 = vmatpush1.msra.mxu0 0.0
      %515 = vmatprep.subr.mxu0 0.0
      %516 = vmatpush1.msra.mxu0 0.0
      %517 = vmatprep.subr.mxu0 0.0
      %518 = vmatpush1.msra.mxu0 0.0
      %519 = vmatprep.subr.mxu0 0.0
      %520 = vmatpush1.msra.mxu0 0.0
      %521 = vmatprep.subr.mxu0 0.0
      %522 = vmatpush1.msra.mxu0 0.0
      %523 = vmatprep.subr.mxu0 0.0
      %524 = vmatpush1.msra.mxu0 0.0
      %525 = vmatprep.subr.mxu0 0.0
      %526 = vmatpush1.msra.mxu0 0.0
      %527 = vmatprep.subr.mxu0 0.0
      %528 = vmatpush1.msra.mxu0 0.0
      %529 = vmatprep.subr.mxu0 0.0
      %530 = vmatpush1.msra.mxu0 0.0
      %531 = vmatprep.subr.mxu0 0.0
      %532 = vmatpush1.msra.mxu0 0.0
      %533 = vmatprep.subr.mxu0 0.0
      %534 = vmatpush1.msra.mxu0 0.0
      %535 = vmatprep.subr.mxu0 0.0
      %536 = vmatpush1.msra.mxu0 0.0
      %537 = vmatprep.mubr.f32.mxu0 0.0
      %538 = vmatmul.mubr.f32.gmra.mrb[0].mxu0 %v459
      %v539 = vpop.f32.mrb[0].mxu0
      %v540 = vadd.f32 %v455, %v539
      %v541 = vpop.f32.mrb[0].mxu0
      %542 = vmatprep.mubr.f32.mxu0 0.0
      %543 = vmatmul.mubr.f32.gmra.mrb[0].mxu0 %v462
      %v544 = vpop.f32.mrb[0].mxu0
      %v545 = vadd.f32 %v455, %v544
      %v546 = vpop.f32.mrb[0].mxu0
      %547 = vmatprep.mubr.f32.mxu0 0.0
      %548 = vmatmul.mubr.f32.gmra.mrb[0].mxu0 %v465
      %v549 = vpop.f32.mrb[0].mxu0
      %v550 = vadd.f32 %v455, %v549
      %v551 = vpop.f32.mrb[0].mxu0
      %552 = vmatprep.mubr.f32.mxu0 0.0
      %553 = vmatmul.mubr.f32.gmra.mrb[0].mxu0 %v468
      %v554 = vpop.f32.mrb[0].mxu0
      %v555 = vadd.f32 %v455, %v554
      %v556 = vpop.f32.mrb[0].mxu0
      %557 = vmatprep.mubr.f32.mxu0 0.0
      %558 = vmatmul.mubr.f32.gmra.mrb[0].mxu0 %v471
      %v559 = vpop.f32.mrb[0].mxu0
      %v560 = vadd.f32 %v455, %v559
      %v561 = vpop.f32.mrb[0].mxu0
      %562 = vdwg.mxu0
      %v563 = vmul.f32 %v540, 0.35355338
      %v564 = vmul.f32 %v545, 0.35355338
      %v565 = vmul.f32 %v550, 0.35355338
      %v566 = vmul.f32 %v555, 0.35355338
      %v567 = vmul.f32 %v560, 0.35355338
      %573 = vrot.lane.b32.xlu0 %v540, 96
      %v574 = vpop.permute.xlu0 %573
      %575 = vrot.lane.b32.xlu0 %v545, 96
      %v576 = vpop.permute.xlu0 %575
      %577 = vrot.lane.b32.xlu0 %v550, 96
      %v578 = vpop.permute.xlu0 %577
      %579 = vrot.lane.b32.xlu0 %v555, 96
      %v580 = vpop.permute.xlu0 %579
      %581 = vrot.lane.b32.xlu0 %v560, 96
      %v582 = vpop.permute.xlu0 %581
      %vm583 = vcmask 64512
      %v585 = vsel %vm583, %v563, 0
      %v588 = vsel %vm583, %v564, 0
      %v591 = vsel %vm583, %v565, 0
      %v594 = vsel %vm583, %v566, 0
      %v597 = vsel %vm583, %v567, 0
      %v599 = vsel %vm583, %v574, 0
      %v601 = vsel %vm583, %v576, 0
      %v603 = vsel %vm583, %v578, 0
      %v605 = vsel %vm583, %v580, 0
      %v607 = vsel %vm583, %v582, 0
      %609 = vmatprep.subr.mxu0 0.0
      %610 = vmatpush1.xpose.msra.mxu0 %v599
      %611 = vmatprep.subr.mxu0 0.0
      %612 = vmatpush1.xpose.msra.mxu0 %v601
      %613 = vmatprep.subr.mxu0 0.0
      %614 = vmatpush1.xpose.msra.mxu0 %v603
      %615 = vmatprep.subr.mxu0 0.0
      %616 = vmatpush1.xpose.msra.mxu0 %v605
      %617 = vmatprep.subr.mxu0 0.0
      %618 = vmatpush1.xpose.msra.mxu0 %v607
      %619 = vmatprep.subr.mxu0 0.0
      %620 = vmatpush1.xpose.msra.mxu0 0.0
      %621 = vmatprep.subr.mxu0 0.0
      %622 = vmatpush1.xpose.msra.mxu0 0.0
      %623 = vmatprep.subr.mxu0 0.0
      %624 = vmatpush1.xpose.msra.mxu0 0.0
      %625 = vmatprep.subr.mxu0 0.0
      %626 = vmatpush1.xpose.msra.mxu0 0.0
      %627 = vmatprep.subr.mxu0 0.0
      %628 = vmatpush1.xpose.msra.mxu0 0.0
      %629 = vmatprep.subr.mxu0 0.0
      %630 = vmatpush1.xpose.msra.mxu0 0.0
      %631 = vmatprep.subr.mxu0 0.0
      %632 = vmatpush1.xpose.msra.mxu0 0.0
      %633 = vmatprep.subr.mxu0 0.0
      %634 = vmatpush1.xpose.msra.mxu0 0.0
      %635 = vmatprep.subr.mxu0 0.0
      %636 = vmatpush1.xpose.msra.mxu0 0.0
      %637 = vmatprep.subr.mxu0 0.0
      %638 = vmatpush1.xpose.msra.mxu0 0.0
      %639 = vmatprep.subr.mxu0 0.0
      %640 = vmatpush1.xpose.msra.mxu0 0.0
      %641 = vmatprep.subr.mxu0 0.0
      %642 = vmatpush1.xpose.msra.mxu0 0.0
      %643 = vmatprep.subr.mxu0 0.0
      %644 = vmatpush1.xpose.msra.mxu0 0.0
      %645 = vmatprep.subr.mxu0 0.0
      %646 = vmatpush1.xpose.msra.mxu0 0.0
      %647 = vmatprep.subr.mxu0 0.0
      %648 = vmatpush1.xpose.msra.mxu0 0.0
      %649 = vmatprep.subr.mxu0 0.0
      %650 = vmatpush1.xpose.msra.mxu0 0.0
      %651 = vmatprep.subr.mxu0 0.0
      %652 = vmatpush1.xpose.msra.mxu0 0.0
      %653 = vmatprep.subr.mxu0 0.0
      %654 = vmatpush1.xpose.msra.mxu0 0.0
      %655 = vmatprep.subr.mxu0 0.0
      %656 = vmatpush1.xpose.msra.mxu0 0.0
      %657 = vmatprep.subr.mxu0 0.0
      %658 = vmatpush1.xpose.msra.mxu0 0.0
      %659 = vmatprep.subr.mxu0 0.0
      %660 = vmatpush1.xpose.msra.mxu0 0.0
      %661 = vmatprep.subr.mxu0 0.0
      %662 = vmatpush1.xpose.msra.mxu0 0.0
      %663 = vmatprep.subr.mxu0 0.0
      %664 = vmatpush1.xpose.msra.mxu0 0.0
      %665 = vmatprep.subr.mxu0 0.0
      %666 = vmatpush1.xpose.msra.mxu0 0.0
      %667 = vmatprep.subr.mxu0 0.0
      %668 = vmatpush1.xpose.msra.mxu0 0.0
      %669 = vmatprep.subr.mxu0 0.0
      %670 = vmatpush1.xpose.msra.mxu0 0.0
      %671 = vmatprep.subr.mxu0 0.0
      %672 = vmatpush1.xpose.msra.mxu0 0.0
      %673 = vmatprep.mubr.f32.mxu0 0.0
      %674 = vmatmul.mubr.f32.gmra.mrb[0].mxu0 %v585
      %v675 = vpop.f32.mrb[0].mxu0
      %v676 = vadd.f32 0.0, %v675
      %v677 = vpop.f32.mrb[0].mxu0
      %678 = vmatprep.mubr.f32.mxu0 0.0
      %679 = vmatmul.mubr.f32.gmra.mrb[0].mxu0 %v588
      %v680 = vpop.f32.mrb[0].mxu0
      %v681 = vadd.f32 0.0, %v680
      %v682 = vpop.f32.mrb[0].mxu0
      %683 = vmatprep.mubr.f32.mxu0 0.0
      %684 = vmatmul.mubr.f32.gmra.mrb[0].mxu0 %v591
      %v685 = vpop.f32.mrb[0].mxu0
      %v686 = vadd.f32 0.0, %v685
      %v687 = vpop.f32.mrb[0].mxu0
      %688 = vmatprep.mubr.f32.mxu0 0.0
      %689 = vmatmul.mubr.f32.gmra.mrb[0].mxu0 %v594
      %v690 = vpop.f32.mrb[0].mxu0
      %v691 = vadd.f32 0.0, %v690
      %v692 = vpop.f32.mrb[0].mxu0
      %693 = vmatprep.mubr.f32.mxu0 0.0
      %694 = vmatmul.mubr.f32.gmra.mrb[0].mxu0 %v597
      %v695 = vpop.f32.mrb[0].mxu0
      %v696 = vadd.f32 0.0, %v695
      %v697 = vpop.f32.mrb[0].mxu0
      %698 = vdwg.mxu0
      %vm699 = vcmask 318464
      %v700 = vsel %vm699, %v676, -inf
      %701 = vmax.xlane.f32.xlu0 %v700
      %v702 = vpop.xlane.xlu0 %701
      %v703 = vsel %vm699, %v681, -inf
      %704 = vmax.xlane.f32.xlu0 %v703
      %v705 = vpop.xlane.xlu0 %704
      %v706 = vsel %vm699, %v686, -inf
      %707 = vmax.xlane.f32.xlu0 %v706
      %v708 = vpop.xlane.xlu0 %707
      %v709 = vsel %vm699, %v691, -inf
      %710 = vmax.xlane.f32.xlu0 %v709
      %v711 = vpop.xlane.xlu0 %710
      %vm712 = vcmask 317440
      %v713 = vsel %vm712, %v696, -inf
      %714 = vmax.xlane.f32.xlu0 %v713
      %v715 = vpop.xlane.xlu0 %714
      %v716 = vsub.f32 %v676, %v702
      %v717 = vsub.f32 %v681, %v705
      %v718 = vsub.f32 %v686, %v708
      %v719 = vsub.f32 %v691, %v711
      %v720 = vsub.f32 %v696, %v715
      %v721 = vmul.f32 %v716, 1.442695
      %v722 = vpow.pop %v721
      %v723 = vmul.f32 %v717, 1.442695
      %v724 = vpow.pop %v723
      %v725 = vmul.f32 %v718, 1.442695
      %v726 = vpow.pop %v725
      %v727 = vmul.f32 %v719, 1.442695
      %v728 = vpow.pop %v727
      %v729 = vmul.f32 %v720, 1.442695
      %v730 = vpow.pop %v729
      %v731 = vsel %vm699, %v722, 0.0
      %732 = vadd.xlane.f32.xlu0 %v731
      %v733 = vpop.xlane.xlu0 %732
      %v734 = vsel %vm699, %v724, 0.0
      %735 = vadd.xlane.f32.xlu0 %v734
      %v736 = vpop.xlane.xlu0 %735
      %v737 = vsel %vm699, %v726, 0.0
      %738 = vadd.xlane.f32.xlu0 %v737
      %v739 = vpop.xlane.xlu0 %738
      %v740 = vsel %vm699, %v728, 0.0
      %741 = vadd.xlane.f32.xlu0 %v740
      %v742 = vpop.xlane.xlu0 %741
      %v743 = vsel %vm712, %v730, 0.0
      %744 = vadd.xlane.f32.xlu0 %v743
      %v745 = vpop.xlane.xlu0 %744
      %v746 = vrcp.pop %v733
      %v747 = vrcp.pop %v736
      %v748 = vrcp.pop %v739
      %v749 = vrcp.pop %v742
      %v750 = vrcp.pop %v745
      %v751 = vmul.f32 %v722, %v746
      %v752 = vmul.f32 %v724, %v747
      %v753 = vmul.f32 %v726, %v748
      %v754 = vmul.f32 %v728, %v749
      %v755 = vmul.f32 %v730, %v750
      %756 = vrot.lane.b32.xlu0 %v540, 64
      %v757 = vpop.permute.xlu0 %756
      %758 = vrot.lane.b32.xlu0 %v545, 64
      %v759 = vpop.permute.xlu0 %758
      %760 = vrot.lane.b32.xlu0 %v550, 64
      %v761 = vpop.permute.xlu0 %760
      %762 = vrot.lane.b32.xlu0 %v555, 64
      %v763 = vpop.permute.xlu0 %762
      %764 = vrot.lane.b32.xlu0 %v560, 64
      %v765 = vpop.permute.xlu0 %764
      %v771 = vsel %vm699, %v751, 0
      %v774 = vsel %vm699, %v752, 0
      %v777 = vsel %vm699, %v753, 0
      %v780 = vsel %vm699, %v754, 0
      %v783 = vsel %vm699, %v755, 0
      %vm785 = vcmask 1046528
      %v786 = vsel %vm785, %v765, 0
      %788 = vmatprep.subr.mxu0 0.0
      %789 = vmatpush1.msra.mxu0 %v757
      %790 = vmatprep.subr.mxu0 0.0
      %791 = vmatpush1.msra.mxu0 %v759
      %792 = vmatprep.subr.mxu0 0.0
      %793 = vmatpush1.msra.mxu0 %v761
      %794 = vmatprep.subr.mxu0 0.0
      %795 = vmatpush1.msra.mxu0 %v763
      %796 = vmatprep.subr.mxu0 0.0
      %797 = vmatpush1.msra.mxu0 %v786
      %798 = vmatprep.subr.mxu0 0.0
      %799 = vmatpush1.msra.mxu0 0.0
      %800 = vmatprep.subr.mxu0 0.0
      %801 = vmatpush1.msra.mxu0 0.0
      %802 = vmatprep.subr.mxu0 0.0
      %803 = vmatpush1.msra.mxu0 0.0
      %804 = vmatprep.subr.mxu0 0.0
      %805 = vmatpush1.msra.mxu0 0.0
      %806 = vmatprep.subr.mxu0 0.0
      %807 = vmatpush1.msra.mxu0 0.0
      %808 = vmatprep.subr.mxu0 0.0
      %809 = vmatpush1.msra.mxu0 0.0
      %810 = vmatprep.subr.mxu0 0.0
      %811 = vmatpush1.msra.mxu0 0.0
      %812 = vmatprep.subr.mxu0 0.0
      %813 = vmatpush1.msra.mxu0 0.0
      %814 = vmatprep.subr.mxu0 0.0
      %815 = vmatpush1.msra.mxu0 0.0
      %816 = vmatprep.subr.mxu0 0.0
      %817 = vmatpush1.msra.mxu0 0.0
      %818 = vmatprep.subr.mxu0 0.0
      %819 = vmatpush1.msra.mxu0 0.0
      %820 = vmatprep.subr.mxu0 0.0
      %821 = vmatpush1.msra.mxu0 0.0
      %822 = vmatprep.subr.mxu0 0.0
      %823 = vmatpush1.msra.mxu0 0.0
      %824 = vmatprep.subr.mxu0 0.0
      %825 = vmatpush1.msra.mxu0 0.0
      %826 = vmatprep.subr.mxu0 0.0
      %827 = vmatpush1.msra.mxu0 0.0
      %828 = vmatprep.subr.mxu0 0.0
      %829 = vmatpush1.msra.mxu0 0.0
      %830 = vmatprep.subr.mxu0 0.0
      %831 = vmatpush1.msra.mxu0 0.0
      %832 = vmatprep.subr.mxu0 0.0
      %833 = vmatpush1.msra.mxu0 0.0
      %834 = vmatprep.subr.mxu0 0.0
      %835 = vmatpush1.msra.mxu0 0.0
      %836 = vmatprep.subr.mxu0 0.0
      %837 = vmatpush1.msra.mxu0 0.0
      %838 = vmatprep.subr.mxu0 0.0
      %839 = vmatpush1.msra.mxu0 0.0
      %840 = vmatprep.subr.mxu0 0.0
      %841 = vmatpush1.msra.mxu0 0.0
      %842 = vmatprep.subr.mxu0 0.0
      %843 = vmatpush1.msra.mxu0 0.0
      %844 = vmatprep.subr.mxu0 0.0
      %845 = vmatpush1.msra.mxu0 0.0
      %846 = vmatprep.subr.mxu0 0.0
      %847 = vmatpush1.msra.mxu0 0.0
      %848 = vmatprep.subr.mxu0 0.0
      %849 = vmatpush1.msra.mxu0 0.0
      %850 = vmatprep.subr.mxu0 0.0
      %851 = vmatpush1.msra.mxu0 0.0
      %852 = vmatprep.mubr.f32.mxu0 0.0
      %853 = vmatmul.mubr.f32.gmra.mrb[0].mxu0 %v771
      %v854 = vpop.f32.mrb[0].mxu0
      %v855 = vadd.f32 0.0, %v854
      %v856 = vpop.f32.mrb[0].mxu0
      %857 = vmatprep.mubr.f32.mxu0 0.0
      %858 = vmatmul.mubr.f32.gmra.mrb[0].mxu0 %v774
      %v859 = vpop.f32.mrb[0].mxu0
      %v860 = vadd.f32 0.0, %v859
      %v861 = vpop.f32.mrb[0].mxu0
      %862 = vmatprep.mubr.f32.mxu0 0.0
      %863 = vmatmul.mubr.f32.gmra.mrb[0].mxu0 %v777
      %v864 = vpop.f32.mrb[0].mxu0
      %v865 = vadd.f32 0.0, %v864
      %v866 = vpop.f32.mrb[0].mxu0
      %867 = vmatprep.mubr.f32.mxu0 0.0
      %868 = vmatmul.mubr.f32.gmra.mrb[0].mxu0 %v780
      %v869 = vpop.f32.mrb[0].mxu0
      %v870 = vadd.f32 0.0, %v869
      %v871 = vpop.f32.mrb[0].mxu0
      %872 = vmatprep.mubr.f32.mxu0 0.0
      %873 = vmatmul.mubr.f32.gmra.mrb[0].mxu0 %v783
      %v874 = vpop.f32.mrb[0].mxu0
      %v875 = vadd.f32 0.0, %v874
      %v876 = vpop.f32.mrb[0].mxu0
      %877 = vdwg.mxu0
      %878 = vrot.lane.b32.xlu0 %v563, 120
      %v879 = vpop.permute.xlu0 %878
      %880 = vrot.lane.b32.xlu0 %v564, 120
      %v881 = vpop.permute.xlu0 %880
      %882 = vrot.lane.b32.xlu0 %v565, 120
      %v883 = vpop.permute.xlu0 %882
      %884 = vrot.lane.b32.xlu0 %v566, 120
      %v885 = vpop.permute.xlu0 %884
      %886 = vrot.lane.b32.xlu0 %v567, 120
      %v887 = vpop.permute.xlu0 %886
      %888 = vrot.lane.b32.xlu0 %v540, 88
      %v889 = vpop.permute.xlu0 %888
      %890 = vrot.lane.b32.xlu0 %v545, 88
      %v891 = vpop.permute.xlu0 %890
      %892 = vrot.lane.b32.xlu0 %v550, 88
      %v893 = vpop.permute.xlu0 %892
      %894 = vrot.lane.b32.xlu0 %v555, 88
      %v895 = vpop.permute.xlu0 %894
      %896 = vrot.lane.b32.xlu0 %v560, 88
      %v897 = vpop.permute.xlu0 %896
      %v898 = vsel %vm583, %v879, 0
      %v900 = vsel %vm583, %v881, 0
      %v902 = vsel %vm583, %v883, 0
      %v904 = vsel %vm583, %v885, 0
      %v906 = vsel %vm583, %v887, 0
      %v908 = vsel %vm583, %v889, 0
      %v910 = vsel %vm583, %v891, 0
      %v912 = vsel %vm583, %v893, 0
      %v914 = vsel %vm583, %v895, 0
      %v916 = vsel %vm583, %v897, 0
      %918 = vmatprep.subr.mxu0 0.0
      %919 = vmatpush1.xpose.msra.mxu0 %v908
      %920 = vmatprep.subr.mxu0 0.0
      %921 = vmatpush1.xpose.msra.mxu0 %v910
      %922 = vmatprep.subr.mxu0 0.0
      %923 = vmatpush1.xpose.msra.mxu0 %v912
      %924 = vmatprep.subr.mxu0 0.0
      %925 = vmatpush1.xpose.msra.mxu0 %v914
      %926 = vmatprep.subr.mxu0 0.0
      %927 = vmatpush1.xpose.msra.mxu0 %v916
      %928 = vmatprep.subr.mxu0 0.0
      %929 = vmatpush1.xpose.msra.mxu0 0.0
      %930 = vmatprep.subr.mxu0 0.0
      %931 = vmatpush1.xpose.msra.mxu0 0.0
      %932 = vmatprep.subr.mxu0 0.0
      %933 = vmatpush1.xpose.msra.mxu0 0.0
      %934 = vmatprep.subr.mxu0 0.0
      %935 = vmatpush1.xpose.msra.mxu0 0.0
      %936 = vmatprep.subr.mxu0 0.0
      %937 = vmatpush1.xpose.msra.mxu0 0.0
      %938 = vmatprep.subr.mxu0 0.0
      %939 = vmatpush1.xpose.msra.mxu0 0.0
      %940 = vmatprep.subr.mxu0 0.0
      %941 = vmatpush1.xpose.msra.mxu0 0.0
      %942 = vmatprep.subr.mxu0 0.0
      %943 = vmatpush1.xpose.msra.mxu0 0.0
      %944 = vmatprep.subr.mxu0 0.0
      %945 = vmatpush1.xpose.msra.mxu0 0.0
      %946 = vmatprep.subr.mxu0 0.0
      %947 = vmatpush1.xpose.msra.mxu0 0.0
      %948 = vmatprep.subr.mxu0 0.0
      %949 = vmatpush1.xpose.msra.mxu0 0.0
      %950 = vmatprep.subr.mxu0 0.0
      %951 = vmatpush1.xpose.msra.mxu0 0.0
      %952 = vmatprep.subr.mxu0 0.0
      %953 = vmatpush1.xpose.msra.mxu0 0.0
      %954 = vmatprep.subr.mxu0 0.0
      %955 = vmatpush1.xpose.msra.mxu0 0.0
      %956 = vmatprep.subr.mxu0 0.0
      %957 = vmatpush1.xpose.msra.mxu0 0.0
      %958 = vmatprep.subr.mxu0 0.0
      %959 = vmatpush1.xpose.msra.mxu0 0.0
      %960 = vmatprep.subr.mxu0 0.0
      %961 = vmatpush1.xpose.msra.mxu0 0.0
      %962 = vmatprep.subr.mxu0 0.0
      %963 = vmatpush1.xpose.msra.mxu0 0.0
      %964 = vmatprep.subr.mxu0 0.0
      %965 = vmatpush1.xpose.msra.mxu0 0.0
      %966 = vmatprep.subr.mxu0 0.0
      %967 = vmatpush1.xpose.msra.mxu0 0.0
      %968 = vmatprep.subr.mxu0 0.0
      %969 = vmatpush1.xpose.msra.mxu0 0.0
      %970 = vmatprep.subr.mxu0 0.0
      %971 = vmatpush1.xpose.msra.mxu0 0.0
      %972 = vmatprep.subr.mxu0 0.0
      %973 = vmatpush1.xpose.msra.mxu0 0.0
      %974 = vmatprep.subr.mxu0 0.0
      %975 = vmatpush1.xpose.msra.mxu0 0.0
      %976 = vmatprep.subr.mxu0 0.0
      %977 = vmatpush1.xpose.msra.mxu0 0.0
      %978 = vmatprep.subr.mxu0 0.0
      %979 = vmatpush1.xpose.msra.mxu0 0.0
      %980 = vmatprep.subr.mxu0 0.0
      %981 = vmatpush1.xpose.msra.mxu0 0.0
      %982 = vmatprep.mubr.f32.mxu0 0.0
      %983 = vmatmul.mubr.f32.gmra.mrb[0].mxu0 %v898
      %v984 = vpop.f32.mrb[0].mxu0
      %v985 = vadd.f32 0.0, %v984
      %v986 = vpop.f32.mrb[0].mxu0
      %987 = vmatprep.mubr.f32.mxu0 0.0
      %988 = vmatmul.mubr.f32.gmra.mrb[0].mxu0 %v900
      %v989 = vpop.f32.mrb[0].mxu0
      %v990 = vadd.f32 0.0, %v989
      %v991 = vpop.f32.mrb[0].mxu0
      %992 = vmatprep.mubr.f32.mxu0 0.0
      %993 = vmatmul.mubr.f32.gmra.mrb[0].mxu0 %v902
      %v994 = vpop.f32.mrb[0].mxu0
      %v995 = vadd.f32 0.0, %v994
      %v996 = vpop.f32.mrb[0].mxu0
      %997 = vmatprep.mubr.f32.mxu0 0.0
      %998 = vmatmul.mubr.f32.gmra.mrb[0].mxu0 %v904
      %v999 = vpop.f32.mrb[0].mxu0
      %v1000 = vadd.f32 0.0, %v999
      %v1001 = vpop.f32.mrb[0].mxu0
      %1002 = vmatprep.mubr.f32.mxu0 0.0
      %1003 = vmatmul.mubr.f32.gmra.mrb[0].mxu0 %v906
      %v1004 = vpop.f32.mrb[0].mxu0
      %v1005 = vadd.f32 0.0, %v1004
      %v1006 = vpop.f32.mrb[0].mxu0
      %1007 = vdwg.mxu0
      %v1008 = vsel %vm699, %v985, -inf
      %1009 = vmax.xlane.f32.xlu0 %v1008
      %v1010 = vpop.xlane.xlu0 %1009
      %v1011 = vsel %vm699, %v990, -inf
      %1012 = vmax.xlane.f32.xlu0 %v1011
      %v1013 = vpop.xlane.xlu0 %1012
      %v1014 = vsel %vm699, %v995, -inf
      %1015 = vmax.xlane.f32.xlu0 %v1014
      %v1016 = vpop.xlane.xlu0 %1015
      %v1017 = vsel %vm699, %v1000, -inf
      %1018 = vmax.xlane.f32.xlu0 %v1017
      %v1019 = vpop.xlane.xlu0 %1018
      %v1020 = vsel %vm712, %v1005, -inf
      %1021 = vmax.xlane.f32.xlu0 %v1020
      %v1022 = vpop.xlane.xlu0 %1021
      %v1023 = vsub.f32 %v985, %v1010
      %v1024 = vsub.f32 %v990, %v1013
      %v1025 = vsub.f32 %v995, %v1016
      %v1026 = vsub.f32 %v1000, %v1019
      %v1027 = vsub.f32 %v1005, %v1022
      %v1028 = vmul.f32 %v1023, 1.442695
      %v1029 = vpow.pop %v1028
      %v1030 = vmul.f32 %v1024, 1.442695
      %v1031 = vpow.pop %v1030
      %v1032 = vmul.f32 %v1025, 1.442695
      %v1033 = vpow.pop %v1032
      %v1034 = vmul.f32 %v1026, 1.442695
      %v1035 = vpow.pop %v1034
      %v1036 = vmul.f32 %v1027, 1.442695
      %v1037 = vpow.pop %v1036
      %v1038 = vsel %vm699, %v1029, 0.0
      %1039 = vadd.xlane.f32.xlu0 %v1038
      %v1040 = vpop.xlane.xlu0 %1039
      %v1041 = vsel %vm699, %v1031, 0.0
      %1042 = vadd.xlane.f32.xlu0 %v1041
      %v1043 = vpop.xlane.xlu0 %1042
      %v1044 = vsel %vm699, %v1033, 0.0
      %1045 = vadd.xlane.f32.xlu0 %v1044
      %v1046 = vpop.xlane.xlu0 %1045
      %v1047 = vsel %vm699, %v1035, 0.0
      %1048 = vadd.xlane.f32.xlu0 %v1047
      %v1049 = vpop.xlane.xlu0 %1048
      %v1050 = vsel %vm712, %v1037, 0.0
      %1051 = vadd.xlane.f32.xlu0 %v1050
      %v1052 = vpop.xlane.xlu0 %1051
      %v1053 = vrcp.pop %v1040
      %v1054 = vrcp.pop %v1043
      %v1055 = vrcp.pop %v1046
      %v1056 = vrcp.pop %v1049
      %v1057 = vrcp.pop %v1052
      %v1058 = vmul.f32 %v1029, %v1053
      %v1059 = vmul.f32 %v1031, %v1054
      %v1060 = vmul.f32 %v1033, %v1055
      %v1061 = vmul.f32 %v1035, %v1056
      %v1062 = vmul.f32 %v1037, %v1057
      %1063 = vrot.lane.b32.xlu0 %v540, 56
      %v1064 = vpop.permute.xlu0 %1063
      %1065 = vrot.lane.b32.xlu0 %v545, 56
      %v1066 = vpop.permute.xlu0 %1065
      %1067 = vrot.lane.b32.xlu0 %v550, 56
      %v1068 = vpop.permute.xlu0 %1067
      %1069 = vrot.lane.b32.xlu0 %v555, 56
      %v1070 = vpop.permute.xlu0 %1069
      %1071 = vrot.lane.b32.xlu0 %v560, 56
      %v1072 = vpop.permute.xlu0 %1071
      %v1078 = vsel %vm699, %v1058, 0
      %v1081 = vsel %vm699, %v1059, 0
      %v1084 = vsel %vm699, %v1060, 0
      %v1087 = vsel %vm699, %v1061, 0
      %v1090 = vsel %vm699, %v1062, 0
      %v1092 = vsel %vm785, %v1072, 0
      %1094 = vmatprep.subr.mxu0 0.0
      %1095 = vmatpush1.msra.mxu0 %v1064
      %1096 = vmatprep.subr.mxu0 0.0
      %1097 = vmatpush1.msra.mxu0 %v1066
      %1098 = vmatprep.subr.mxu0 0.0
      %1099 = vmatpush1.msra.mxu0 %v1068
      %1100 = vmatprep.subr.mxu0 0.0
      %1101 = vmatpush1.msra.mxu0 %v1070
      %1102 = vmatprep.subr.mxu0 0.0
      %1103 = vmatpush1.msra.mxu0 %v1092
      %1104 = vmatprep.subr.mxu0 0.0
      %1105 = vmatpush1.msra.mxu0 0.0
      %1106 = vmatprep.subr.mxu0 0.0
      %1107 = vmatpush1.msra.mxu0 0.0
      %1108 = vmatprep.subr.mxu0 0.0
      %1109 = vmatpush1.msra.mxu0 0.0
      %1110 = vmatprep.subr.mxu0 0.0
      %1111 = vmatpush1.msra.mxu0 0.0
      %1112 = vmatprep.subr.mxu0 0.0
      %1113 = vmatpush1.msra.mxu0 0.0
      %1114 = vmatprep.subr.mxu0 0.0
      %1115 = vmatpush1.msra.mxu0 0.0
      %1116 = vmatprep.subr.mxu0 0.0
      %1117 = vmatpush1.msra.mxu0 0.0
      %1118 = vmatprep.subr.mxu0 0.0
      %1119 = vmatpush1.msra.mxu0 0.0
      %1120 = vmatprep.subr.mxu0 0.0
      %1121 = vmatpush1.msra.mxu0 0.0
      %1122 = vmatprep.subr.mxu0 0.0
      %1123 = vmatpush1.msra.mxu0 0.0
      %1124 = vmatprep.subr.mxu0 0.0
      %1125 = vmatpush1.msra.mxu0 0.0
      %1126 = vmatprep.subr.mxu0 0.0
      %1127 = vmatpush1.msra.mxu0 0.0
      %1128 = vmatprep.subr.mxu0 0.0
      %1129 = vmatpush1.msra.mxu0 0.0
      %1130 = vmatprep.subr.mxu0 0.0
      %1131 = vmatpush1.msra.mxu0 0.0
      %1132 = vmatprep.subr.mxu0 0.0
      %1133 = vmatpush1.msra.mxu0 0.0
      %1134 = vmatprep.subr.mxu0 0.0
      %1135 = vmatpush1.msra.mxu0 0.0
      %1136 = vmatprep.subr.mxu0 0.0
      %1137 = vmatpush1.msra.mxu0 0.0
      %1138 = vmatprep.subr.mxu0 0.0
      %1139 = vmatpush1.msra.mxu0 0.0
      %1140 = vmatprep.subr.mxu0 0.0
      %1141 = vmatpush1.msra.mxu0 0.0
      %1142 = vmatprep.subr.mxu0 0.0
      %1143 = vmatpush1.msra.mxu0 0.0
      %1144 = vmatprep.subr.mxu0 0.0
      %1145 = vmatpush1.msra.mxu0 0.0
      %1146 = vmatprep.subr.mxu0 0.0
      %1147 = vmatpush1.msra.mxu0 0.0
      %1148 = vmatprep.subr.mxu0 0.0
      %1149 = vmatpush1.msra.mxu0 0.0
      %1150 = vmatprep.subr.mxu0 0.0
      %1151 = vmatpush1.msra.mxu0 0.0
      %1152 = vmatprep.subr.mxu0 0.0
      %1153 = vmatpush1.msra.mxu0 0.0
      %1154 = vmatprep.subr.mxu0 0.0
      %1155 = vmatpush1.msra.mxu0 0.0
      %1156 = vmatprep.subr.mxu0 0.0
      %1157 = vmatpush1.msra.mxu0 0.0
      %1158 = vmatprep.mubr.f32.mxu0 0.0
      %1159 = vmatmul.mubr.f32.gmra.mrb[0].mxu0 %v1078
      %v1160 = vpop.f32.mrb[0].mxu0
      %v1161 = vadd.f32 0.0, %v1160
      %v1162 = vpop.f32.mrb[0].mxu0
      %1163 = vmatprep.mubr.f32.mxu0 0.0
      %1164 = vmatmul.mubr.f32.gmra.mrb[0].mxu0 %v1081
      %v1165 = vpop.f32.mrb[0].mxu0
      %v1166 = vadd.f32 0.0, %v1165
      %v1167 = vpop.f32.mrb[0].mxu0
      %1168 = vmatprep.mubr.f32.mxu0 0.0
      %1169 = vmatmul.mubr.f32.gmra.mrb[0].mxu0 %v1084
      %v1170 = vpop.f32.mrb[0].mxu0
      %v1171 = vadd.f32 0.0, %v1170
      %v1172 = vpop.f32.mrb[0].mxu0
      %1173 = vmatprep.mubr.f32.mxu0 0.0
      %1174 = vmatmul.mubr.f32.gmra.mrb[0].mxu0 %v1087
      %v1175 = vpop.f32.mrb[0].mxu0
      %v1176 = vadd.f32 0.0, %v1175
      %v1177 = vpop.f32.mrb[0].mxu0
      %1178 = vmatprep.mubr.f32.mxu0 0.0
      %1179 = vmatmul.mubr.f32.gmra.mrb[0].mxu0 %v1090
      %v1180 = vpop.f32.mrb[0].mxu0
      %v1181 = vadd.f32 0.0, %v1180
      %v1182 = vpop.f32.mrb[0].mxu0
      %1183 = vdwg.mxu0
      %1184 = vrot.lane.b32.xlu0 %v563, 112
      %v1185 = vpop.permute.xlu0 %1184
      %1186 = vrot.lane.b32.xlu0 %v564, 112
      %v1187 = vpop.permute.xlu0 %1186
      %1188 = vrot.lane.b32.xlu0 %v565, 112
      %v1189 = vpop.permute.xlu0 %1188
      %1190 = vrot.lane.b32.xlu0 %v566, 112
      %v1191 = vpop.permute.xlu0 %1190
      %1192 = vrot.lane.b32.xlu0 %v567, 112
      %v1193 = vpop.permute.xlu0 %1192
      %1194 = vrot.lane.b32.xlu0 %v540, 80
      %v1195 = vpop.permute.xlu0 %1194
      %1196 = vrot.lane.b32.xlu0 %v545, 80
      %v1197 = vpop.permute.xlu0 %1196
      %1198 = vrot.lane.b32.xlu0 %v550, 80
      %v1199 = vpop.permute.xlu0 %1198
      %1200 = vrot.lane.b32.xlu0 %v555, 80
      %v1201 = vpop.permute.xlu0 %1200
      %1202 = vrot.lane.b32.xlu0 %v560, 80
      %v1203 = vpop.permute.xlu0 %1202
      %v1204 = vsel %vm583, %v1185, 0
      %v1206 = vsel %vm583, %v1187, 0
      %v1208 = vsel %vm583, %v1189, 0
      %v1210 = vsel %vm583, %v1191, 0
      %v1212 = vsel %vm583, %v1193, 0
      %v1214 = vsel %vm583, %v1195, 0
      %v1216 = vsel %vm583, %v1197, 0
      %v1218 = vsel %vm583, %v1199, 0
      %v1220 = vsel %vm583, %v1201, 0
      %v1222 = vsel %vm583, %v1203, 0
      %1224 = vmatprep.subr.mxu0 0.0
      %1225 = vmatpush1.xpose.msra.mxu0 %v1214
      %1226 = vmatprep.subr.mxu0 0.0
      %1227 = vmatpush1.xpose.msra.mxu0 %v1216
      %1228 = vmatprep.subr.mxu0 0.0
      %1229 = vmatpush1.xpose.msra.mxu0 %v1218
      %1230 = vmatprep.subr.mxu0 0.0
      %1231 = vmatpush1.xpose.msra.mxu0 %v1220
      %1232 = vmatprep.subr.mxu0 0.0
      %1233 = vmatpush1.xpose.msra.mxu0 %v1222
      %1234 = vmatprep.subr.mxu0 0.0
      %1235 = vmatpush1.xpose.msra.mxu0 0.0
      %1236 = vmatprep.subr.mxu0 0.0
      %1237 = vmatpush1.xpose.msra.mxu0 0.0
      %1238 = vmatprep.subr.mxu0 0.0
      %1239 = vmatpush1.xpose.msra.mxu0 0.0
      %1240 = vmatprep.subr.mxu0 0.0
      %1241 = vmatpush1.xpose.msra.mxu0 0.0
      %1242 = vmatprep.subr.mxu0 0.0
      %1243 = vmatpush1.xpose.msra.mxu0 0.0
      %1244 = vmatprep.subr.mxu0 0.0
      %1245 = vmatpush1.xpose.msra.mxu0 0.0
      %1246 = vmatprep.subr.mxu0 0.0
      %1247 = vmatpush1.xpose.msra.mxu0 0.0
      %1248 = vmatprep.subr.mxu0 0.0
      %1249 = vmatpush1.xpose.msra.mxu0 0.0
      %1250 = vmatprep.subr.mxu0 0.0
      %1251 = vmatpush1.xpose.msra.mxu0 0.0
      %1252 = vmatprep.subr.mxu0 0.0
      %1253 = vmatpush1.xpose.msra.mxu0 0.0
      %1254 = vmatprep.subr.mxu0 0.0
      %1255 = vmatpush1.xpose.msra.mxu0 0.0
      %1256 = vmatprep.subr.mxu0 0.0
      %1257 = vmatpush1.xpose.msra.mxu0 0.0
      %1258 = vmatprep.subr.mxu0 0.0
      %1259 = vmatpush1.xpose.msra.mxu0 0.0
      %1260 = vmatprep.subr.mxu0 0.0
      %1261 = vmatpush1.xpose.msra.mxu0 0.0
      %1262 = vmatprep.subr.mxu0 0.0
      %1263 = vmatpush1.xpose.msra.mxu0 0.0
      %1264 = vmatprep.subr.mxu0 0.0
      %1265 = vmatpush1.xpose.msra.mxu0 0.0
      %1266 = vmatprep.subr.mxu0 0.0
      %1267 = vmatpush1.xpose.msra.mxu0 0.0
      %1268 = vmatprep.subr.mxu0 0.0
      %1269 = vmatpush1.xpose.msra.mxu0 0.0
      %1270 = vmatprep.subr.mxu0 0.0
      %1271 = vmatpush1.xpose.msra.mxu0 0.0
      %1272 = vmatprep.subr.mxu0 0.0
      %1273 = vmatpush1.xpose.msra.mxu0 0.0
      %1274 = vmatprep.subr.mxu0 0.0
      %1275 = vmatpush1.xpose.msra.mxu0 0.0
      %1276 = vmatprep.subr.mxu0 0.0
      %1277 = vmatpush1.xpose.msra.mxu0 0.0
      %1278 = vmatprep.subr.mxu0 0.0
      %1279 = vmatpush1.xpose.msra.mxu0 0.0
      %1280 = vmatprep.subr.mxu0 0.0
      %1281 = vmatpush1.xpose.msra.mxu0 0.0
      %1282 = vmatprep.subr.mxu0 0.0
      %1283 = vmatpush1.xpose.msra.mxu0 0.0
      %1284 = vmatprep.subr.mxu0 0.0
      %1285 = vmatpush1.xpose.msra.mxu0 0.0
      %1286 = vmatprep.subr.mxu0 0.0
      %1287 = vmatpush1.xpose.msra.mxu0 0.0
      %1288 = vmatprep.mubr.f32.mxu0 0.0
      %1289 = vmatmul.mubr.f32.gmra.mrb[0].mxu0 %v1204
      %v1290 = vpop.f32.mrb[0].mxu0
      %v1291 = vadd.f32 0.0, %v1290
      %v1292 = vpop.f32.mrb[0].mxu0
      %1293 = vmatprep.mubr.f32.mxu0 0.0
      %1294 = vmatmul.mubr.f32.gmra.mrb[0].mxu0 %v1206
      %v1295 = vpop.f32.mrb[0].mxu0
      %v1296 = vadd.f32 0.0, %v1295
      %v1297 = vpop.f32.mrb[0].mxu0
      %1298 = vmatprep.mubr.f32.mxu0 0.0
      %1299 = vmatmul.mubr.f32.gmra.mrb[0].mxu0 %v1208
      %v1300 = vpop.f32.mrb[0].mxu0
      %v1301 = vadd.f32 0.0, %v1300
      %v1302 = vpop.f32.mrb[0].mxu0
      %1303 = vmatprep.mubr.f32.mxu0 0.0
      %1304 = vmatmul.mubr.f32.gmra.mrb[0].mxu0 %v1210
      %v1305 = vpop.f32.mrb[0].mxu0
      %v1306 = vadd.f32 0.0, %v1305
      %v1307 = vpop.f32.mrb[0].mxu0
      %1308 = vmatprep.mubr.f32.mxu0 0.0
      %1309 = vmatmul.mubr.f32.gmra.mrb[0].mxu0 %v1212
      %v1310 = vpop.f32.mrb[0].mxu0
      %v1311 = vadd.f32 0.0, %v1310
      %v1312 = vpop.f32.mrb[0].mxu0
      %1313 = vdwg.mxu0
      %v1314 = vsel %vm699, %v1291, -inf
      %1315 = vmax.xlane.f32.xlu0 %v1314
      %v1316 = vpop.xlane.xlu0 %1315
      %v1317 = vsel %vm699, %v1296, -inf
      %1318 = vmax.xlane.f32.xlu0 %v1317
      %v1319 = vpop.xlane.xlu0 %1318
      %v1320 = vsel %vm699, %v1301, -inf
      %1321 = vmax.xlane.f32.xlu0 %v1320
      %v1322 = vpop.xlane.xlu0 %1321
      %v1323 = vsel %vm699, %v1306, -inf
      %1324 = vmax.xlane.f32.xlu0 %v1323
      %v1325 = vpop.xlane.xlu0 %1324
      %v1326 = vsel %vm712, %v1311, -inf
      %1327 = vmax.xlane.f32.xlu0 %v1326
      %v1328 = vpop.xlane.xlu0 %1327
      %v1329 = vsub.f32 %v1291, %v1316
      %v1330 = vsub.f32 %v1296, %v1319
      %v1331 = vsub.f32 %v1301, %v1322
      %v1332 = vsub.f32 %v1306, %v1325
      %v1333 = vsub.f32 %v1311, %v1328
      %v1334 = vmul.f32 %v1329, 1.442695
      %v1335 = vpow.pop %v1334
      %v1336 = vmul.f32 %v1330, 1.442695
      %v1337 = vpow.pop %v1336
      %v1338 = vmul.f32 %v1331, 1.442695
      %v1339 = vpow.pop %v1338
      %v1340 = vmul.f32 %v1332, 1.442695
      %v1341 = vpow.pop %v1340
      %v1342 = vmul.f32 %v1333, 1.442695
      %v1343 = vpow.pop %v1342
      %v1344 = vsel %vm699, %v1335, 0.0
      %1345 = vadd.xlane.f32.xlu0 %v1344
      %v1346 = vpop.xlane.xlu0 %1345
      %v1347 = vsel %vm699, %v1337, 0.0
      %1348 = vadd.xlane.f32.xlu0 %v1347
      %v1349 = vpop.xlane.xlu0 %1348
      %v1350 = vsel %vm699, %v1339, 0.0
      %1351 = vadd.xlane.f32.xlu0 %v1350
      %v1352 = vpop.xlane.xlu0 %1351
      %v1353 = vsel %vm699, %v1341, 0.0
      %1354 = vadd.xlane.f32.xlu0 %v1353
      %v1355 = vpop.xlane.xlu0 %1354
      %v1356 = vsel %vm712, %v1343, 0.0
      %1357 = vadd.xlane.f32.xlu0 %v1356
      %v1358 = vpop.xlane.xlu0 %1357
      %v1359 = vrcp.pop %v1346
      %v1360 = vrcp.pop %v1349
      %v1361 = vrcp.pop %v1352
      %v1362 = vrcp.pop %v1355
      %v1363 = vrcp.pop %v1358
      %v1364 = vmul.f32 %v1335, %v1359
      %v1365 = vmul.f32 %v1337, %v1360
      %v1366 = vmul.f32 %v1339, %v1361
      %v1367 = vmul.f32 %v1341, %v1362
      %v1368 = vmul.f32 %v1343, %v1363
      %1369 = vrot.lane.b32.xlu0 %v540, 48
      %v1370 = vpop.permute.xlu0 %1369
      %1371 = vrot.lane.b32.xlu0 %v545, 48
      %v1372 = vpop.permute.xlu0 %1371
      %1373 = vrot.lane.b32.xlu0 %v550, 48
      %v1374 = vpop.permute.xlu0 %1373
      %1375 = vrot.lane.b32.xlu0 %v555, 48
      %v1376 = vpop.permute.xlu0 %1375
      %1377 = vrot.lane.b32.xlu0 %v560, 48
      %v1378 = vpop.permute.xlu0 %1377
      %v1384 = vsel %vm699, %v1364, 0
      %v1387 = vsel %vm699, %v1365, 0
      %v1390 = vsel %vm699, %v1366, 0
      %v1393 = vsel %vm699, %v1367, 0
      %v1396 = vsel %vm699, %v1368, 0
      %v1398 = vsel %vm785, %v1378, 0
      %1400 = vmatprep.subr.mxu0 0.0
      %1401 = vmatpush1.msra.mxu0 %v1370
      %1402 = vmatprep.subr.mxu0 0.0
      %1403 = vmatpush1.msra.mxu0 %v1372
      %1404 = vmatprep.subr.mxu0 0.0
      %1405 = vmatpush1.msra.mxu0 %v1374
      %1406 = vmatprep.subr.mxu0 0.0
      %1407 = vmatpush1.msra.mxu0 %v1376
      %1408 = vmatprep.subr.mxu0 0.0
      %1409 = vmatpush1.msra.mxu0 %v1398
      %1410 = vmatprep.subr.mxu0 0.0
      %1411 = vmatpush1.msra.mxu0 0.0
      %1412 = vmatprep.subr.mxu0 0.0
      %1413 = vmatpush1.msra.mxu0 0.0
      %1414 = vmatprep.subr.mxu0 0.0
      %1415 = vmatpush1.msra.mxu0 0.0
      %1416 = vmatprep.subr.mxu0 0.0
      %1417 = vmatpush1.msra.mxu0 0.0
      %1418 = vmatprep.subr.mxu0 0.0
      %1419 = vmatpush1.msra.mxu0 0.0
      %1420 = vmatprep.subr.mxu0 0.0
      %1421 = vmatpush1.msra.mxu0 0.0
      %1422 = vmatprep.subr.mxu0 0.0
      %1423 = vmatpush1.msra.mxu0 0.0
      %1424 = vmatprep.subr.mxu0 0.0
      %1425 = vmatpush1.msra.mxu0 0.0
      %1426 = vmatprep.subr.mxu0 0.0
      %1427 = vmatpush1.msra.mxu0 0.0
      %1428 = vmatprep.subr.mxu0 0.0
      %1429 = vmatpush1.msra.mxu0 0.0
      %1430 = vmatprep.subr.mxu0 0.0
      %1431 = vmatpush1.msra.mxu0 0.0
      %1432 = vmatprep.subr.mxu0 0.0
      %1433 = vmatpush1.msra.mxu0 0.0
      %1434 = vmatprep.subr.mxu0 0.0
      %1435 = vmatpush1.msra.mxu0 0.0
      %1436 = vmatprep.subr.mxu0 0.0
      %1437 = vmatpush1.msra.mxu0 0.0
      %1438 = vmatprep.subr.mxu0 0.0
      %1439 = vmatpush1.msra.mxu0 0.0
      %1440 = vmatprep.subr.mxu0 0.0
      %1441 = vmatpush1.msra.mxu0 0.0
      %1442 = vmatprep.subr.mxu0 0.0
      %1443 = vmatpush1.msra.mxu0 0.0
      %1444 = vmatprep.subr.mxu0 0.0
      %1445 = vmatpush1.msra.mxu0 0.0
      %1446 = vmatprep.subr.mxu0 0.0
      %1447 = vmatpush1.msra.mxu0 0.0
      %1448 = vmatprep.subr.mxu0 0.0
      %1449 = vmatpush1.msra.mxu0 0.0
      %1450 = vmatprep.subr.mxu0 0.0
      %1451 = vmatpush1.msra.mxu0 0.0
      %1452 = vmatprep.subr.mxu0 0.0
      %1453 = vmatpush1.msra.mxu0 0.0
      %1454 = vmatprep.subr.mxu0 0.0
      %1455 = vmatpush1.msra.mxu0 0.0
      %1456 = vmatprep.subr.mxu0 0.0
      %1457 = vmatpush1.msra.mxu0 0.0
      %1458 = vmatprep.subr.mxu0 0.0
      %1459 = vmatpush1.msra.mxu0 0.0
      %1460 = vmatprep.subr.mxu0 0.0
      %1461 = vmatpush1.msra.mxu0 0.0
      %1462 = vmatprep.subr.mxu0 0.0
      %1463 = vmatpush1.msra.mxu0 0.0
      %1464 = vmatprep.mubr.f32.mxu0 0.0
      %1465 = vmatmul.mubr.f32.gmra.mrb[0].mxu0 %v1384
      %v1466 = vpop.f32.mrb[0].mxu0
      %v1467 = vadd.f32 0.0, %v1466
      %v1468 = vpop.f32.mrb[0].mxu0
      %1469 = vmatprep.mubr.f32.mxu0 0.0
      %1470 = vmatmul.mubr.f32.gmra.mrb[0].mxu0 %v1387
      %v1471 = vpop.f32.mrb[0].mxu0
      %v1472 = vadd.f32 0.0, %v1471
      %v1473 = vpop.f32.mrb[0].mxu0
      %1474 = vmatprep.mubr.f32.mxu0 0.0
      %1475 = vmatmul.mubr.f32.gmra.mrb[0].mxu0 %v1390
      %v1476 = vpop.f32.mrb[0].mxu0
      %v1477 = vadd.f32 0.0, %v1476
      %v1478 = vpop.f32.mrb[0].mxu0
      %1479 = vmatprep.mubr.f32.mxu0 0.0
      %1480 = vmatmul.mubr.f32.gmra.mrb[0].mxu0 %v1393
      %v1481 = vpop.f32.mrb[0].mxu0
      %v1482 = vadd.f32 0.0, %v1481
      %v1483 = vpop.f32.mrb[0].mxu0
      %1484 = vmatprep.mubr.f32.mxu0 0.0
      %1485 = vmatmul.mubr.f32.gmra.mrb[0].mxu0 %v1396
      %v1486 = vpop.f32.mrb[0].mxu0
      %v1487 = vadd.f32 0.0, %v1486
      %v1488 = vpop.f32.mrb[0].mxu0
      %1489 = vdwg.mxu0
      %1490 = vrot.lane.b32.xlu0 %v563, 104
      %v1491 = vpop.permute.xlu0 %1490
      %1492 = vrot.lane.b32.xlu0 %v564, 104
      %v1493 = vpop.permute.xlu0 %1492
      %1494 = vrot.lane.b32.xlu0 %v565, 104
      %v1495 = vpop.permute.xlu0 %1494
      %1496 = vrot.lane.b32.xlu0 %v566, 104
      %v1497 = vpop.permute.xlu0 %1496
      %1498 = vrot.lane.b32.xlu0 %v567, 104
      %v1499 = vpop.permute.xlu0 %1498
      %1500 = vrot.lane.b32.xlu0 %v540, 72
      %v1501 = vpop.permute.xlu0 %1500
      %1502 = vrot.lane.b32.xlu0 %v545, 72
      %v1503 = vpop.permute.xlu0 %1502
      %1504 = vrot.lane.b32.xlu0 %v550, 72
      %v1505 = vpop.permute.xlu0 %1504
      %1506 = vrot.lane.b32.xlu0 %v555, 72
      %v1507 = vpop.permute.xlu0 %1506
      %1508 = vrot.lane.b32.xlu0 %v560, 72
      %v1509 = vpop.permute.xlu0 %1508
      %v1510 = vsel %vm583, %v1491, 0
      %v1512 = vsel %vm583, %v1493, 0
      %v1514 = vsel %vm583, %v1495, 0
      %v1516 = vsel %vm583, %v1497, 0
      %v1518 = vsel %vm583, %v1499, 0
      %v1520 = vsel %vm583, %v1501, 0
      %v1522 = vsel %vm583, %v1503, 0
      %v1524 = vsel %vm583, %v1505, 0
      %v1526 = vsel %vm583, %v1507, 0
      %v1528 = vsel %vm583, %v1509, 0
      %1530 = vmatprep.subr.mxu0 0.0
      %1531 = vmatpush1.xpose.msra.mxu0 %v1520
      %1532 = vmatprep.subr.mxu0 0.0
      %1533 = vmatpush1.xpose.msra.mxu0 %v1522
      %1534 = vmatprep.subr.mxu0 0.0
      %1535 = vmatpush1.xpose.msra.mxu0 %v1524
      %1536 = vmatprep.subr.mxu0 0.0
      %1537 = vmatpush1.xpose.msra.mxu0 %v1526
      %1538 = vmatprep.subr.mxu0 0.0
      %1539 = vmatpush1.xpose.msra.mxu0 %v1528
      %1540 = vmatprep.subr.mxu0 0.0
      %1541 = vmatpush1.xpose.msra.mxu0 0.0
      %1542 = vmatprep.subr.mxu0 0.0
      %1543 = vmatpush1.xpose.msra.mxu0 0.0
      %1544 = vmatprep.subr.mxu0 0.0
      %1545 = vmatpush1.xpose.msra.mxu0 0.0
      %1546 = vmatprep.subr.mxu0 0.0
      %1547 = vmatpush1.xpose.msra.mxu0 0.0
      %1548 = vmatprep.subr.mxu0 0.0
      %1549 = vmatpush1.xpose.msra.mxu0 0.0
      %1550 = vmatprep.subr.mxu0 0.0
      %1551 = vmatpush1.xpose.msra.mxu0 0.0
      %1552 = vmatprep.subr.mxu0 0.0
      %1553 = vmatpush1.xpose.msra.mxu0 0.0
      %1554 = vmatprep.subr.mxu0 0.0
      %1555 = vmatpush1.xpose.msra.mxu0 0.0
      %1556 = vmatprep.subr.mxu0 0.0
      %1557 = vmatpush1.xpose.msra.mxu0 0.0
      %1558 = vmatprep.subr.mxu0 0.0
      %1559 = vmatpush1.xpose.msra.mxu0 0.0
      %1560 = vmatprep.subr.mxu0 0.0
      %1561 = vmatpush1.xpose.msra.mxu0 0.0
      %1562 = vmatprep.subr.mxu0 0.0
      %1563 = vmatpush1.xpose.msra.mxu0 0.0
      %1564 = vmatprep.subr.mxu0 0.0
      %1565 = vmatpush1.xpose.msra.mxu0 0.0
      %1566 = vmatprep.subr.mxu0 0.0
      %1567 = vmatpush1.xpose.msra.mxu0 0.0
      %1568 = vmatprep.subr.mxu0 0.0
      %1569 = vmatpush1.xpose.msra.mxu0 0.0
      %1570 = vmatprep.subr.mxu0 0.0
      %1571 = vmatpush1.xpose.msra.mxu0 0.0
      %1572 = vmatprep.subr.mxu0 0.0
      %1573 = vmatpush1.xpose.msra.mxu0 0.0
      %1574 = vmatprep.subr.mxu0 0.0
      %1575 = vmatpush1.xpose.msra.mxu0 0.0
      %1576 = vmatprep.subr.mxu0 0.0
      %1577 = vmatpush1.xpose.msra.mxu0 0.0
      %1578 = vmatprep.subr.mxu0 0.0
      %1579 = vmatpush1.xpose.msra.mxu0 0.0
      %1580 = vmatprep.subr.mxu0 0.0
      %1581 = vmatpush1.xpose.msra.mxu0 0.0
      %1582 = vmatprep.subr.mxu0 0.0
      %1583 = vmatpush1.xpose.msra.mxu0 0.0
      %1584 = vmatprep.subr.mxu0 0.0
      %1585 = vmatpush1.xpose.msra.mxu0 0.0
      %1586 = vmatprep.subr.mxu0 0.0
      %1587 = vmatpush1.xpose.msra.mxu0 0.0
      %1588 = vmatprep.subr.mxu0 0.0
      %1589 = vmatpush1.xpose.msra.mxu0 0.0
      %1590 = vmatprep.subr.mxu0 0.0
      %1591 = vmatpush1.xpose.msra.mxu0 0.0
      %1592 = vmatprep.subr.mxu0 0.0
      %1593 = vmatpush1.xpose.msra.mxu0 0.0
      %1594 = vmatprep.mubr.f32.mxu0 0.0
      %1595 = vmatmul.mubr.f32.gmra.mrb[0].mxu0 %v1510
      %v1596 = vpop.f32.mrb[0].mxu0
      %v1597 = vadd.f32 0.0, %v1596
      %v1598 = vpop.f32.mrb[0].mxu0
      %1599 = vmatprep.mubr.f32.mxu0 0.0
      %1600 = vmatmul.mubr.f32.gmra.mrb[0].mxu0 %v1512
      %v1601 = vpop.f32.mrb[0].mxu0
      %v1602 = vadd.f32 0.0, %v1601
      %v1603 = vpop.f32.mrb[0].mxu0
      %1604 = vmatprep.mubr.f32.mxu0 0.0
      %1605 = vmatmul.mubr.f32.gmra.mrb[0].mxu0 %v1514
      %v1606 = vpop.f32.mrb[0].mxu0
      %v1607 = vadd.f32 0.0, %v1606
      %v1608 = vpop.f32.mrb[0].mxu0
      %1609 = vmatprep.mubr.f32.mxu0 0.0
      %1610 = vmatmul.mubr.f32.gmra.mrb[0].mxu0 %v1516
      %v1611 = vpop.f32.mrb[0].mxu0
      %v1612 = vadd.f32 0.0, %v1611
      %v1613 = vpop.f32.mrb[0].mxu0
      %1614 = vmatprep.mubr.f32.mxu0 0.0
      %1615 = vmatmul.mubr.f32.gmra.mrb[0].mxu0 %v1518
      %v1616 = vpop.f32.mrb[0].mxu0
      %v1617 = vadd.f32 0.0, %v1616
      %v1618 = vpop.f32.mrb[0].mxu0
      %1619 = vdwg.mxu0
      %v1620 = vsel %vm699, %v1597, -inf
      %1621 = vmax.xlane.f32.xlu0 %v1620
      %v1622 = vpop.xlane.xlu0 %1621
      %v1623 = vsel %vm699, %v1602, -inf
      %1624 = vmax.xlane.f32.xlu0 %v1623
      %v1625 = vpop.xlane.xlu0 %1624
      %v1626 = vsel %vm699, %v1607, -inf
      %1627 = vmax.xlane.f32.xlu0 %v1626
      %v1628 = vpop.xlane.xlu0 %1627
      %v1629 = vsel %vm699, %v1612, -inf
      %1630 = vmax.xlane.f32.xlu0 %v1629
      %v1631 = vpop.xlane.xlu0 %1630
      %v1632 = vsel %vm712, %v1617, -inf
      %1633 = vmax.xlane.f32.xlu0 %v1632
      %v1634 = vpop.xlane.xlu0 %1633
      %v1635 = vsub.f32 %v1597, %v1622
      %v1636 = vsub.f32 %v1602, %v1625
      %v1637 = vsub.f32 %v1607, %v1628
      %v1638 = vsub.f32 %v1612, %v1631
      %v1639 = vsub.f32 %v1617, %v1634
      %v1640 = vmul.f32 %v1635, 1.442695
      %v1641 = vpow.pop %v1640
      %v1642 = vmul.f32 %v1636, 1.442695
      %v1643 = vpow.pop %v1642
      %v1644 = vmul.f32 %v1637, 1.442695
      %v1645 = vpow.pop %v1644
      %v1646 = vmul.f32 %v1638, 1.442695
      %v1647 = vpow.pop %v1646
      %v1648 = vmul.f32 %v1639, 1.442695
      %v1649 = vpow.pop %v1648
      %v1650 = vsel %vm699, %v1641, 0.0
      %1651 = vadd.xlane.f32.xlu0 %v1650
      %v1652 = vpop.xlane.xlu0 %1651
      %v1653 = vsel %vm699, %v1643, 0.0
      %1654 = vadd.xlane.f32.xlu0 %v1653
      %v1655 = vpop.xlane.xlu0 %1654
      %v1656 = vsel %vm699, %v1645, 0.0
      %1657 = vadd.xlane.f32.xlu0 %v1656
      %v1658 = vpop.xlane.xlu0 %1657
      %v1659 = vsel %vm699, %v1647, 0.0
      %1660 = vadd.xlane.f32.xlu0 %v1659
      %v1661 = vpop.xlane.xlu0 %1660
      %v1662 = vsel %vm712, %v1649, 0.0
      %1663 = vadd.xlane.f32.xlu0 %v1662
      %v1664 = vpop.xlane.xlu0 %1663
      %v1665 = vrcp.pop %v1652
      %v1666 = vrcp.pop %v1655
      %v1667 = vrcp.pop %v1658
      %v1668 = vrcp.pop %v1661
      %v1669 = vrcp.pop %v1664
      %v1670 = vmul.f32 %v1641, %v1665
      %v1671 = vmul.f32 %v1643, %v1666
      %v1672 = vmul.f32 %v1645, %v1667
      %v1673 = vmul.f32 %v1647, %v1668
      %v1674 = vmul.f32 %v1649, %v1669
      %1675 = vrot.lane.b32.xlu0 %v540, 40
      %v1676 = vpop.permute.xlu0 %1675
      %1677 = vrot.lane.b32.xlu0 %v545, 40
      %v1678 = vpop.permute.xlu0 %1677
      %1679 = vrot.lane.b32.xlu0 %v550, 40
      %v1680 = vpop.permute.xlu0 %1679
      %1681 = vrot.lane.b32.xlu0 %v555, 40
      %v1682 = vpop.permute.xlu0 %1681
      %1683 = vrot.lane.b32.xlu0 %v560, 40
      %v1684 = vpop.permute.xlu0 %1683
      %v1690 = vsel %vm699, %v1670, 0
      %v1693 = vsel %vm699, %v1671, 0
      %v1696 = vsel %vm699, %v1672, 0
      %v1699 = vsel %vm699, %v1673, 0
      %v1702 = vsel %vm699, %v1674, 0
      %v1704 = vsel %vm785, %v1684, 0
      %1706 = vmatprep.subr.mxu0 0.0
      %1707 = vmatpush1.msra.mxu0 %v1676
      %1708 = vmatprep.subr.mxu0 0.0
      %1709 = vmatpush1.msra.mxu0 %v1678
      %1710 = vmatprep.subr.mxu0 0.0
      %1711 = vmatpush1.msra.mxu0 %v1680
      %1712 = vmatprep.subr.mxu0 0.0
      %1713 = vmatpush1.msra.mxu0 %v1682
      %1714 = vmatprep.subr.mxu0 0.0
      %1715 = vmatpush1.msra.mxu0 %v1704
      %1716 = vmatprep.subr.mxu0 0.0
      %1717 = vmatpush1.msra.mxu0 0.0
      %1718 = vmatprep.subr.mxu0 0.0
      %1719 = vmatpush1.msra.mxu0 0.0
      %1720 = vmatprep.subr.mxu0 0.0
      %1721 = vmatpush1.msra.mxu0 0.0
      %1722 = vmatprep.subr.mxu0 0.0
      %1723 = vmatpush1.msra.mxu0 0.0
      %1724 = vmatprep.subr.mxu0 0.0
      %1725 = vmatpush1.msra.mxu0 0.0
      %1726 = vmatprep.subr.mxu0 0.0
      %1727 = vmatpush1.msra.mxu0 0.0
      %1728 = vmatprep.subr.mxu0 0.0
      %1729 = vmatpush1.msra.mxu0 0.0
      %1730 = vmatprep.subr.mxu0 0.0
      %1731 = vmatpush1.msra.mxu0 0.0
      %1732 = vmatprep.subr.mxu0 0.0
      %1733 = vmatpush1.msra.mxu0 0.0
      %1734 = vmatprep.subr.mxu0 0.0
      %1735 = vmatpush1.msra.mxu0 0.0
      %1736 = vmatprep.subr.mxu0 0.0
      %1737 = vmatpush1.msra.mxu0 0.0
      %1738 = vmatprep.subr.mxu0 0.0
      %1739 = vmatpush1.msra.mxu0 0.0
      %1740 = vmatprep.subr.mxu0 0.0
      %1741 = vmatpush1.msra.mxu0 0.0
      %1742 = vmatprep.subr.mxu0 0.0
      %1743 = vmatpush1.msra.mxu0 0.0
      %1744 = vmatprep.subr.mxu0 0.0
      %1745 = vmatpush1.msra.mxu0 0.0
      %1746 = vmatprep.subr.mxu0 0.0
      %1747 = vmatpush1.msra.mxu0 0.0
      %1748 = vmatprep.subr.mxu0 0.0
      %1749 = vmatpush1.msra.mxu0 0.0
      %1750 = vmatprep.subr.mxu0 0.0
      %1751 = vmatpush1.msra.mxu0 0.0
      %1752 = vmatprep.subr.mxu0 0.0
      %1753 = vmatpush1.msra.mxu0 0.0
      %1754 = vmatprep.subr.mxu0 0.0
      %1755 = vmatpush1.msra.mxu0 0.0
      %1756 = vmatprep.subr.mxu0 0.0
      %1757 = vmatpush1.msra.mxu0 0.0
      %1758 = vmatprep.subr.mxu0 0.0
      %1759 = vmatpush1.msra.mxu0 0.0
      %1760 = vmatprep.subr.mxu0 0.0
      %1761 = vmatpush1.msra.mxu0 0.0
      %1762 = vmatprep.subr.mxu0 0.0
      %1763 = vmatpush1.msra.mxu0 0.0
      %1764 = vmatprep.subr.mxu0 0.0
      %1765 = vmatpush1.msra.mxu0 0.0
      %1766 = vmatprep.subr.mxu0 0.0
      %1767 = vmatpush1.msra.mxu0 0.0
      %1768 = vmatprep.subr.mxu0 0.0
      %1769 = vmatpush1.msra.mxu0 0.0
      %1770 = vmatprep.mubr.f32.mxu0 0.0
      %1771 = vmatmul.mubr.f32.gmra.mrb[0].mxu0 %v1690
      %v1772 = vpop.f32.mrb[0].mxu0
      %v1773 = vadd.f32 0.0, %v1772
      %v1774 = vpop.f32.mrb[0].mxu0
      %1775 = vmatprep.mubr.f32.mxu0 0.0
      %1776 = vmatmul.mubr.f32.gmra.mrb[0].mxu0 %v1693
      %v1777 = vpop.f32.mrb[0].mxu0
      %v1778 = vadd.f32 0.0, %v1777
      %v1779 = vpop.f32.mrb[0].mxu0
      %1780 = vmatprep.mubr.f32.mxu0 0.0
      %1781 = vmatmul.mubr.f32.gmra.mrb[0].mxu0 %v1696
      %v1782 = vpop.f32.mrb[0].mxu0
      %v1783 = vadd.f32 0.0, %v1782
      %v1784 = vpop.f32.mrb[0].mxu0
      %1785 = vmatprep.mubr.f32.mxu0 0.0
      %1786 = vmatmul.mubr.f32.gmra.mrb[0].mxu0 %v1699
      %v1787 = vpop.f32.mrb[0].mxu0
      %v1788 = vadd.f32 0.0, %v1787
      %v1789 = vpop.f32.mrb[0].mxu0
      %1790 = vmatprep.mubr.f32.mxu0 0.0
      %1791 = vmatmul.mubr.f32.gmra.mrb[0].mxu0 %v1702
      %v1792 = vpop.f32.mrb[0].mxu0
      %v1793 = vadd.f32 0.0, %v1792
      %v1794 = vpop.f32.mrb[0].mxu0
      %1795 = vdwg.mxu0
      %1801 = vrot.lane.b32.xlu0 %v1161, 8
      %v1802 = vpop.permute.xlu0 %1801
      %1803 = vrot.lane.b32.xlu0 %v1166, 8
      %v1804 = vpop.permute.xlu0 %1803
      %1805 = vrot.lane.b32.xlu0 %v1171, 8
      %v1806 = vpop.permute.xlu0 %1805
      %1807 = vrot.lane.b32.xlu0 %v1176, 8
      %v1808 = vpop.permute.xlu0 %1807
      %1809 = vrot.lane.b32.xlu0 %v1181, 8
      %v1810 = vpop.permute.xlu0 %1809
      %1821 = vrot.lane.b32.xlu0 %v1467, 16
      %v1822 = vpop.permute.xlu0 %1821
      %1823 = vrot.lane.b32.xlu0 %v1472, 16
      %v1824 = vpop.permute.xlu0 %1823
      %1825 = vrot.lane.b32.xlu0 %v1477, 16
      %v1826 = vpop.permute.xlu0 %1825
      %1827 = vrot.lane.b32.xlu0 %v1482, 16
      %v1828 = vpop.permute.xlu0 %1827
      %1829 = vrot.lane.b32.xlu0 %v1487, 16
      %v1830 = vpop.permute.xlu0 %1829
      %1841 = vrot.lane.b32.xlu0 %v1773, 24
      %v1842 = vpop.permute.xlu0 %1841
      %1843 = vrot.lane.b32.xlu0 %v1778, 24
      %v1844 = vpop.permute.xlu0 %1843
      %1845 = vrot.lane.b32.xlu0 %v1783, 24
      %v1846 = vpop.permute.xlu0 %1845
      %1847 = vrot.lane.b32.xlu0 %v1788, 24
      %v1848 = vpop.permute.xlu0 %1847
      %1849 = vrot.lane.b32.xlu0 %v1793, 24
      %v1850 = vpop.permute.xlu0 %1849
      %v1856 = vsel %vm583, %v855, %v1802
      %v1857 = vsel %vm583, %v860, %v1804
      %v1858 = vsel %vm583, %v865, %v1806
      %v1859 = vsel %vm583, %v870, %v1808
      %v1860 = vsel %vm583, %v875, %v1810
      %vm1861 = vcmask 130048
      %v1862 = vsel %vm1861, %v1856, %v1822
      %v1863 = vsel %vm1861, %v1857, %v1824
      %v1864 = vsel %vm1861, %v1858, %v1826
      %v1865 = vsel %vm1861, %v1859, %v1828
      %v1866 = vsel %vm1861, %v1860, %v1830
      %vm1867 = vcmask 195584
      %v1868 = vsel %vm1867, %v1862, %v1842
      %v1869 = vsel %vm1867, %v1863, %v1844
      %v1870 = vsel %vm1867, %v1864, %v1846
      %v1871 = vsel %vm1867, %v1865, %v1848
      %v1872 = vsel %vm1867, %v1866, %v1850
      %v1873 = vld [vmem:[%s3] sm:$0xff]
      %v1874 = vld [vmem:[%s3 + $0x8] sm:$0xff]
      %v1875 = vld [vmem:[%s3 + $0x10] sm:$0xff]
      %v1876 = vld [vmem:[%s3 + $0x18] sm:$0xff]
      %v1877 = vld [vmem:[%s4] sm:$0x1]
      %v1879 = vlaneseq
      %v1880 = vshrl.u32 %v1879, 7
      %v1881 = vsub.s32 0, %v1880
      %v1882 = vrot.slane %v1877, %v1881
      %v1885 = vsel %vm457, %v1868, 0
      %v1888 = vsel %vm457, %v1869, 0
      %v1891 = vsel %vm457, %v1870, 0
      %v1894 = vsel %vm457, %v1871, 0
      %v1897 = vsel %vm457, %v1872, 0
      %1899 = vmatprep.subr.mxu0 0.0
      %1900 = vmatpush1.msra.mxu0 %v1873
      %1901 = vmatprep.subr.mxu0 0.0
      %1902 = vmatpush1.msra.mxu0 %v1874
      %1903 = vmatprep.subr.mxu0 0.0
      %1904 = vmatpush1.msra.mxu0 %v1875
      %1905 = vmatprep.subr.mxu0 0.0
      %1906 = vmatpush1.msra.mxu0 %v1876
      %1907 = vmatprep.subr.mxu0 0.0
      %1908 = vmatpush1.msra.mxu0 0.0
      %1909 = vmatprep.subr.mxu0 0.0
      %1910 = vmatpush1.msra.mxu0 0.0
      %1911 = vmatprep.subr.mxu0 0.0
      %1912 = vmatpush1.msra.mxu0 0.0
      %1913 = vmatprep.subr.mxu0 0.0
      %1914 = vmatpush1.msra.mxu0 0.0
      %1915 = vmatprep.subr.mxu0 0.0
      %1916 = vmatpush1.msra.mxu0 0.0
      %1917 = vmatprep.subr.mxu0 0.0
      %1918 = vmatpush1.msra.mxu0 0.0
      %1919 = vmatprep.subr.mxu0 0.0
      %1920 = vmatpush1.msra.mxu0 0.0
      %1921 = vmatprep.subr.mxu0 0.0
      %1922 = vmatpush1.msra.mxu0 0.0
      %1923 = vmatprep.subr.mxu0 0.0
      %1924 = vmatpush1.msra.mxu0 0.0
      %1925 = vmatprep.subr.mxu0 0.0
      %1926 = vmatpush1.msra.mxu0 0.0
      %1927 = vmatprep.subr.mxu0 0.0
      %1928 = vmatpush1.msra.mxu0 0.0
      %1929 = vmatprep.subr.mxu0 0.0
      %1930 = vmatpush1.msra.mxu0 0.0
      %1931 = vmatprep.subr.mxu0 0.0
      %1932 = vmatpush1.msra.mxu0 0.0
      %1933 = vmatprep.subr.mxu0 0.0
      %1934 = vmatpush1.msra.mxu0 0.0
      %1935 = vmatprep.subr.mxu0 0.0
      %1936 = vmatpush1.msra.mxu0 0.0
      %1937 = vmatprep.subr.mxu0 0.0
      %1938 = vmatpush1.msra.mxu0 0.0
      %1939 = vmatprep.subr.mxu0 0.0
      %1940 = vmatpush1.msra.mxu0 0.0
      %1941 = vmatprep.subr.mxu0 0.0
      %1942 = vmatpush1.msra.mxu0 0.0
      %1943 = vmatprep.subr.mxu0 0.0
      %1944 = vmatpush1.msra.mxu0 0.0
      %1945 = vmatprep.subr.mxu0 0.0
      %1946 = vmatpush1.msra.mxu0 0.0
      %1947 = vmatprep.subr.mxu0 0.0
      %1948 = vmatpush1.msra.mxu0 0.0
      %1949 = vmatprep.subr.mxu0 0.0
      %1950 = vmatpush1.msra.mxu0 0.0
      %1951 = vmatprep.subr.mxu0 0.0
      %1952 = vmatpush1.msra.mxu0 0.0
      %1953 = vmatprep.subr.mxu0 0.0
      %1954 = vmatpush1.msra.mxu0 0.0
      %1955 = vmatprep.subr.mxu0 0.0
      %1956 = vmatpush1.msra.mxu0 0.0
      %1957 = vmatprep.subr.mxu0 0.0
      %1958 = vmatpush1.msra.mxu0 0.0
      %1959 = vmatprep.subr.mxu0 0.0
      %1960 = vmatpush1.msra.mxu0 0.0
      %1961 = vmatprep.subr.mxu0 0.0
      %1962 = vmatpush1.msra.mxu0 0.0
      %1963 = vmatprep.mubr.f32.mxu0 0.0
      %1964 = vmatmul.mubr.f32.gmra.mrb[0].mxu0 %v1885
      %v1965 = vpop.f32.mrb[0].mxu0
      %v1966 = vadd.f32 %v1882, %v1965
      %v1967 = vpop.f32.mrb[0].mxu0
      %1968 = vmatprep.mubr.f32.mxu0 0.0
      %1969 = vmatmul.mubr.f32.gmra.mrb[0].mxu0 %v1888
      %v1970 = vpop.f32.mrb[0].mxu0
      %v1971 = vadd.f32 %v1882, %v1970
      %v1972 = vpop.f32.mrb[0].mxu0
      %1973 = vmatprep.mubr.f32.mxu0 0.0
      %1974 = vmatmul.mubr.f32.gmra.mrb[0].mxu0 %v1891
      %v1975 = vpop.f32.mrb[0].mxu0
      %v1976 = vadd.f32 %v1882, %v1975
      %v1977 = vpop.f32.mrb[0].mxu0
      %1978 = vmatprep.mubr.f32.mxu0 0.0
      %1979 = vmatmul.mubr.f32.gmra.mrb[0].mxu0 %v1894
      %v1980 = vpop.f32.mrb[0].mxu0
      %v1981 = vadd.f32 %v1882, %v1980
      %v1982 = vpop.f32.mrb[0].mxu0
      %1983 = vmatprep.mubr.f32.mxu0 0.0
      %1984 = vmatmul.mubr.f32.gmra.mrb[0].mxu0 %v1897
      %v1985 = vpop.f32.mrb[0].mxu0
      %v1986 = vadd.f32 %v1882, %v1985
      %v1987 = vpop.f32.mrb[0].mxu0
      %1988 = vdwg.mxu0
      %v1989 = vadd.f32 %v441, %v1966
      %v1990 = vadd.f32 %v442, %v1971
      %v1991 = vadd.f32 %v443, %v1976
      %v1992 = vadd.f32 %v444, %v1981
      %v1993 = vadd.f32 %v445, %v1986
      %v1994 = vld [vmem:[%s5] sm:$0x1]
      %v1995 = vld [vmem:[%s6] sm:$0x1]
      %v1996 = vsel %vm457, %v1989, 0.0
      %1997 = vadd.xlane.f32.xlu0 %v1996
      %v1998 = vpop.xlane.xlu0 %1997
      %v1999 = vsel %vm457, %v1990, 0.0
      %2000 = vadd.xlane.f32.xlu0 %v1999
      %v2001 = vpop.xlane.xlu0 %2000
      %v2002 = vsel %vm457, %v1991, 0.0
      %2003 = vadd.xlane.f32.xlu0 %v2002
      %v2004 = vpop.xlane.xlu0 %2003
      %v2005 = vsel %vm457, %v1992, 0.0
      %2006 = vadd.xlane.f32.xlu0 %v2005
      %v2007 = vpop.xlane.xlu0 %2006
      %vm2008 = vcmask 260096
      %v2009 = vsel %vm2008, %v1993, 0.0
      %2010 = vadd.xlane.f32.xlu0 %v2009
      %v2011 = vpop.xlane.xlu0 %2010
      %v2012 = vrcp.pop 32.0
      %v2013 = vmul.f32 %v1998, %v2012
      %v2014 = vmul.f32 %v2001, %v2012
      %v2015 = vmul.f32 %v2004, %v2012
      %v2016 = vmul.f32 %v2007, %v2012
      %v2017 = vmul.f32 %v2011, %v2012
      %v2018 = vsub.f32 %v1989, %v2013
      %v2019 = vsub.f32 %v1990, %v2014
      %v2020 = vsub.f32 %v1991, %v2015
      %v2021 = vsub.f32 %v1992, %v2016
      %v2022 = vsub.f32 %v1993, %v2017
      %v2023 = vmul.f32 %v2018, %v2018
      %v2024 = vmul.f32 %v2019, %v2019
      %v2025 = vmul.f32 %v2020, %v2020
      %v2026 = vmul.f32 %v2021, %v2021
      %v2027 = vmul.f32 %v2022, %v2022
      %v2028 = vsel %vm457, %v2023, 0.0
      %2029 = vadd.xlane.f32.xlu0 %v2028
      %v2030 = vpop.xlane.xlu0 %2029
      %v2031 = vsel %vm457, %v2024, 0.0
      %2032 = vadd.xlane.f32.xlu0 %v2031
      %v2033 = vpop.xlane.xlu0 %2032
      %v2034 = vsel %vm457, %v2025, 0.0
      %2035 = vadd.xlane.f32.xlu0 %v2034
      %v2036 = vpop.xlane.xlu0 %2035
      %v2037 = vsel %vm457, %v2026, 0.0
      %2038 = vadd.xlane.f32.xlu0 %v2037
      %v2039 = vpop.xlane.xlu0 %2038
      %v2040 = vsel %vm2008, %v2027, 0.0
      %2041 = vadd.xlane.f32.xlu0 %v2040
      %v2042 = vpop.xlane.xlu0 %2041
      %v2043 = vmul.f32 %v2030, %v2012
      %v2044 = vmul.f32 %v2033, %v2012
      %v2045 = vmul.f32 %v2036, %v2012
      %v2046 = vmul.f32 %v2039, %v2012
      %v2047 = vmul.f32 %v2042, %v2012
      %v2048 = vadd.f32 %v2043, 1e-05
      %v2049 = vadd.f32 %v2044, 1e-05
      %v2050 = vadd.f32 %v2045, 1e-05
      %v2051 = vadd.f32 %v2046, 1e-05
      %v2052 = vadd.f32 %v2047, 1e-05
      %v2053 = vrsqrt.pop %v2048
      %v2054 = vrsqrt.pop %v2049
      %v2055 = vrsqrt.pop %v2050
      %v2056 = vrsqrt.pop %v2051
      %v2057 = vrsqrt.pop %v2052
      %v2058 = vmul.f32 %v2018, %v2053
      %v2059 = vmul.f32 %v2019, %v2054
      %v2060 = vmul.f32 %v2020, %v2055
      %v2061 = vmul.f32 %v2021, %v2056
      %v2062 = vmul.f32 %v2022, %v2057
      %v2064 = vlaneseq
      %v2065 = vshrl.u32 %v2064, 7
      %v2066 = vsub.s32 0, %v2065
      %v2067 = vrot.slane %v1994, %v2066
      %v2069 = vmul.f32 %v2058, %v2067
      %v2070 = vmul.f32 %v2059, %v2067
      %v2071 = vmul.f32 %v2060, %v2067
      %v2072 = vmul.f32 %v2061, %v2067
      %v2073 = vmul.f32 %v2062, %v2067
      %v2075 = vlaneseq
      %v2076 = vshrl.u32 %v2075, 7
      %v2077 = vsub.s32 0, %v2076
      %v2078 = vrot.slane %v1995, %v2077
      %v2080 = vadd.f32 %v2069, %v2078
      %v2081 = vadd.f32 %v2070, %v2078
      %v2082 = vadd.f32 %v2071, %v2078
      %v2083 = vadd.f32 %v2072, %v2078
      %v2084 = vadd.f32 %v2073, %v2078
      %v2085 = vld [vmem:[%s7] sm:$0xff]
      %v2086 = vld [vmem:[%s7 + $0x8] sm:$0xff]
      %v2087 = vld [vmem:[%s7 + $0x10] sm:$0xff]
      %v2088 = vld [vmem:[%s7 + $0x18] sm:$0xff]
      %v2089 = vld [vmem:[%s8] sm:$0x1]
      %v2091 = vlaneseq
      %v2092 = vshrl.u32 %v2091, 7
      %v2093 = vsub.s32 0, %v2092
      %v2094 = vrot.slane %v2089, %v2093
      %v2097 = vsel %vm457, %v2080, 0
      %v2100 = vsel %vm457, %v2081, 0
      %v2103 = vsel %vm457, %v2082, 0
      %v2106 = vsel %vm457, %v2083, 0
      %v2109 = vsel %vm457, %v2084, 0
      %2111 = vmatprep.subr.mxu0 0.0
      %2112 = vmatpush1.msra.mxu0 %v2085
      %2113 = vmatprep.subr.mxu0 0.0
      %2114 = vmatpush1.msra.mxu0 %v2086
      %2115 = vmatprep.subr.mxu0 0.0
      %2116 = vmatpush1.msra.mxu0 %v2087
      %2117 = vmatprep.subr.mxu0 0.0
      %2118 = vmatpush1.msra.mxu0 %v2088
      %2119 = vmatprep.subr.mxu0 0.0
      %2120 = vmatpush1.msra.mxu0 0.0
      %2121 = vmatprep.subr.mxu0 0.0
      %2122 = vmatpush1.msra.mxu0 0.0
      %2123 = vmatprep.subr.mxu0 0.0
      %2124 = vmatpush1.msra.mxu0 0.0
      %2125 = vmatprep.subr.mxu0 0.0
      %2126 = vmatpush1.msra.mxu0 0.0
      %2127 = vmatprep.subr.mxu0 0.0
      %2128 = vmatpush1.msra.mxu0 0.0
      %2129 = vmatprep.subr.mxu0 0.0
      %2130 = vmatpush1.msra.mxu0 0.0
      %2131 = vmatprep.subr.mxu0 0.0
      %2132 = vmatpush1.msra.mxu0 0.0
      %2133 = vmatprep.subr.mxu0 0.0
      %2134 = vmatpush1.msra.mxu0 0.0
      %2135 = vmatprep.subr.mxu0 0.0
      %2136 = vmatpush1.msra.mxu0 0.0
      %2137 = vmatprep.subr.mxu0 0.0
      %2138 = vmatpush1.msra.mxu0 0.0
      %2139 = vmatprep.subr.mxu0 0.0
      %2140 = vmatpush1.msra.mxu0 0.0
      %2141 = vmatprep.subr.mxu0 0.0
      %2142 = vmatpush1.msra.mxu0 0.0
      %2143 = vmatprep.subr.mxu0 0.0
      %2144 = vmatpush1.msra.mxu0 0.0
      %2145 = vmatprep.subr.mxu0 0.0
      %2146 = vmatpush1.msra.mxu0 0.0
      %2147 = vmatprep.subr.mxu0 0.0
      %2148 = vmatpush1.msra.mxu0 0.0
      %2149 = vmatprep.subr.mxu0 0.0
      %2150 = vmatpush1.msra.mxu0 0.0
      %2151 = vmatprep.subr.mxu0 0.0
      %2152 = vmatpush1.msra.mxu0 0.0
      %2153 = vmatprep.subr.mxu0 0.0
      %2154 = vmatpush1.msra.mxu0 0.0
      %2155 = vmatprep.subr.mxu0 0.0
      %2156 = vmatpush1.msra.mxu0 0.0
      %2157 = vmatprep.subr.mxu0 0.0
      %2158 = vmatpush1.msra.mxu0 0.0
      %2159 = vmatprep.subr.mxu0 0.0
      %2160 = vmatpush1.msra.mxu0 0.0
      %2161 = vmatprep.subr.mxu0 0.0
      %2162 = vmatpush1.msra.mxu0 0.0
      %2163 = vmatprep.subr.mxu0 0.0
      %2164 = vmatpush1.msra.mxu0 0.0
      %2165 = vmatprep.subr.mxu0 0.0
      %2166 = vmatpush1.msra.mxu0 0.0
      %2167 = vmatprep.subr.mxu0 0.0
      %2168 = vmatpush1.msra.mxu0 0.0
      %2169 = vmatprep.subr.mxu0 0.0
      %2170 = vmatpush1.msra.mxu0 0.0
      %2171 = vmatprep.subr.mxu0 0.0
      %2172 = vmatpush1.msra.mxu0 0.0
      %2173 = vmatprep.subr.mxu0 0.0
      %2174 = vmatpush1.msra.mxu0 0.0
      %2175 = vmatprep.mubr.f32.mxu0 0.0
      %2176 = vmatmul.mubr.f32.gmra.mrb[0].mxu0 %v2097
      %v2177 = vpop.f32.mrb[0].mxu0
      %v2178 = vadd.f32 %v2094, %v2177
      %v2179 = vpop.f32.mrb[0].mxu0
      %2180 = vmatprep.mubr.f32.mxu0 0.0
      %2181 = vmatmul.mubr.f32.gmra.mrb[0].mxu0 %v2100
      %v2182 = vpop.f32.mrb[0].mxu0
      %v2183 = vadd.f32 %v2094, %v2182
      %v2184 = vpop.f32.mrb[0].mxu0
      %2185 = vmatprep.mubr.f32.mxu0 0.0
      %2186 = vmatmul.mubr.f32.gmra.mrb[0].mxu0 %v2103
      %v2187 = vpop.f32.mrb[0].mxu0
      %v2188 = vadd.f32 %v2094, %v2187
      %v2189 = vpop.f32.mrb[0].mxu0
      %2190 = vmatprep.mubr.f32.mxu0 0.0
      %2191 = vmatmul.mubr.f32.gmra.mrb[0].mxu0 %v2106
      %v2192 = vpop.f32.mrb[0].mxu0
      %v2193 = vadd.f32 %v2094, %v2192
      %v2194 = vpop.f32.mrb[0].mxu0
      %2195 = vmatprep.mubr.f32.mxu0 0.0
      %2196 = vmatmul.mubr.f32.gmra.mrb[0].mxu0 %v2109
      %v2197 = vpop.f32.mrb[0].mxu0
      %v2198 = vadd.f32 %v2094, %v2197
      %v2199 = vpop.f32.mrb[0].mxu0
      %2200 = vdwg.mxu0
      %v2201 = vmul.f32 %v2178, %v2178
      %v2202 = vmul.f32 %v2183, %v2183
      %v2203 = vmul.f32 %v2188, %v2188
      %v2204 = vmul.f32 %v2193, %v2193
      %v2205 = vmul.f32 %v2198, %v2198
      %v2206 = vmul.f32 %v2178, %v2201
      %v2207 = vmul.f32 %v2183, %v2202
      %v2208 = vmul.f32 %v2188, %v2203
      %v2209 = vmul.f32 %v2193, %v2204
      %v2210 = vmul.f32 %v2198, %v2205
      %v2211 = vmul.f32 %v2206, 0.044715
      %v2212 = vmul.f32 %v2207, 0.044715
      %v2213 = vmul.f32 %v2208, 0.044715
      %v2214 = vmul.f32 %v2209, 0.044715
      %v2215 = vmul.f32 %v2210, 0.044715
      %v2216 = vadd.f32 %v2178, %v2211
      %v2217 = vadd.f32 %v2183, %v2212
      %v2218 = vadd.f32 %v2188, %v2213
      %v2219 = vadd.f32 %v2193, %v2214
      %v2220 = vadd.f32 %v2198, %v2215
      %v2221 = vmul.f32 %v2216, 0.7978846
      %v2222 = vmul.f32 %v2217, 0.7978846
      %v2223 = vmul.f32 %v2218, 0.7978846
      %v2224 = vmul.f32 %v2219, 0.7978846
      %v2225 = vmul.f32 %v2220, 0.7978846
      %v2226 = vtanh.pop %v2221
      %v2227 = vtanh.pop %v2222
      %v2228 = vtanh.pop %v2223
      %v2229 = vtanh.pop %v2224
      %v2230 = vtanh.pop %v2225
      %v2231 = vadd.f32 %v2226, 1.0
      %v2232 = vadd.f32 %v2227, 1.0
      %v2233 = vadd.f32 %v2228, 1.0
      %v2234 = vadd.f32 %v2229, 1.0
      %v2235 = vadd.f32 %v2230, 1.0
      %v2236 = vmul.f32 %v2231, 0.5
      %v2237 = vmul.f32 %v2232, 0.5
      %v2238 = vmul.f32 %v2233, 0.5
      %v2239 = vmul.f32 %v2234, 0.5
      %v2240 = vmul.f32 %v2235, 0.5
      %v2241 = vmul.f32 %v2178, %v2236
      %v2242 = vmul.f32 %v2183, %v2237
      %v2243 = vmul.f32 %v2188, %v2238
      %v2244 = vmul.f32 %v2193, %v2239
      %v2245 = vmul.f32 %v2198, %v2240
      %v2246 = vld [vmem:[%s9] sm:$0xff]
      %v2247 = vld [vmem:[%s9 + $0x8] sm:$0xff]
      %v2248 = vld [vmem:[%s9 + $0x10] sm:$0xff]
      %v2249 = vld [vmem:[%s9 + $0x18] sm:$0xff]
      %v2250 = vld [vmem:[%s9 + $0x20] sm:$0xff]
      %v2251 = vld [vmem:[%s9 + $0x28] sm:$0xff]
      %v2252 = vld [vmem:[%s9 + $0x30] sm:$0xff]
      %v2253 = vld [vmem:[%s9 + $0x38] sm:$0xff]
      %v2254 = vld [vmem:[%s10] sm:$0x1]
      %v2256 = vlaneseq
      %v2257 = vshrl.u32 %v2256, 7
      %v2258 = vsub.s32 0, %v2257
      %v2259 = vrot.slane %v2254, %v2258
      %vm2261 = vcmask 523264
      %v2263 = vsel %vm2261, %v2241, 0
      %v2266 = vsel %vm2261, %v2242, 0
      %v2269 = vsel %vm2261, %v2243, 0
      %v2272 = vsel %vm2261, %v2244, 0
      %v2275 = vsel %vm2261, %v2245, 0
      %2277 = vmatprep.subr.mxu0 0.0
      %2278 = vmatpush1.msra.mxu0 %v2246
      %2279 = vmatprep.subr.mxu0 0.0
      %2280 = vmatpush1.msra.mxu0 %v2247
      %2281 = vmatprep.subr.mxu0 0.0
      %2282 = vmatpush1.msra.mxu0 %v2248
      %2283 = vmatprep.subr.mxu0 0.0
      %2284 = vmatpush1.msra.mxu0 %v2249
      %2285 = vmatprep.subr.mxu0 0.0
      %2286 = vmatpush1.msra.mxu0 %v2250
      %2287 = vmatprep.subr.mxu0 0.0
      %2288 = vmatpush1.msra.mxu0 %v2251
      %2289 = vmatprep.subr.mxu0 0.0
      %2290 = vmatpush1.msra.mxu0 %v2252
      %2291 = vmatprep.subr.mxu0 0.0
      %2292 = vmatpush1.msra.mxu0 %v2253
      %2293 = vmatprep.subr.mxu0 0.0
      %2294 = vmatpush1.msra.mxu0 0.0
      %2295 = vmatprep.subr.mxu0 0.0
      %2296 = vmatpush1.msra.mxu0 0.0
      %2297 = vmatprep.subr.mxu0 0.0
      %2298 = vmatpush1.msra.mxu0 0.0
      %2299 = vmatprep.subr.mxu0 0.0
      %2300 = vmatpush1.msra.mxu0 0.0
      %2301 = vmatprep.subr.mxu0 0.0
      %2302 = vmatpush1.msra.mxu0 0.0
      %2303 = vmatprep.subr.mxu0 0.0
      %2304 = vmatpush1.msra.mxu0 0.0
      %2305 = vmatprep.subr.mxu0 0.0
      %2306 = vmatpush1.msra.mxu0 0.0
      %2307 = vmatprep.subr.mxu0 0.0
      %2308 = vmatpush1.msra.mxu0 0.0
      %2309 = vmatprep.subr.mxu0 0.0
      %2310 = vmatpush1.msra.mxu0 0.0
      %2311 = vmatprep.subr.mxu0 0.0
      %2312 = vmatpush1.msra.mxu0 0.0
      %2313 = vmatprep.subr.mxu0 0.0
      %2314 = vmatpush1.msra.mxu0 0.0
      %2315 = vmatprep.subr.mxu0 0.0
      %2316 = vmatpush1.msra.mxu0 0.0
      %2317 = vmatprep.subr.mxu0 0.0
      %2318 = vmatpush1.msra.mxu0 0.0
      %2319 = vmatprep.subr.mxu0 0.0
      %2320 = vmatpush1.msra.mxu0 0.0
      %2321 = vmatprep.subr.mxu0 0.0
      %2322 = vmatpush1.msra.mxu0 0.0
      %2323 = vmatprep.subr.mxu0 0.0
      %2324 = vmatpush1.msra.mxu0 0.0
      %2325 = vmatprep.subr.mxu0 0.0
      %2326 = vmatpush1.msra.mxu0 0.0
      %2327 = vmatprep.subr.mxu0 0.0
      %2328 = vmatpush1.msra.mxu0 0.0
      %2329 = vmatprep.subr.mxu0 0.0
      %2330 = vmatpush1.msra.mxu0 0.0
      %2331 = vmatprep.subr.mxu0 0.0
      %2332 = vmatpush1.msra.mxu0 0.0
      %2333 = vmatprep.subr.mxu0 0.0
      %2334 = vmatpush1.msra.mxu0 0.0
      %2335 = vmatprep.subr.mxu0 0.0
      %2336 = vmatpush1.msra.mxu0 0.0
      %2337 = vmatprep.subr.mxu0 0.0
      %2338 = vmatpush1.msra.mxu0 0.0
      %2339 = vmatprep.subr.mxu0 0.0
      %2340 = vmatpush1.msra.mxu0 0.0
      %2341 = vmatprep.mubr.f32.mxu0 0.0
      %2342 = vmatmul.mubr.f32.gmra.mrb[0].mxu0 %v2263
      %v2343 = vpop.f32.mrb[0].mxu0
      %v2344 = vadd.f32 %v2259, %v2343
      %v2345 = vpop.f32.mrb[0].mxu0
      %2346 = vmatprep.mubr.f32.mxu0 0.0
      %2347 = vmatmul.mubr.f32.gmra.mrb[0].mxu0 %v2266
      %v2348 = vpop.f32.mrb[0].mxu0
      %v2349 = vadd.f32 %v2259, %v2348
      %v2350 = vpop.f32.mrb[0].mxu0
      %2351 = vmatprep.mubr.f32.mxu0 0.0
      %2352 = vmatmul.mubr.f32.gmra.mrb[0].mxu0 %v2269
      %v2353 = vpop.f32.mrb[0].mxu0
      %v2354 = vadd.f32 %v2259, %v2353
      %v2355 = vpop.f32.mrb[0].mxu0
      %2356 = vmatprep.mubr.f32.mxu0 0.0
      %2357 = vmatmul.mubr.f32.gmra.mrb[0].mxu0 %v2272
      %v2358 = vpop.f32.mrb[0].mxu0
      %v2359 = vadd.f32 %v2259, %v2358
      %v2360 = vpop.f32.mrb[0].mxu0
      %2361 = vmatprep.mubr.f32.mxu0 0.0
      %2362 = vmatmul.mubr.f32.gmra.mrb[0].mxu0 %v2275
      %v2363 = vpop.f32.mrb[0].mxu0
      %v2364 = vadd.f32 %v2259, %v2363
      %v2365 = vpop.f32.mrb[0].mxu0
      %2366 = vdwg.mxu0
      %v2367 = vadd.f32 %v2080, %v2344
      %v2368 = vadd.f32 %v2081, %v2349
      %v2369 = vadd.f32 %v2082, %v2354
      %v2370 = vadd.f32 %v2083, %v2359
      %v2371 = vadd.f32 %v2084, %v2364
      %v2372 = vld [vmem:[%s11] sm:$0x1]
      %v2373 = vld [vmem:[%s12] sm:$0x1]
      %v2374 = vsel %vm457, %v2367, 0.0
      %2375 = vadd.xlane.f32.xlu0 %v2374
      %v2376 = vpop.xlane.xlu0 %2375
      %v2377 = vsel %vm457, %v2368, 0.0
      %2378 = vadd.xlane.f32.xlu0 %v2377
      %v2379 = vpop.xlane.xlu0 %2378
      %v2380 = vsel %vm457, %v2369, 0.0
      %2381 = vadd.xlane.f32.xlu0 %v2380
      %v2382 = vpop.xlane.xlu0 %2381
      %v2383 = vsel %vm457, %v2370, 0.0
      %2384 = vadd.xlane.f32.xlu0 %v2383
      %v2385 = vpop.xlane.xlu0 %2384
      %v2386 = vsel %vm2008, %v2371, 0.0
      %2387 = vadd.xlane.f32.xlu0 %v2386
      %v2388 = vpop.xlane.xlu0 %2387
      %v2389 = vmul.f32 %v2376, %v2012
      %v2390 = vmul.f32 %v2379, %v2012
      %v2391 = vmul.f32 %v2382, %v2012
      %v2392 = vmul.f32 %v2385, %v2012
      %v2393 = vmul.f32 %v2388, %v2012
      %v2394 = vsub.f32 %v2367, %v2389
      %v2395 = vsub.f32 %v2368, %v2390
      %v2396 = vsub.f32 %v2369, %v2391
      %v2397 = vsub.f32 %v2370, %v2392
      %v2398 = vsub.f32 %v2371, %v2393
      %v2399 = vmul.f32 %v2394, %v2394
      %v2400 = vmul.f32 %v2395, %v2395
      %v2401 = vmul.f32 %v2396, %v2396
      %v2402 = vmul.f32 %v2397, %v2397
      %v2403 = vmul.f32 %v2398, %v2398
      %v2404 = vsel %vm457, %v2399, 0.0
      %2405 = vadd.xlane.f32.xlu0 %v2404
      %v2406 = vpop.xlane.xlu0 %2405
      %v2407 = vsel %vm457, %v2400, 0.0
      %2408 = vadd.xlane.f32.xlu0 %v2407
      %v2409 = vpop.xlane.xlu0 %2408
      %v2410 = vsel %vm457, %v2401, 0.0
      %2411 = vadd.xlane.f32.xlu0 %v2410
      %v2412 = vpop.xlane.xlu0 %2411
      %v2413 = vsel %vm457, %v2402, 0.0
      %2414 = vadd.xlane.f32.xlu0 %v2413
      %v2415 = vpop.xlane.xlu0 %2414
      %v2416 = vsel %vm2008, %v2403, 0.0
      %2417 = vadd.xlane.f32.xlu0 %v2416
      %v2418 = vpop.xlane.xlu0 %2417
      %v2419 = vmul.f32 %v2406, %v2012
      %v2420 = vmul.f32 %v2409, %v2012
      %v2421 = vmul.f32 %v2412, %v2012
      %v2422 = vmul.f32 %v2415, %v2012
      %v2423 = vmul.f32 %v2418, %v2012
      %v2424 = vadd.f32 %v2419, 1e-05
      %v2425 = vadd.f32 %v2420, 1e-05
      %v2426 = vadd.f32 %v2421, 1e-05
      %v2427 = vadd.f32 %v2422, 1e-05
      %v2428 = vadd.f32 %v2423, 1e-05
      %v2429 = vrsqrt.pop %v2424
      %v2430 = vrsqrt.pop %v2425
      %v2431 = vrsqrt.pop %v2426
      %v2432 = vrsqrt.pop %v2427
      %v2433 = vrsqrt.pop %v2428
      %v2434 = vmul.f32 %v2394, %v2429
      %v2435 = vmul.f32 %v2395, %v2430
      %v2436 = vmul.f32 %v2396, %v2431
      %v2437 = vmul.f32 %v2397, %v2432
      %v2438 = vmul.f32 %v2398, %v2433
      %v2440 = vlaneseq
      %v2441 = vshrl.u32 %v2440, 7
      %v2442 = vsub.s32 0, %v2441
      %v2443 = vrot.slane %v2372, %v2442
      %v2445 = vmul.f32 %v2434, %v2443
      %v2446 = vmul.f32 %v2435, %v2443
      %v2447 = vmul.f32 %v2436, %v2443
      %v2448 = vmul.f32 %v2437, %v2443
      %v2449 = vmul.f32 %v2438, %v2443
      %v2451 = vlaneseq
      %v2452 = vshrl.u32 %v2451, 7
      %v2453 = vsub.s32 0, %v2452
      %v2454 = vrot.slane %v2373, %v2453
      %v2456 = vadd.f32 %v2445, %v2454
      %v2457 = vadd.f32 %v2446, %v2454
      %v2458 = vadd.f32 %v2447, %v2454
      %v2459 = vadd.f32 %v2448, %v2454
      %v2460 = vadd.f32 %v2449, %v2454
      %2461 = vst.msk [vmem:[%s440] sm:$0xff] %vm457, %v2456
      %2462 = vst.msk [vmem:[%s440 + $0x8] sm:$0xff] %vm457, %v2457
      %2463 = vst.msk [vmem:[%s440 + $0x10] sm:$0xff] %vm457, %v2458
      %2464 = vst.msk [vmem:[%s440 + $0x18] sm:$0xff] %vm457, %v2459
      %2465 = vst.msk [vmem:[%s440 + $0x20] sm:$0x7f] %vm2008, %v2460
      %p2466 = scmp.lt.s32.totalorder %s24, 1
      %s2467 = scalar_select %p2466, %s24, 1
      %s2468 = smul.addr %s2467, 5
      %s2469 = smul.addr %s2468, 8
      %s2470 = scalar_lea.vmem %s13, %s2469
      // Predicated region
      $region73: #{_lambda_.10} parent=71 // pred_check
        %p2471 = pneg %p320
      $region74: #{_lambda_.10} parent=71 // pred_check_branch
        %2473 = sbr.rel (%p2471) target = $region76
      $region75: #{_lambda_.10} parent=71 // pred_region
        _
      $region76: #{_lambda_.10} parent=71 // pred_fallthru
        _
    $region72: #{_lambda_.10} parent=5 // pred_fallthru
      _
    %p2474 = scmp.le.s32.totalorder 2, %s19
    // Predicated region
    $region77: #{_lambda_.10} parent=5 // pred_check
      %p2475 = pneg %p2474
    $region78: #{_lambda_.10} parent=5 // pred_check_branch
      %2477 = sbr.rel (%p2475) target = $region80
    $region79: #{_lambda_.10} parent=5 // pred_region
      %s2478 = ssub.s32 %s19, 2
      // Predicated region
      $region81: #{_lambda_.10} parent=79 // pred_check
        %p2479 = pneg %p326
      $region82: #{_lambda_.10} parent=79 // pred_check_branch
        %2481 = sbr.rel (%p2479) target = $region84
      $region83: #{_lambda_.10} parent=79 // pred_region
        %p2482 = scmp.lt.s32.totalorder %s25, 1
        %s2483 = scalar_select %p2482, %s25, 1
        %s2484 = smul.addr %s2483, 5
        %s2485 = smul.addr %s2484, 8
        %s2486 = scalar_lea.vmem %s13, %s2485
      $region84: #{_lambda_.10} parent=79 // pred_fallthru
        _
    $region80: #{_lambda_.10} parent=5 // pred_fallthru
      _
  $region6: #{_lambda_.10} parent=0 // loop_footer
    %s23 = sadd.s32 1, %s19
  $region7: #{_lambda_.10} parent=0 // loop_footer_branch
    %18 = sbr.rel target = $region3
  $region8: #{_lambda_.10} parent=0 // loop_exit
    _

</llo_original>
